<compile_context>
chip_gen: v7x
topology: tpu7x:2x2x1
jax: 0.10.0
libtpu: 0.0.40
codegen_flags: <defaults>
</compile_context>

<pallas_src>
import jax
import jax.numpy as jnp
import numpy as np
from jax import lax
from jax.experimental import pallas as pl
from jax.experimental.pallas import tpu as pltpu


def _round_up(v, m):
    return ((v + m - 1) // m) * m


def _gin_kernel(eps_ref, x_ref, idx_ref, w_ref, b_ref, o_ref):
    # eps_ref : SMEM (1,)          f32
    # x_ref   : VMEM (1, Np, Cp)   compute dtype (full padded graph, one batch elem)
    # idx_ref : VMEM (1, TN, K)    int32 (neighbor ids for this row tile)
    # w_ref   : VMEM (Cp, Cop)     compute dtype (1x1 conv weight, padded)
    # b_ref   : VMEM (1, Cop)      f32
    # o_ref   : VMEM (1, TN, Cop)  f32
    ti = pl.program_id(1)

    x = x_ref[0]                        # (Np, Cp)
    idx = idx_ref[0]                    # (TN, K) int32
    n_full = x.shape[0]
    tn = idx.shape[0]
    k = idx.shape[1]

    col = lax.broadcasted_iota(jnp.int32, (tn, n_full), 1)    # global column id
    lane = lax.broadcasted_iota(jnp.int32, (1, k), 1)         # lane id inside an idx row

    def body(j, agg):
        # Column j of idx via a lane-masked reduce (robust, no dynamic lane slice).
        nbr = jnp.sum(jnp.where(lane == j, idx, 0), axis=1, keepdims=True)  # (TN, 1)
        return agg + (nbr == col).astype(jnp.float32)

    agg = lax.fori_loop(0, k, body,
                        jnp.zeros((tn, n_full), jnp.float32), unroll=True)

    # Fold the (1 + eps) * x self-term into the diagonal of the aggregation matrix.
    row = ti * tn + lax.broadcasted_iota(jnp.int32, (tn, n_full), 0)
    agg = agg + (1.0 + eps_ref[0]) * (row == col).astype(jnp.float32)

    cdt = x.dtype
    # Neighbor aggregation: (TN, Np) @ (Np, Cp) on the MXU, f32 accumulation.
    h = jnp.dot(agg.astype(cdt), x, preferred_element_type=jnp.float32)
    # 1x1 conv: (TN, Cp) @ (Cp, Cop), then bias + ReLU in f32.
    out = jnp.dot(h.astype(cdt), w_ref[...], preferred_element_type=jnp.float32)
    out = out + b_ref[...]
    o_ref[0] = jnp.maximum(out, 0.0).astype(o_ref.dtype)


def gin_conv2d(x_nchw, edge_index, weight, bias, eps, *,
               tile_n=128, compute_dtype=jnp.bfloat16):
    """x_nchw: (B, Cin, N, 1) f32; edge_index: (2, B, N, K) int; weight: (Cout, Cin);
    bias: (Cout,); eps: scalar.  Returns (B, Cout, N, 1) f32, matching PyTorch."""
    B, Cin, N, W1 = x_nchw.shape
    assert W1 == 1
    K = edge_index.shape[-1]
    Cout = weight.shape[0]

    LANE = 128
    Cp = _round_up(Cin, LANE)            # lane-dense channel padding
    Cop = _round_up(Cout, LANE)
    TN = min(tile_n, _round_up(N, 8))    # row tile (vertex dim)
    Np = _round_up(N, TN)
    n_tiles = Np // TN

    # (B, N, Cin): vertices on sublanes, channels on lanes; zero-pad rows/channels.
    x = jnp.transpose(x_nchw[..., 0], (0, 2, 1))
    x = jnp.pad(x, ((0, 0), (0, Np - N), (0, Cp - Cin))).astype(compute_dtype)
    # Padded rows only affect their own (discarded) output rows; idx values stay < N,
    # so padded columns of the aggregation matrix are never hit.
    idx = jnp.pad(edge_index[0].astype(jnp.int32), ((0, 0), (0, Np - N), (0, 0)))
    w = jnp.pad(jnp.transpose(weight, (1, 0)).astype(jnp.float32),
                ((0, Cp - Cin), (0, Cop - Cout))).astype(compute_dtype)
    b = jnp.pad(bias.reshape(1, Cout).astype(jnp.float32), ((0, 0), (0, Cop - Cout)))
    eps_arr = jnp.asarray(eps, jnp.float32).reshape(1,)

    itemsize = jnp.dtype(compute_dtype).itemsize
    cost = pl.CostEstimate(
        flops=int(2 * B * Np * Np * Cp + 2 * B * Np * Cp * Cop),
        transcendentals=0,
        bytes_accessed=int(B * Np * Cp * itemsize + B * Np * K * 4
                           + Cp * Cop * itemsize + Cop * 4 + B * Np * Cop * 4),
    )

    out = pl.pallas_call(
        _gin_kernel,
        out_shape=jax.ShapeDtypeStruct((B, Np, Cop), jnp.float32),
        grid=(B, n_tiles),
        in_specs=[
            pl.BlockSpec(memory_space=pltpu.SMEM),                     # eps scalar
            pl.BlockSpec((1, Np, Cp), lambda bi, ti: (bi, 0, 0)),      # x (full graph per batch)
            pl.BlockSpec((1, TN, K), lambda bi, ti: (bi, ti, 0)),      # idx row tile
            pl.BlockSpec((Cp, Cop), lambda bi, ti: (0, 0)),            # weight (resident)
            pl.BlockSpec((1, Cop), lambda bi, ti: (0, 0)),             # bias
        ],
        out_specs=pl.BlockSpec((1, TN, Cop), lambda bi, ti: (bi, ti, 0)),
        compiler_params=pltpu.CompilerParams(
            dimension_semantics=("parallel", "parallel"),
            vmem_limit_bytes=48 * 1024 * 1024,
        ),
        cost_estimate=cost,
    )(eps_arr, x, idx, w, b)

    out = out[:, :N, :Cout]                                   # drop row / lane padding
    return jnp.transpose(out, (0, 2, 1))[..., None]           # (B, Cout, N, 1)


def _reference(x_nchw, edge_index, weight, bias, eps):
    """Pure-JAX reference reproducing the PyTorch semantics exactly."""
    x = x_nchw[..., 0]                                        # (B, Cin, N)
    idx = edge_index[0]                                       # (B, N, K)
    x_j = jax.vmap(lambda xb, ib: xb[:, ib])(x, idx)          # (B, Cin, N, K)
    x_j = jnp.sum(x_j, axis=-1, keepdims=True)                # (B, Cin, N, 1)
    h = (1.0 + eps) * x_nchw + x_j
    out = jnp.einsum("oc,bcnk->bonk", weight, h,
                     precision=jax.lax.Precision.HIGHEST) + bias[None, :, None, None]
    return jnp.maximum(out, 0.0)


def _run_case(B, Cin, Cout, N, K, eps):
    key = jax.random.PRNGKey(0)
    k_x, k_idx, k_w, k_b = jax.random.split(key, 4)

    x = jax.random.normal(k_x, (B, Cin, N, 1), dtype=jnp.float32)
    edge_index = jax.random.randint(k_idx, (2, B, N, K), 0, N, dtype=jnp.int32)
    bound = 1.0 / np.sqrt(Cin)
    weight = jax.random.uniform(k_w, (Cout, Cin), jnp.float32, -bound, bound)
    bias = jax.random.uniform(k_b, (Cout,), jnp.float32, -bound, bound)

    ref = _reference(x, edge_index, weight, bias, eps)

    # Optimized path: bf16 matmul inputs, f32 accumulation (relaxed tolerance).
    out_bf16 = jax.block_until_ready(
        gin_conv2d(x, edge_index, weight, bias, eps, compute_dtype=jnp.bfloat16))
    assert out_bf16.shape == (B, Cout, N, 1)
    np.testing.assert_allclose(np.asarray(out_bf16), np.asarray(ref),
                               rtol=5e-2, atol=5e-2)

    # Full-precision path: exact semantics check.
    out_f32 = jax.block_until_ready(
        gin_conv2d(x, edge_index, weight, bias, eps, compute_dtype=jnp.float32))
    np.testing.assert_allclose(np.asarray(out_f32), np.asarray(ref),
                               rtol=1e-4, atol=1e-4)


if __name__ == "__main__":
    # Tiled case: 2 row tiles of 128 + padded rows (N=200 -> Np=256), padded channels.
    _run_case(B=2, Cin=4, Cout=8, N=200, K=8, eps=0.25)
    # Tiny case with odd channel counts (single tile, eps_init = 0.0 as in the module).
    _run_case(B=1, Cin=3, Cout=6, N=16, K=4, eps=0.0)
    print("KERNEL_OK")
</pallas_src>

<mosaic_0001>
module attributes {stable_mosaic.version = 11 : i64} {
  func.func @_gin_kernel(%arg0: i32, %arg1: i32, %arg2: memref<1xf32, #tpu.memory_space<smem>>, %arg3: memref<1x256x128xbf16, #tpu.memory_space<vmem>>, %arg4: memref<1x128x8xi32, #tpu.memory_space<vmem>>, %arg5: memref<128x128xbf16, #tpu.memory_space<vmem>>, %arg6: memref<1x128xf32, #tpu.memory_space<vmem>>, %arg7: memref<1x128x128xf32, #tpu.memory_space<vmem>>) attributes {dimension_semantics = [#tpu.dimension_semantics<parallel>, #tpu.dimension_semantics<parallel>], iteration_bounds = array<i64: 2, 2>, scalar_prefetch = 0 : i64, scratch_operands = 0 : i64, tpu.core_type = #tpu.core_type<tc>, window_params = [{transform_indices = @transform_0, window_bounds = array<i64: 1>}, {transform_indices = @transform_1, window_bounds = array<i64: 1, 256, 128>}, {transform_indices = @transform_2, window_bounds = array<i64: 1, 128, 8>}, {pipeline_mode = #tpu.pipeline_mode<synchronous>, transform_indices = @transform_3, window_bounds = array<i64: 128, 128>}, {pipeline_mode = #tpu.pipeline_mode<synchronous>, transform_indices = @transform_4, window_bounds = array<i64: 1, 128>}, {transform_indices = @transform_5, window_bounds = array<i64: 1, 128, 128>}]} {
    %c0 = arith.constant 0 : index
    %c0_0 = arith.constant 0 : index
    %c0_1 = arith.constant 0 : index
    %0 = vector.load %arg3[%c0, %c0_0, %c0_1] : memref<1x256x128xbf16, #tpu.memory_space<vmem>>, vector<1x256x128xbf16>
    %1 = vector.shape_cast %0 : vector<1x256x128xbf16> to vector<256x128xbf16>
    %c0_2 = arith.constant 0 : index
    %c0_3 = arith.constant 0 : index
    %c0_4 = arith.constant 0 : index
    %2 = vector.load %arg4[%c0_2, %c0_3, %c0_4] : memref<1x128x8xi32, #tpu.memory_space<vmem>>, vector<1x128x8xi32>
    %3 = vector.shape_cast %2 : vector<1x128x8xi32> to vector<128x8xi32>
    %4 = tpu.iota {dimensions = array<i32: 1>} : vector<128x256xi32>
    %5 = tpu.iota {dimensions = array<i32: 1>} : vector<1x8xi32>
    %cst = arith.constant 0.000000e+00 : f32
    %6 = vector.broadcast %cst : f32 to vector<128x256xf32>
    %c0_i32 = arith.constant 0 : i32
    %7 = vector.broadcast %c0_i32 : i32 to vector<1x8xi32>
    %8 = arith.cmpi eq, %5, %7 : vector<1x8xi32>
    %c0_i32_5 = arith.constant 0 : i32
    %9 = vector.shape_cast %8 : vector<1x8xi1> to vector<1x8xi1>
    %10 = vector.broadcast %9 : vector<1x8xi1> to vector<128x8xi1>
    %11 = vector.broadcast %c0_i32_5 : i32 to vector<128x8xi32>
    %12 = arith.select %10, %3, %11 : vector<128x8xi1>, vector<128x8xi32>
    %cst_6 = arith.constant dense<0> : vector<128xi32>
    %13 = vector.multi_reduction <add>, %12, %cst_6 [1] : vector<128x8xi32> to vector<128xi32>
    %14 = vector.shape_cast %13 : vector<128xi32> to vector<128x1xi32>
    %15 = vector.broadcast %14 : vector<128x1xi32> to vector<128x256xi32>
    %16 = arith.cmpi eq, %15, %4 : vector<128x256xi32>
    %17 = arith.extui %16 : vector<128x256xi1> to vector<128x256xi32>
    %18 = arith.sitofp %17 : vector<128x256xi32> to vector<128x256xf32>
    %19 = arith.addf %6, %18 : vector<128x256xf32>
    %c1_i32 = arith.constant 1 : i32
    %20 = vector.broadcast %c1_i32 : i32 to vector<1x8xi32>
    %21 = arith.cmpi eq, %5, %20 : vector<1x8xi32>
    %c0_i32_7 = arith.constant 0 : i32
    %22 = vector.shape_cast %21 : vector<1x8xi1> to vector<1x8xi1>
    %23 = vector.broadcast %22 : vector<1x8xi1> to vector<128x8xi1>
    %24 = vector.broadcast %c0_i32_7 : i32 to vector<128x8xi32>
    %25 = arith.select %23, %3, %24 : vector<128x8xi1>, vector<128x8xi32>
    %cst_8 = arith.constant dense<0> : vector<128xi32>
    %26 = vector.multi_reduction <add>, %25, %cst_8 [1] : vector<128x8xi32> to vector<128xi32>
    %27 = vector.shape_cast %26 : vector<128xi32> to vector<128x1xi32>
    %28 = vector.broadcast %27 : vector<128x1xi32> to vector<128x256xi32>
    %29 = arith.cmpi eq, %28, %4 : vector<128x256xi32>
    %30 = arith.extui %29 : vector<128x256xi1> to vector<128x256xi32>
    %31 = arith.sitofp %30 : vector<128x256xi32> to vector<128x256xf32>
    %32 = arith.addf %19, %31 : vector<128x256xf32>
    %c2_i32 = arith.constant 2 : i32
    %33 = vector.broadcast %c2_i32 : i32 to vector<1x8xi32>
    %34 = arith.cmpi eq, %5, %33 : vector<1x8xi32>
    %c0_i32_9 = arith.constant 0 : i32
    %35 = vector.shape_cast %34 : vector<1x8xi1> to vector<1x8xi1>
    %36 = vector.broadcast %35 : vector<1x8xi1> to vector<128x8xi1>
    %37 = vector.broadcast %c0_i32_9 : i32 to vector<128x8xi32>
    %38 = arith.select %36, %3, %37 : vector<128x8xi1>, vector<128x8xi32>
    %cst_10 = arith.constant dense<0> : vector<128xi32>
    %39 = vector.multi_reduction <add>, %38, %cst_10 [1] : vector<128x8xi32> to vector<128xi32>
    %40 = vector.shape_cast %39 : vector<128xi32> to vector<128x1xi32>
    %41 = vector.broadcast %40 : vector<128x1xi32> to vector<128x256xi32>
    %42 = arith.cmpi eq, %41, %4 : vector<128x256xi32>
    %43 = arith.extui %42 : vector<128x256xi1> to vector<128x256xi32>
    %44 = arith.sitofp %43 : vector<128x256xi32> to vector<128x256xf32>
    %45 = arith.addf %32, %44 : vector<128x256xf32>
    %c3_i32 = arith.constant 3 : i32
    %46 = vector.broadcast %c3_i32 : i32 to vector<1x8xi32>
    %47 = arith.cmpi eq, %5, %46 : vector<1x8xi32>
    %c0_i32_11 = arith.constant 0 : i32
    %48 = vector.shape_cast %47 : vector<1x8xi1> to vector<1x8xi1>
    %49 = vector.broadcast %48 : vector<1x8xi1> to vector<128x8xi1>
    %50 = vector.broadcast %c0_i32_11 : i32 to vector<128x8xi32>
    %51 = arith.select %49, %3, %50 : vector<128x8xi1>, vector<128x8xi32>
    %cst_12 = arith.constant dense<0> : vector<128xi32>
    %52 = vector.multi_reduction <add>, %51, %cst_12 [1] : vector<128x8xi32> to vector<128xi32>
    %53 = vector.shape_cast %52 : vector<128xi32> to vector<128x1xi32>
    %54 = vector.broadcast %53 : vector<128x1xi32> to vector<128x256xi32>
    %55 = arith.cmpi eq, %54, %4 : vector<128x256xi32>
    %56 = arith.extui %55 : vector<128x256xi1> to vector<128x256xi32>
    %57 = arith.sitofp %56 : vector<128x256xi32> to vector<128x256xf32>
    %58 = arith.addf %45, %57 : vector<128x256xf32>
    %c4_i32 = arith.constant 4 : i32
    %59 = vector.broadcast %c4_i32 : i32 to vector<1x8xi32>
    %60 = arith.cmpi eq, %5, %59 : vector<1x8xi32>
    %c0_i32_13 = arith.constant 0 : i32
    %61 = vector.shape_cast %60 : vector<1x8xi1> to vector<1x8xi1>
    %62 = vector.broadcast %61 : vector<1x8xi1> to vector<128x8xi1>
    %63 = vector.broadcast %c0_i32_13 : i32 to vector<128x8xi32>
    %64 = arith.select %62, %3, %63 : vector<128x8xi1>, vector<128x8xi32>
    %cst_14 = arith.constant dense<0> : vector<128xi32>
    %65 = vector.multi_reduction <add>, %64, %cst_14 [1] : vector<128x8xi32> to vector<128xi32>
    %66 = vector.shape_cast %65 : vector<128xi32> to vector<128x1xi32>
    %67 = vector.broadcast %66 : vector<128x1xi32> to vector<128x256xi32>
    %68 = arith.cmpi eq, %67, %4 : vector<128x256xi32>
    %69 = arith.extui %68 : vector<128x256xi1> to vector<128x256xi32>
    %70 = arith.sitofp %69 : vector<128x256xi32> to vector<128x256xf32>
    %71 = arith.addf %58, %70 : vector<128x256xf32>
    %c5_i32 = arith.constant 5 : i32
    %72 = vector.broadcast %c5_i32 : i32 to vector<1x8xi32>
    %73 = arith.cmpi eq, %5, %72 : vector<1x8xi32>
    %c0_i32_15 = arith.constant 0 : i32
    %74 = vector.shape_cast %73 : vector<1x8xi1> to vector<1x8xi1>
    %75 = vector.broadcast %74 : vector<1x8xi1> to vector<128x8xi1>
    %76 = vector.broadcast %c0_i32_15 : i32 to vector<128x8xi32>
    %77 = arith.select %75, %3, %76 : vector<128x8xi1>, vector<128x8xi32>
    %cst_16 = arith.constant dense<0> : vector<128xi32>
    %78 = vector.multi_reduction <add>, %77, %cst_16 [1] : vector<128x8xi32> to vector<128xi32>
    %79 = vector.shape_cast %78 : vector<128xi32> to vector<128x1xi32>
    %80 = vector.broadcast %79 : vector<128x1xi32> to vector<128x256xi32>
    %81 = arith.cmpi eq, %80, %4 : vector<128x256xi32>
    %82 = arith.extui %81 : vector<128x256xi1> to vector<128x256xi32>
    %83 = arith.sitofp %82 : vector<128x256xi32> to vector<128x256xf32>
    %84 = arith.addf %71, %83 : vector<128x256xf32>
    %c6_i32 = arith.constant 6 : i32
    %85 = vector.broadcast %c6_i32 : i32 to vector<1x8xi32>
    %86 = arith.cmpi eq, %5, %85 : vector<1x8xi32>
    %c0_i32_17 = arith.constant 0 : i32
    %87 = vector.shape_cast %86 : vector<1x8xi1> to vector<1x8xi1>
    %88 = vector.broadcast %87 : vector<1x8xi1> to vector<128x8xi1>
    %89 = vector.broadcast %c0_i32_17 : i32 to vector<128x8xi32>
    %90 = arith.select %88, %3, %89 : vector<128x8xi1>, vector<128x8xi32>
    %cst_18 = arith.constant dense<0> : vector<128xi32>
    %91 = vector.multi_reduction <add>, %90, %cst_18 [1] : vector<128x8xi32> to vector<128xi32>
    %92 = vector.shape_cast %91 : vector<128xi32> to vector<128x1xi32>
    %93 = vector.broadcast %92 : vector<128x1xi32> to vector<128x256xi32>
    %94 = arith.cmpi eq, %93, %4 : vector<128x256xi32>
    %95 = arith.extui %94 : vector<128x256xi1> to vector<128x256xi32>
    %96 = arith.sitofp %95 : vector<128x256xi32> to vector<128x256xf32>
    %97 = arith.addf %84, %96 : vector<128x256xf32>
    %c7_i32 = arith.constant 7 : i32
    %98 = vector.broadcast %c7_i32 : i32 to vector<1x8xi32>
    %99 = arith.cmpi eq, %5, %98 : vector<1x8xi32>
    %c0_i32_19 = arith.constant 0 : i32
    %100 = vector.shape_cast %99 : vector<1x8xi1> to vector<1x8xi1>
    %101 = vector.broadcast %100 : vector<1x8xi1> to vector<128x8xi1>
    %102 = vector.broadcast %c0_i32_19 : i32 to vector<128x8xi32>
    %103 = arith.select %101, %3, %102 : vector<128x8xi1>, vector<128x8xi32>
    %cst_20 = arith.constant dense<0> : vector<128xi32>
    %104 = vector.multi_reduction <add>, %103, %cst_20 [1] : vector<128x8xi32> to vector<128xi32>
    %105 = vector.shape_cast %104 : vector<128xi32> to vector<128x1xi32>
    %106 = vector.broadcast %105 : vector<128x1xi32> to vector<128x256xi32>
    %107 = arith.cmpi eq, %106, %4 : vector<128x256xi32>
    %108 = arith.extui %107 : vector<128x256xi1> to vector<128x256xi32>
    %109 = arith.sitofp %108 : vector<128x256xi32> to vector<128x256xf32>
    %110 = arith.addf %97, %109 : vector<128x256xf32>
    %c8_i32 = arith.constant 8 : i32
    %c128_i32 = arith.constant 128 : i32
    %111 = arith.muli %arg1, %c128_i32 : i32
    %112 = tpu.iota {dimensions = array<i32: 0>} : vector<128x256xi32>
    %113 = vector.broadcast %111 : i32 to vector<128x256xi32>
    %114 = arith.addi %113, %112 : vector<128x256xi32>
    %c0_21 = arith.constant 0 : index
    %115 = memref.load %arg2[%c0_21] : memref<1xf32, #tpu.memory_space<smem>>
    %cst_22 = arith.constant 1.000000e+00 : f32
    %116 = arith.addf %cst_22, %115 : f32
    %117 = arith.cmpi eq, %114, %4 : vector<128x256xi32>
    %118 = arith.extui %117 : vector<128x256xi1> to vector<128x256xi32>
    %119 = arith.sitofp %118 : vector<128x256xi32> to vector<128x256xf32>
    %120 = vector.broadcast %116 : f32 to vector<128x256xf32>
    %121 = arith.mulf %120, %119 : vector<128x256xf32>
    %122 = arith.addf %110, %121 : vector<128x256xf32>
    %123 = arith.truncf %122 : vector<128x256xf32> to vector<128x256xbf16>
    %cst_23 = arith.constant dense<0.000000e+00> : vector<128x128xf32>
    %124 = tpu.matmul %123, %1, %cst_23 {dimension_numbers = #tpu.dot_dimension_numbers<[1], [0], [0], [1], [0, 0, 1, 1], [], []>} : vector<128x256xbf16>, vector<256x128xbf16>, vector<128x128xf32> -> vector<128x128xf32>
    %125 = arith.truncf %124 : vector<128x128xf32> to vector<128x128xbf16>
    %c0_24 = arith.constant 0 : index
    %c0_25 = arith.constant 0 : index
    %126 = vector.load %arg5[%c0_24, %c0_25] : memref<128x128xbf16, #tpu.memory_space<vmem>>, vector<128x128xbf16>
    %cst_26 = arith.constant dense<0.000000e+00> : vector<128x128xf32>
    %127 = tpu.matmul %125, %126, %cst_26 {dimension_numbers = #tpu.dot_dimension_numbers<[1], [0], [0], [1], [0, 0, 1, 1], [], []>} : vector<128x128xbf16>, vector<128x128xbf16>, vector<128x128xf32> -> vector<128x128xf32>
    %c0_27 = arith.constant 0 : index
    %c0_28 = arith.constant 0 : index
    %128 = vector.load %arg6[%c0_27, %c0_28] : memref<1x128xf32, #tpu.memory_space<vmem>>, vector<1x128xf32>
    %129 = vector.broadcast %128 : vector<1x128xf32> to vector<128x128xf32>
    %130 = arith.addf %127, %129 : vector<128x128xf32>
    %cst_29 = arith.constant 0.000000e+00 : f32
    %131 = vector.broadcast %cst_29 : f32 to vector<128x128xf32>
    %132 = arith.maximumf %130, %131 : vector<128x128xf32>
    %c0_30 = arith.constant 0 : index
    %c0_31 = arith.constant 0 : index
    %c0_32 = arith.constant 0 : index
    %133 = vector.load %arg7[%c0_30, %c0_31, %c0_32] : memref<1x128x128xf32, #tpu.memory_space<vmem>>, vector<1x128x128xf32>
    %134 = vector.shape_cast %133 : vector<1x128x128xf32> to vector<128x128xf32>
    %135 = vector.shape_cast %132 : vector<128x128xf32> to vector<1x128x128xf32>
    tpu.vector_store %arg7[%c0_30, %c0_31, %c0_32], %135 {strides = array<i32>} : memref<1x128x128xf32, #tpu.memory_space<vmem>>, vector<1x128x128xf32>,
    return
  }
  func.func @transform_0(%arg0: i32, %arg1: i32) -> i32 {
    %c0_i32 = arith.constant 0 : i32
    %c0_i32_0 = arith.constant 0 : i32
    return %c0_i32 : i32
  }
  func.func @transform_1(%arg0: i32, %arg1: i32) -> (i32, i32, i32) {
    %c0_i32 = arith.constant 0 : i32
    %c0_i32_0 = arith.constant 0 : i32
    %c0_i32_1 = arith.constant 0 : i32
    return %arg0, %c0_i32, %c0_i32_0 : i32, i32, i32
  }
  func.func @transform_2(%arg0: i32, %arg1: i32) -> (i32, i32, i32) {
    %c0_i32 = arith.constant 0 : i32
    %c0_i32_0 = arith.constant 0 : i32
    return %arg0, %arg1, %c0_i32 : i32, i32, i32
  }
  func.func @transform_3(%arg0: i32, %arg1: i32) -> (i32, i32) {
    %c0_i32 = arith.constant 0 : i32
    %c0_i32_0 = arith.constant 0 : i32
    %c0_i32_1 = arith.constant 0 : i32
    return %c0_i32, %c0_i32_0 : i32, i32
  }
  func.func @transform_4(%arg0: i32, %arg1: i32) -> (i32, i32) {
    %c0_i32 = arith.constant 0 : i32
    %c0_i32_0 = arith.constant 0 : i32
    %c0_i32_1 = arith.constant 0 : i32
    return %c0_i32, %c0_i32_0 : i32, i32
  }
  func.func @transform_5(%arg0: i32, %arg1: i32) -> (i32, i32, i32) {
    %c0_i32 = arith.constant 0 : i32
    %c0_i32_0 = arith.constant 0 : i32
    return %arg0, %arg1, %c0_i32 : i32, i32, i32
  }
}

</mosaic_0001>

<llo_original>
// kernel: tpu_custom_call.1
$region0: #{tpu_custom_call.1}
  #allocation0 [shape = 'u32[]', space=smem, size = 0x4, offset = 0x4, fixed_abs, tag = 'smem constant byte address 0x4 - core index']
  #allocation1 [shape = 'u32[144,128]{1,0:T(1,128)}', space=vmem, size = 0x12000, scoped, tag = 'internal scratch']
  #allocation2 [shape = 'f32[1]{0:T(128)S(6)}', space=smem, size = 0x200, scoped, tag = 'scoped memory for tpu_custom_call.1']
  %s0 = inlined_call_operand.<no memory space> [shape: f32[1], index: 0, kind: input, shape index: {}]
  %s1 = inlined_call_operand.vmem [shape: bf16[2,256,128], index: 1, kind: input, shape index: {}]
  %s2 = inlined_call_operand.vmem [shape: s32[2,256,8], index: 2, kind: input, shape index: {}]
  %s3 = inlined_call_operand.vmem [shape: bf16[128,128], index: 3, kind: input, shape index: {}]
  %s4 = inlined_call_operand.vmem [shape: f32[1,128], index: 4, kind: input, shape index: {}]
  %s5 = inlined_call_operand.hbm [shape: f32[2,256,128], index: 5, kind: output, shape index: {}]
  %s6 = sld [smem:[#allocation0]]
  $region53: #{tpu_custom_call.1} parent=0
    _
  %s8 = ssub.s32 1, %s6
  %s9 = scalar_select 0, %s8, %s6
  %10 = sst [smem:[#allocation2]] %s0
  $region1: #{tpu_custom_call.1} parent=0
    #allocation3 [shape = 'u8[131072]{0}', space=vmem, size = 0x20000, scoped, tag = 'output window, operand 0']
    #allocation4 [shape = 's32[2]{0}', space=sflag, size = 0x8, scoped, tag = 'scoped memory for tpu_custom_call.1']
    %11 = vsyncpa [#allocation4], 0
    %s12 = scalar_lea.sflag [#allocation4], 1
    %13 = vsyncpa %s12, 0
    loop: start=0, step=1, limit=6
    $region2: #{tpu_custom_call.1} parent=1 // loop_pre_header
      _
    $region3: #{tpu_custom_call.1} parent=1 // loop_header
      %s15 = sphi 0, %s19
      %p16 = scmp.ge.s32.totalorder %s15, 6
      %s22 = sphi 0, %s34
      %s23 = sphi 0, %s30
      %s24 = sphi 0, %s22
      %s25 = sphi 0, %s23
      %s26 = sphi 0, %s24
      %s27 = sphi 0, %s25
      %s35 = sphi 0, %s35
      %s37 = sphi 0, %s35
      %s38 = sphi 0, %s37
      %s52 = sphi 0, %s38
      %s58 = sphi 0, %s60
      %s61 = sphi 0, %s58
      %s62 = sphi 0, %s61
      %s78 = sphi 0, %s62
      %s86 = sphi 0, %s88
      %s89 = sphi 0, %s86
      %s90 = sphi 0, %s89
      %s106 = sphi 0, %s90
      %s110 = sphi 0, %s110
      %s112 = sphi 0, %s110
      %s113 = sphi 0, %s112
      %s127 = sphi 0, %s113
      %s131 = sphi 0, %s131
      %s133 = sphi 0, %s131
      %s134 = sphi 0, %s133
      %s148 = sphi 0, %s134
      %s156 = sphi 0, %s158
      %s159 = sphi 0, %s156
      %s160 = sphi 0, %s159
      %s176 = sphi 0, %s160
    $region4: #{tpu_custom_call.1} parent=1 // loop_header_branch
      %18 = sbr.rel (%p16) target = $region8
    $region5: #{tpu_custom_call.1} parent=1 // loop_body
      %s20 = ssub.s32 %s15, 1
      %s21 = ssub.s32 %s15, 2
      %s28 = sadd.s32 1, %s23
      %p29 = scmp.ge.s32.totalorder %s28, 2
      %s30 = scalar_select %p29, 0, %s28
      %s31 = sadd.s32 1, %s22
      %s32 = scalar_select %p29, %s31, %s22
      %p33 = scmp.ge.s32.totalorder %s32, 2
      %s34 = scalar_select %p33, 0, %s32
      %s36 = sadd.s32 %s35, 1
      %p39 = scmp.eq.s32.totalorder %s15, 3
      %p40 = scmp.ne.s32.totalorder %s35, %s37
      %p41 = scmp.eq.s32.totalorder %s15, 0
      %p42 = por %p40, %p41
      %p43 = scmp.ne.s32.totalorder %s35, %s37
      %p44 = scmp.eq.s32.totalorder %s20, 3
      %p45 = por %p43, %p44
      %p46 = scmp.ne.s32.totalorder %s37, %s38
      %p47 = scmp.eq.s32.totalorder %s20, 0
      %p48 = por %p46, %p47
      %p49 = scmp.ne.s32.totalorder %s37, %s38
      %p50 = scmp.eq.s32.totalorder %s21, 3
      %p51 = por %p49, %p50
      %p53 = scmp.ne.s32.totalorder %s38, %s52
      %p54 = scmp.eq.s32.totalorder %s21, 0
      %p55 = por %p53, %p54
      %s56 = ssub.s32 %s22, %s34
      %p57 = scmp.eq.s32.totalorder %s56, 0
      %s59 = sadd.s32 %s58, 1
      %s60 = scalar_select %p57, %s58, %s59
      %p63 = pneg %p57
      %p64 = scmp.eq.s32.totalorder %s15, 3
      %p65 = por %p63, %p64
      %p66 = scmp.ne.s32.totalorder %s58, %s61
      %p67 = scmp.eq.s32.totalorder %s15, 0
      %p68 = por %p66, %p67
      %p69 = scmp.ne.s32.totalorder %s58, %s61
      %p70 = scmp.eq.s32.totalorder %s20, 3
      %p71 = por %p69, %p70
      %p72 = scmp.ne.s32.totalorder %s61, %s62
      %p73 = scmp.eq.s32.totalorder %s20, 0
      %p74 = por %p72, %p73
      %p75 = scmp.ne.s32.totalorder %s61, %s62
      %p76 = scmp.eq.s32.totalorder %s21, 3
      %p77 = por %p75, %p76
      %p79 = scmp.ne.s32.totalorder %s62, %s78
      %p80 = scmp.eq.s32.totalorder %s21, 0
      %p81 = por %p79, %p80
      %s82 = ssub.s32 %s22, %s34
      %s83 = ssub.s32 %s23, %s30
      %s84 = sor.u32 %s82, %s83
      %p85 = scmp.eq.s32.totalorder %s84, 0
      %s87 = sadd.s32 %s86, 1
      %s88 = scalar_select %p85, %s86, %s87
      %p91 = pneg %p85
      %p92 = scmp.eq.s32.totalorder %s15, 3
      %p93 = por %p91, %p92
      %p94 = scmp.ne.s32.totalorder %s86, %s89
      %p95 = scmp.eq.s32.totalorder %s15, 0
      %p96 = por %p94, %p95
      %p97 = scmp.ne.s32.totalorder %s86, %s89
      %p98 = scmp.eq.s32.totalorder %s20, 3
      %p99 = por %p97, %p98
      %p100 = scmp.ne.s32.totalorder %s89, %s90
      %p101 = scmp.eq.s32.totalorder %s20, 0
      %p102 = por %p100, %p101
      %p103 = scmp.ne.s32.totalorder %s89, %s90
      %p104 = scmp.eq.s32.totalorder %s21, 3
      %p105 = por %p103, %p104
      %p107 = scmp.ne.s32.totalorder %s90, %s106
      %p108 = scmp.eq.s32.totalorder %s21, 0
      %p109 = por %p107, %p108
      %s111 = sadd.s32 %s110, 1
      %p114 = scmp.eq.s32.totalorder %s15, 3
      %p115 = scmp.ne.s32.totalorder %s110, %s112
      %p116 = scmp.eq.s32.totalorder %s15, 0
      %p117 = por %p115, %p116
      %p118 = scmp.ne.s32.totalorder %s110, %s112
      %p119 = scmp.eq.s32.totalorder %s20, 3
      %p120 = por %p118, %p119
      %p121 = scmp.ne.s32.totalorder %s112, %s113
      %p122 = scmp.eq.s32.totalorder %s20, 0
      %p123 = por %p121, %p122
      %p124 = scmp.ne.s32.totalorder %s112, %s113
      %p125 = scmp.eq.s32.totalorder %s21, 3
      %p126 = por %p124, %p125
      %p128 = scmp.ne.s32.totalorder %s113, %s127
      %p129 = scmp.eq.s32.totalorder %s21, 0
      %p130 = por %p128, %p129
      %s132 = sadd.s32 %s131, 1
      %p135 = scmp.eq.s32.totalorder %s15, 3
      %p136 = scmp.ne.s32.totalorder %s131, %s133
      %p137 = scmp.eq.s32.totalorder %s15, 0
      %p138 = por %p136, %p137
      %p139 = scmp.ne.s32.totalorder %s131, %s133
      %p140 = scmp.eq.s32.totalorder %s20, 3
      %p141 = por %p139, %p140
      %p142 = scmp.ne.s32.totalorder %s133, %s134
      %p143 = scmp.eq.s32.totalorder %s20, 0
      %p144 = por %p142, %p143
      %p145 = scmp.ne.s32.totalorder %s133, %s134
      %p146 = scmp.eq.s32.totalorder %s21, 3
      %p147 = por %p145, %p146
      %p149 = scmp.ne.s32.totalorder %s134, %s148
      %p150 = scmp.eq.s32.totalorder %s21, 0
      %p151 = por %p149, %p150
      %s152 = ssub.s32 %s22, %s34
      %s153 = ssub.s32 %s23, %s30
      %s154 = sor.u32 %s152, %s153
      %p155 = scmp.eq.s32.totalorder %s154, 0
      %s157 = sadd.s32 %s156, 1
      %s158 = scalar_select %p155, %s156, %s157
      %p161 = pneg %p155
      %p162 = scmp.eq.s32.totalorder %s15, 3
      %p163 = por %p161, %p162
      %p164 = scmp.ne.s32.totalorder %s156, %s159
      %p165 = scmp.eq.s32.totalorder %s15, 0
      %p166 = por %p164, %p165
      %p167 = scmp.ne.s32.totalorder %s156, %s159
      %p168 = scmp.eq.s32.totalorder %s20, 3
      %p169 = por %p167, %p168
      %p170 = scmp.ne.s32.totalorder %s159, %s160
      %p171 = scmp.eq.s32.totalorder %s20, 0
      %p172 = por %p170, %p171
      %p173 = scmp.ne.s32.totalorder %s159, %s160
      %p174 = scmp.eq.s32.totalorder %s21, 3
      %p175 = por %p173, %p174
      %p177 = scmp.ne.s32.totalorder %s160, %s176
      %p178 = scmp.eq.s32.totalorder %s21, 0
      %p179 = por %p177, %p178
      %p180 = scmp.le.s32.totalorder 1, %s15
      %p181 = scmp.lt.s32.totalorder %s15, 5
      %p182 = pnand %p180, %p181
      %p183 = pneg %p182
      // Predicated region
      $region9: #{tpu_custom_call.1} parent=5 // pred_check
        _
      $region10: #{tpu_custom_call.1} parent=5 // pred_check_branch
        %185 = sbr.rel (%p182) target = $region12
      $region11: #{tpu_custom_call.1} parent=5 // pred_region
        %s186 = ssub.s32 %s15, 1
        // Predicated region
        $region13: #{tpu_custom_call.1} parent=11 // pred_check
          %p187 = pneg %p48
        $region14: #{tpu_custom_call.1} parent=11 // pred_check_branch
          %189 = sbr.rel (%p187) target = $region16
        $region15: #{tpu_custom_call.1} parent=11 // pred_region
          _
        $region16: #{tpu_custom_call.1} parent=11 // pred_fallthru
          _
        // Predicated region
        $region17: #{tpu_custom_call.1} parent=11 // pred_check
          %p190 = pneg %p123
        $region18: #{tpu_custom_call.1} parent=11 // pred_check_branch
          %192 = sbr.rel (%p190) target = $region20
        $region19: #{tpu_custom_call.1} parent=11 // pred_region
          _
        $region20: #{tpu_custom_call.1} parent=11 // pred_fallthru
          _
        // Predicated region
        $region21: #{tpu_custom_call.1} parent=11 // pred_check
          %p193 = pneg %p144
        $region22: #{tpu_custom_call.1} parent=11 // pred_check_branch
          %195 = sbr.rel (%p193) target = $region24
        $region23: #{tpu_custom_call.1} parent=11 // pred_region
          _
        $region24: #{tpu_custom_call.1} parent=11 // pred_fallthru
          _
      $region12: #{tpu_custom_call.1} parent=5 // pred_fallthru
        _
      %p196 = scmp.lt.s32.totalorder %s15, 4
      // Predicated region
      $region25: #{tpu_custom_call.1} parent=5 // pred_check
        %p197 = pneg %p196
      $region26: #{tpu_custom_call.1} parent=5 // pred_check_branch
        %199 = sbr.rel (%p197) target = $region28
      $region27: #{tpu_custom_call.1} parent=5 // pred_region
        // Predicated region
        $region29: #{tpu_custom_call.1} parent=27 // pred_check
          %p200 = pneg %p68
        $region30: #{tpu_custom_call.1} parent=27 // pred_check_branch
          %202 = sbr.rel (%p200) target = $region32
        $region31: #{tpu_custom_call.1} parent=27 // pred_region
          %p203 = scmp.lt.s32.totalorder %s22, 1
          %s204 = scalar_select %p203, %s22, 1
          %s205 = smul.addr %s204, 32
          %s206 = smul.addr %s205, 4
          %s207 = scalar_lea.vmem %s1, %s206
        $region32: #{tpu_custom_call.1} parent=27 // pred_fallthru
          _
        // Predicated region
        $region33: #{tpu_custom_call.1} parent=27 // pred_check
          %p208 = pneg %p96
        $region34: #{tpu_custom_call.1} parent=27 // pred_check_branch
          %210 = sbr.rel (%p208) target = $region36
        $region35: #{tpu_custom_call.1} parent=27 // pred_region
          %s211 = smul.u32 16, %s23
          %p212 = scmp.lt.s32.totalorder %s22, 1
          %s213 = scalar_select %p212, %s22, 1
          %p214 = scmp.lt.s32.totalorder %s211, 31
          %s215 = scalar_select %p214, %s211, 31
          %s216 = smul.addr %s213, 32
          %s217 = sadd.s32 %s215, %s216
          %s218 = smul.addr %s217, 8
          %s219 = scalar_lea.vmem %s2, %s218
          %s220 = smul.u32 16, %s23
        $region36: #{tpu_custom_call.1} parent=27 // pred_fallthru
          _
      $region28: #{tpu_custom_call.1} parent=5 // pred_fallthru
        _
      %p221 = scmp.le.s32.totalorder 1, %s15
      %p222 = scmp.lt.s32.totalorder %s15, 5
      %p223 = pnand %p221, %p222
      %p224 = pneg %p223
      // Predicated region
      $region37: #{tpu_custom_call.1} parent=5 // pred_check
        _
      $region38: #{tpu_custom_call.1} parent=5 // pred_check_branch
        %226 = sbr.rel (%p223) target = $region40
      $region39: #{tpu_custom_call.1} parent=5 // pred_region
        %s227 = ssub.s32 %s15, 1
        %p228 = pneg %p48
        %p229 = pneg %p45
        %p230 = scmp.lt.s32.totalorder %s24, 1
        %s231 = scalar_select %p230, %s24, 1
        %s232 = smul.addr %s231, 32
        %s233 = smul.addr %s232, 4
        %s234 = scalar_lea.vmem %s1, %s233
        %p235 = pneg %p74
        %p236 = pneg %p71
        %s237 = smul.u32 16, %s25
        %p238 = scmp.lt.s32.totalorder %s24, 1
        %s239 = scalar_select %p238, %s24, 1
        %p240 = scmp.lt.s32.totalorder %s237, 31
        %s241 = scalar_select %p240, %s237, 31
        %s242 = smul.addr %s239, 32
        %s243 = sadd.s32 %s241, %s242
        %s244 = smul.addr %s243, 8
        %s245 = scalar_lea.vmem %s2, %s244
        %p246 = pneg %p102
        %p247 = pneg %p99
        %p248 = pneg %p123
        %p249 = pneg %p120
        %p250 = pneg %p144
        %p251 = pneg %p141
        %p252 = pneg %p172
        %p253 = pneg %p169
        %s254 = sand.u32 %s159, 1
        %s255 = scalar_lea.sflag [#allocation4], %s254
        %s256 = sand.u32 %s159, 1
        %s257 = smul.addr %s256, 128
        %s258 = scalar_lea.vmem [#allocation3], %s257
        %p259 = scmp.lt.s32.totalorder %s24, 1
        %s260 = scalar_select %p259, %s24, 1
        %s261 = smul.addr %s260, 32
        %s262 = smul.addr %s261, 4
        %s263 = scalar_lea.vmem %s1, %s262
        %s264 = smul.u32 16, %s25
        %p265 = scmp.lt.s32.totalorder %s24, 1
        %s266 = scalar_select %p265, %s24, 1
        %p267 = scmp.lt.s32.totalorder %s264, 31
        %s268 = scalar_select %p267, %s264, 31
        %s269 = smul.addr %s266, 32
        %s270 = sadd.s32 %s268, %s269
        %s271 = smul.addr %s270, 8
        %s272 = scalar_lea.vmem %s2, %s271
        %s273 = smul.u32 16, %s25
        %s274 = smul.u32 16, %s25
        %v276 = vld [vmem:[%s263] sm:$0xf]
        %v277 = vld [vmem:[%s263 + $0x4] sm:$0xf]
        %v278 = vld [vmem:[%s263 + $0x8] sm:$0xf]
        %v279 = vld [vmem:[%s263 + $0xc] sm:$0xf]
        %v280 = vld [vmem:[%s263 + $0x10] sm:$0xf]
        %v281 = vld [vmem:[%s263 + $0x14] sm:$0xf]
        %v282 = vld [vmem:[%s263 + $0x18] sm:$0xf]
        %v283 = vld [vmem:[%s263 + $0x1c] sm:$0xf]
        %v284 = vld [vmem:[%s263 + $0x20] sm:$0xf]
        %v285 = vld [vmem:[%s263 + $0x24] sm:$0xf]
        %v286 = vld [vmem:[%s263 + $0x28] sm:$0xf]
        %v287 = vld [vmem:[%s263 + $0x2c] sm:$0xf]
        %v288 = vld [vmem:[%s263 + $0x30] sm:$0xf]
        %v289 = vld [vmem:[%s263 + $0x34] sm:$0xf]
        %v290 = vld [vmem:[%s263 + $0x38] sm:$0xf]
        %v291 = vld [vmem:[%s263 + $0x3c] sm:$0xf]
        %v292 = vld [vmem:[%s263 + $0x40] sm:$0xf]
        %v293 = vld [vmem:[%s263 + $0x44] sm:$0xf]
        %v294 = vld [vmem:[%s263 + $0x48] sm:$0xf]
        %v295 = vld [vmem:[%s263 + $0x4c] sm:$0xf]
        %v296 = vld [vmem:[%s263 + $0x50] sm:$0xf]
        %v297 = vld [vmem:[%s263 + $0x54] sm:$0xf]
        %v298 = vld [vmem:[%s263 + $0x58] sm:$0xf]
        %v299 = vld [vmem:[%s263 + $0x5c] sm:$0xf]
        %v300 = vld [vmem:[%s263 + $0x60] sm:$0xf]
        %v301 = vld [vmem:[%s263 + $0x64] sm:$0xf]
        %v302 = vld [vmem:[%s263 + $0x68] sm:$0xf]
        %v303 = vld [vmem:[%s263 + $0x6c] sm:$0xf]
        %v304 = vld [vmem:[%s263 + $0x70] sm:$0xf]
        %v305 = vld [vmem:[%s263 + $0x74] sm:$0xf]
        %v306 = vld [vmem:[%s263 + $0x78] sm:$0xf]
        %v307 = vld [vmem:[%s263 + $0x7c] sm:$0xf]
        %v308 = vld [vmem:[%s272] sm:$0xff]
        %v309 = vld [vmem:[%s272 + $0x8] sm:$0xff]
        %v310 = vld [vmem:[%s272 + $0x10] sm:$0xff]
        %v311 = vld [vmem:[%s272 + $0x18] sm:$0xff]
        %v312 = vld [vmem:[%s272 + $0x20] sm:$0xff]
        %v313 = vld [vmem:[%s272 + $0x28] sm:$0xff]
        %v314 = vld [vmem:[%s272 + $0x30] sm:$0xff]
        %v315 = vld [vmem:[%s272 + $0x38] sm:$0xff]
        %v316 = vld [vmem:[%s272 + $0x40] sm:$0xff]
        %v317 = vld [vmem:[%s272 + $0x48] sm:$0xff]
        %v318 = vld [vmem:[%s272 + $0x50] sm:$0xff]
        %v319 = vld [vmem:[%s272 + $0x58] sm:$0xff]
        %v320 = vld [vmem:[%s272 + $0x60] sm:$0xff]
        %v321 = vld [vmem:[%s272 + $0x68] sm:$0xff]
        %v322 = vld [vmem:[%s272 + $0x70] sm:$0xff]
        %v323 = vld [vmem:[%s272 + $0x78] sm:$0xff]
        %v324 = vlaneseq
        %v325 = vand.u32 %v324, 127
        %v326 = vadd.s32 %v325, 128
        %vm327 = vcmp.eq.s32.totalorder %v325, 0
        %v328 = vsel %vm327, 1, 0
        %vm329 = vcmp.eq.s32.totalorder %v328, 1
        %v330 = vsel %vm329, %v308, 0
        %v331 = vsel %vm329, %v309, 0
        %v332 = vsel %vm329, %v310, 0
        %v333 = vsel %vm329, %v311, 0
        %v334 = vsel %vm329, %v312, 0
        %v335 = vsel %vm329, %v313, 0
        %v336 = vsel %vm329, %v314, 0
        %v337 = vsel %vm329, %v315, 0
        %v338 = vsel %vm329, %v316, 0
        %v339 = vsel %vm329, %v317, 0
        %v340 = vsel %vm329, %v318, 0
        %v341 = vsel %vm329, %v319, 0
        %v342 = vsel %vm329, %v320, 0
        %v343 = vsel %vm329, %v321, 0
        %v344 = vsel %vm329, %v322, 0
        %v345 = vsel %vm329, %v323, 0
        %vm346 = vcmask 64512
        %v347 = vsel %vm346, %v330, 0
        %v348 = vand.u32 %v347, 65535
        %v349 = vshrl.u32 %v347, 16
        %v350 = vcvt.s32.f32 %v348
        %v351 = vcvt.s32.f32 %v349
        %352 = vadd.xlane.f32.xlu0 %v350
        %v353 = vpop.xlane.xlu0 %352
        %354 = vadd.xlane.f32.xlu0 %v351
        %v355 = vpop.xlane.xlu0 %354
        %v356 = vcvt.f32.s32 %v353
        %v357 = vcvt.f32.s32 %v355
        %v358 = vshll.u32 %v357, 16
        %v359 = vadd.s32 %v358, %v356
        %v360 = vsel %vm346, %v331, 0
        %v361 = vand.u32 %v360, 65535
        %v362 = vshrl.u32 %v360, 16
        %v363 = vcvt.s32.f32 %v361
        %v364 = vcvt.s32.f32 %v362
        %365 = vadd.xlane.f32.xlu0 %v363
        %v366 = vpop.xlane.xlu0 %365
        %367 = vadd.xlane.f32.xlu0 %v364
        %v368 = vpop.xlane.xlu0 %367
        %v369 = vcvt.f32.s32 %v366
        %v370 = vcvt.f32.s32 %v368
        %v371 = vshll.u32 %v370, 16
        %v372 = vadd.s32 %v371, %v369
        %v373 = vsel %vm346, %v332, 0
        %v374 = vand.u32 %v373, 65535
        %v375 = vshrl.u32 %v373, 16
        %v376 = vcvt.s32.f32 %v374
        %v377 = vcvt.s32.f32 %v375
        %378 = vadd.xlane.f32.xlu0 %v376
        %v379 = vpop.xlane.xlu0 %378
        %380 = vadd.xlane.f32.xlu0 %v377
        %v381 = vpop.xlane.xlu0 %380
        %v382 = vcvt.f32.s32 %v379
        %v383 = vcvt.f32.s32 %v381
        %v384 = vshll.u32 %v383, 16
        %v385 = vadd.s32 %v384, %v382
        %v386 = vsel %vm346, %v333, 0
        %v387 = vand.u32 %v386, 65535
        %v388 = vshrl.u32 %v386, 16
        %v389 = vcvt.s32.f32 %v387
        %v390 = vcvt.s32.f32 %v388
        %391 = vadd.xlane.f32.xlu0 %v389
        %v392 = vpop.xlane.xlu0 %391
        %393 = vadd.xlane.f32.xlu0 %v390
        %v394 = vpop.xlane.xlu0 %393
        %v395 = vcvt.f32.s32 %v392
        %v396 = vcvt.f32.s32 %v394
        %v397 = vshll.u32 %v396, 16
        %v398 = vadd.s32 %v397, %v395
        %v399 = vsel %vm346, %v334, 0
        %v400 = vand.u32 %v399, 65535
        %v401 = vshrl.u32 %v399, 16
        %v402 = vcvt.s32.f32 %v400
        %v403 = vcvt.s32.f32 %v401
        %404 = vadd.xlane.f32.xlu0 %v402
        %v405 = vpop.xlane.xlu0 %404
        %406 = vadd.xlane.f32.xlu0 %v403
        %v407 = vpop.xlane.xlu0 %406
        %v408 = vcvt.f32.s32 %v405
        %v409 = vcvt.f32.s32 %v407
        %v410 = vshll.u32 %v409, 16
        %v411 = vadd.s32 %v410, %v408
        %v412 = vsel %vm346, %v335, 0
        %v413 = vand.u32 %v412, 65535
        %v414 = vshrl.u32 %v412, 16
        %v415 = vcvt.s32.f32 %v413
        %v416 = vcvt.s32.f32 %v414
        %417 = vadd.xlane.f32.xlu0 %v415
        %v418 = vpop.xlane.xlu0 %417
        %419 = vadd.xlane.f32.xlu0 %v416
        %v420 = vpop.xlane.xlu0 %419
        %v421 = vcvt.f32.s32 %v418
        %v422 = vcvt.f32.s32 %v420
        %v423 = vshll.u32 %v422, 16
        %v424 = vadd.s32 %v423, %v421
        %v425 = vsel %vm346, %v336, 0
        %v426 = vand.u32 %v425, 65535
        %v427 = vshrl.u32 %v425, 16
        %v428 = vcvt.s32.f32 %v426
        %v429 = vcvt.s32.f32 %v427
        %430 = vadd.xlane.f32.xlu0 %v428
        %v431 = vpop.xlane.xlu0 %430
        %432 = vadd.xlane.f32.xlu0 %v429
        %v433 = vpop.xlane.xlu0 %432
        %v434 = vcvt.f32.s32 %v431
        %v435 = vcvt.f32.s32 %v433
        %v436 = vshll.u32 %v435, 16
        %v437 = vadd.s32 %v436, %v434
        %v438 = vsel %vm346, %v337, 0
        %v439 = vand.u32 %v438, 65535
        %v440 = vshrl.u32 %v438, 16
        %v441 = vcvt.s32.f32 %v439
        %v442 = vcvt.s32.f32 %v440
        %443 = vadd.xlane.f32.xlu0 %v441
        %v444 = vpop.xlane.xlu0 %443
        %445 = vadd.xlane.f32.xlu0 %v442
        %v446 = vpop.xlane.xlu0 %445
        %v447 = vcvt.f32.s32 %v444
        %v448 = vcvt.f32.s32 %v446
        %v449 = vshll.u32 %v448, 16
        %v450 = vadd.s32 %v449, %v447
        %v451 = vsel %vm346, %v338, 0
        %v452 = vand.u32 %v451, 65535
        %v453 = vshrl.u32 %v451, 16
        %v454 = vcvt.s32.f32 %v452
        %v455 = vcvt.s32.f32 %v453
        %456 = vadd.xlane.f32.xlu0 %v454
        %v457 = vpop.xlane.xlu0 %456
        %458 = vadd.xlane.f32.xlu0 %v455
        %v459 = vpop.xlane.xlu0 %458
        %v460 = vcvt.f32.s32 %v457
        %v461 = vcvt.f32.s32 %v459
        %v462 = vshll.u32 %v461, 16
        %v463 = vadd.s32 %v462, %v460
        %v464 = vsel %vm346, %v339, 0
        %v465 = vand.u32 %v464, 65535
        %v466 = vshrl.u32 %v464, 16
        %v467 = vcvt.s32.f32 %v465
        %v468 = vcvt.s32.f32 %v466
        %469 = vadd.xlane.f32.xlu0 %v467
        %v470 = vpop.xlane.xlu0 %469
        %471 = vadd.xlane.f32.xlu0 %v468
        %v472 = vpop.xlane.xlu0 %471
        %v473 = vcvt.f32.s32 %v470
        %v474 = vcvt.f32.s32 %v472
        %v475 = vshll.u32 %v474, 16
        %v476 = vadd.s32 %v475, %v473
        %v477 = vsel %vm346, %v340, 0
        %v478 = vand.u32 %v477, 65535
        %v479 = vshrl.u32 %v477, 16
        %v480 = vcvt.s32.f32 %v478
        %v481 = vcvt.s32.f32 %v479
        %482 = vadd.xlane.f32.xlu0 %v480
        %v483 = vpop.xlane.xlu0 %482
        %484 = vadd.xlane.f32.xlu0 %v481
        %v485 = vpop.xlane.xlu0 %484
        %v486 = vcvt.f32.s32 %v483
        %v487 = vcvt.f32.s32 %v485
        %v488 = vshll.u32 %v487, 16
        %v489 = vadd.s32 %v488, %v486
        %v490 = vsel %vm346, %v341, 0
        %v491 = vand.u32 %v490, 65535
        %v492 = vshrl.u32 %v490, 16
        %v493 = vcvt.s32.f32 %v491
        %v494 = vcvt.s32.f32 %v492
        %495 = vadd.xlane.f32.xlu0 %v493
        %v496 = vpop.xlane.xlu0 %495
        %497 = vadd.xlane.f32.xlu0 %v494
        %v498 = vpop.xlane.xlu0 %497
        %v499 = vcvt.f32.s32 %v496
        %v500 = vcvt.f32.s32 %v498
        %v501 = vshll.u32 %v500, 16
        %v502 = vadd.s32 %v501, %v499
        %v503 = vsel %vm346, %v342, 0
        %v504 = vand.u32 %v503, 65535
        %v505 = vshrl.u32 %v503, 16
        %v506 = vcvt.s32.f32 %v504
        %v507 = vcvt.s32.f32 %v505
        %508 = vadd.xlane.f32.xlu0 %v506
        %v509 = vpop.xlane.xlu0 %508
        %510 = vadd.xlane.f32.xlu0 %v507
        %v511 = vpop.xlane.xlu0 %510
        %v512 = vcvt.f32.s32 %v509
        %v513 = vcvt.f32.s32 %v511
        %v514 = vshll.u32 %v513, 16
        %v515 = vadd.s32 %v514, %v512
        %v516 = vsel %vm346, %v343, 0
        %v517 = vand.u32 %v516, 65535
        %v518 = vshrl.u32 %v516, 16
        %v519 = vcvt.s32.f32 %v517
        %v520 = vcvt.s32.f32 %v518
        %521 = vadd.xlane.f32.xlu0 %v519
        %v522 = vpop.xlane.xlu0 %521
        %523 = vadd.xlane.f32.xlu0 %v520
        %v524 = vpop.xlane.xlu0 %523
        %v525 = vcvt.f32.s32 %v522
        %v526 = vcvt.f32.s32 %v524
        %v527 = vshll.u32 %v526, 16
        %v528 = vadd.s32 %v527, %v525
        %v529 = vsel %vm346, %v344, 0
        %v530 = vand.u32 %v529, 65535
        %v531 = vshrl.u32 %v529, 16
        %v532 = vcvt.s32.f32 %v530
        %v533 = vcvt.s32.f32 %v531
        %534 = vadd.xlane.f32.xlu0 %v532
        %v535 = vpop.xlane.xlu0 %534
        %536 = vadd.xlane.f32.xlu0 %v533
        %v537 = vpop.xlane.xlu0 %536
        %v538 = vcvt.f32.s32 %v535
        %v539 = vcvt.f32.s32 %v537
        %v540 = vshll.u32 %v539, 16
        %v541 = vadd.s32 %v540, %v538
        %v542 = vsel %vm346, %v345, 0
        %v543 = vand.u32 %v542, 65535
        %v544 = vshrl.u32 %v542, 16
        %v545 = vcvt.s32.f32 %v543
        %v546 = vcvt.s32.f32 %v544
        %547 = vadd.xlane.f32.xlu0 %v545
        %v548 = vpop.xlane.xlu0 %547
        %549 = vadd.xlane.f32.xlu0 %v546
        %v550 = vpop.xlane.xlu0 %549
        %v551 = vcvt.f32.s32 %v548
        %v552 = vcvt.f32.s32 %v550
        %v553 = vshll.u32 %v552, 16
        %v554 = vadd.s32 %v553, %v551
        %vm555 = vcmp.eq.s32.totalorder %v359, %v325
        %vm556 = vcmp.eq.s32.totalorder %v359, %v326
        %vm557 = vcmp.eq.s32.totalorder %v372, %v325
        %vm558 = vcmp.eq.s32.totalorder %v372, %v326
        %vm559 = vcmp.eq.s32.totalorder %v385, %v325
        %vm560 = vcmp.eq.s32.totalorder %v385, %v326
        %vm561 = vcmp.eq.s32.totalorder %v398, %v325
        %vm562 = vcmp.eq.s32.totalorder %v398, %v326
        %vm563 = vcmp.eq.s32.totalorder %v411, %v325
        %vm564 = vcmp.eq.s32.totalorder %v411, %v326
        %vm565 = vcmp.eq.s32.totalorder %v424, %v325
        %vm566 = vcmp.eq.s32.totalorder %v424, %v326
        %vm567 = vcmp.eq.s32.totalorder %v437, %v325
        %vm568 = vcmp.eq.s32.totalorder %v437, %v326
        %vm569 = vcmp.eq.s32.totalorder %v450, %v325
        %vm570 = vcmp.eq.s32.totalorder %v450, %v326
        %vm571 = vcmp.eq.s32.totalorder %v463, %v325
        %vm572 = vcmp.eq.s32.totalorder %v463, %v326
        %vm573 = vcmp.eq.s32.totalorder %v476, %v325
        %vm574 = vcmp.eq.s32.totalorder %v476, %v326
        %vm575 = vcmp.eq.s32.totalorder %v489, %v325
        %vm576 = vcmp.eq.s32.totalorder %v489, %v326
        %vm577 = vcmp.eq.s32.totalorder %v502, %v325
        %vm578 = vcmp.eq.s32.totalorder %v502, %v326
        %vm579 = vcmp.eq.s32.totalorder %v515, %v325
        %vm580 = vcmp.eq.s32.totalorder %v515, %v326
        %vm581 = vcmp.eq.s32.totalorder %v528, %v325
        %vm582 = vcmp.eq.s32.totalorder %v528, %v326
        %vm583 = vcmp.eq.s32.totalorder %v541, %v325
        %vm584 = vcmp.eq.s32.totalorder %v541, %v326
        %vm585 = vcmp.eq.s32.totalorder %v554, %v325
        %vm586 = vcmp.eq.s32.totalorder %v554, %v326
        %v587 = vsel %vm555, 1, 0
        %v588 = vsel %vm556, 1, 0
        %v589 = vsel %vm557, 1, 0
        %v590 = vsel %vm558, 1, 0
        %v591 = vsel %vm559, 1, 0
        %v592 = vsel %vm560, 1, 0
        %v593 = vsel %vm561, 1, 0
        %v594 = vsel %vm562, 1, 0
        %v595 = vsel %vm563, 1, 0
        %v596 = vsel %vm564, 1, 0
        %v597 = vsel %vm565, 1, 0
        %v598 = vsel %vm566, 1, 0
        %v599 = vsel %vm567, 1, 0
        %v600 = vsel %vm568, 1, 0
        %v601 = vsel %vm569, 1, 0
        %v602 = vsel %vm570, 1, 0
        %v603 = vsel %vm571, 1, 0
        %v604 = vsel %vm572, 1, 0
        %v605 = vsel %vm573, 1, 0
        %v606 = vsel %vm574, 1, 0
        %v607 = vsel %vm575, 1, 0
        %v608 = vsel %vm576, 1, 0
        %v609 = vsel %vm577, 1, 0
        %v610 = vsel %vm578, 1, 0
        %v611 = vsel %vm579, 1, 0
        %v612 = vsel %vm580, 1, 0
        %v613 = vsel %vm581, 1, 0
        %v614 = vsel %vm582, 1, 0
        %v615 = vsel %vm583, 1, 0
        %v616 = vsel %vm584, 1, 0
        %v617 = vsel %vm585, 1, 0
        %v618 = vsel %vm586, 1, 0
        %v619 = vcvt.s32.f32 %v587
        %v620 = vcvt.s32.f32 %v588
        %v621 = vcvt.s32.f32 %v589
        %v622 = vcvt.s32.f32 %v590
        %v623 = vcvt.s32.f32 %v591
        %v624 = vcvt.s32.f32 %v592
        %v625 = vcvt.s32.f32 %v593
        %v626 = vcvt.s32.f32 %v594
        %v627 = vcvt.s32.f32 %v595
        %v628 = vcvt.s32.f32 %v596
        %v629 = vcvt.s32.f32 %v597
        %v630 = vcvt.s32.f32 %v598
        %v631 = vcvt.s32.f32 %v599
        %v632 = vcvt.s32.f32 %v600
        %v633 = vcvt.s32.f32 %v601
        %v634 = vcvt.s32.f32 %v602
        %v635 = vcvt.s32.f32 %v603
        %v636 = vcvt.s32.f32 %v604
        %v637 = vcvt.s32.f32 %v605
        %v638 = vcvt.s32.f32 %v606
        %v639 = vcvt.s32.f32 %v607
        %v640 = vcvt.s32.f32 %v608
        %v641 = vcvt.s32.f32 %v609
        %v642 = vcvt.s32.f32 %v610
        %v643 = vcvt.s32.f32 %v611
        %v644 = vcvt.s32.f32 %v612
        %v645 = vcvt.s32.f32 %v613
        %v646 = vcvt.s32.f32 %v614
        %v647 = vcvt.s32.f32 %v615
        %v648 = vcvt.s32.f32 %v616
        %v649 = vcvt.s32.f32 %v617
        %v650 = vcvt.s32.f32 %v618
        %v651 = vadd.f32 %v619, 0.0
        %v652 = vadd.f32 %v620, 0.0
        %v653 = vadd.f32 %v621, 0.0
        %v654 = vadd.f32 %v622, 0.0
        %v655 = vadd.f32 %v623, 0.0
        %v656 = vadd.f32 %v624, 0.0
        %v657 = vadd.f32 %v625, 0.0
        %v658 = vadd.f32 %v626, 0.0
        %v659 = vadd.f32 %v627, 0.0
        %v660 = vadd.f32 %v628, 0.0
        %v661 = vadd.f32 %v629, 0.0
        %v662 = vadd.f32 %v630, 0.0
        %v663 = vadd.f32 %v631, 0.0
        %v664 = vadd.f32 %v632, 0.0
        %v665 = vadd.f32 %v633, 0.0
        %v666 = vadd.f32 %v634, 0.0
        %v667 = vadd.f32 %v635, 0.0
        %v668 = vadd.f32 %v636, 0.0
        %v669 = vadd.f32 %v637, 0.0
        %v670 = vadd.f32 %v638, 0.0
        %v671 = vadd.f32 %v639, 0.0
        %v672 = vadd.f32 %v640, 0.0
        %v673 = vadd.f32 %v641, 0.0
        %v674 = vadd.f32 %v642, 0.0
        %v675 = vadd.f32 %v643, 0.0
        %v676 = vadd.f32 %v644, 0.0
        %v677 = vadd.f32 %v645, 0.0
        %v678 = vadd.f32 %v646, 0.0
        %v679 = vadd.f32 %v647, 0.0
        %v680 = vadd.f32 %v648, 0.0
        %v681 = vadd.f32 %v649, 0.0
        %v682 = vadd.f32 %v650, 0.0
        %vm683 = vcmp.eq.s32.totalorder %v325, 1
        %v684 = vsel %vm683, 1, 0
        %vm685 = vcmp.eq.s32.totalorder %v684, 1
        %v686 = vsel %vm685, %v308, 0
        %v687 = vsel %vm685, %v309, 0
        %v688 = vsel %vm685, %v310, 0
        %v689 = vsel %vm685, %v311, 0
        %v690 = vsel %vm685, %v312, 0
        %v691 = vsel %vm685, %v313, 0
        %v692 = vsel %vm685, %v314, 0
        %v693 = vsel %vm685, %v315, 0
        %v694 = vsel %vm685, %v316, 0
        %v695 = vsel %vm685, %v317, 0
        %v696 = vsel %vm685, %v318, 0
        %v697 = vsel %vm685, %v319, 0
        %v698 = vsel %vm685, %v320, 0
        %v699 = vsel %vm685, %v321, 0
        %v700 = vsel %vm685, %v322, 0
        %v701 = vsel %vm685, %v323, 0
        %v702 = vsel %vm346, %v686, 0
        %v703 = vand.u32 %v702, 65535
        %v704 = vshrl.u32 %v702, 16
        %v705 = vcvt.s32.f32 %v703
        %v706 = vcvt.s32.f32 %v704
        %707 = vadd.xlane.f32.xlu0 %v705
        %v708 = vpop.xlane.xlu0 %707
        %709 = vadd.xlane.f32.xlu0 %v706
        %v710 = vpop.xlane.xlu0 %709
        %v711 = vcvt.f32.s32 %v708
        %v712 = vcvt.f32.s32 %v710
        %v713 = vshll.u32 %v712, 16
        %v714 = vadd.s32 %v713, %v711
        %v715 = vsel %vm346, %v687, 0
        %v716 = vand.u32 %v715, 65535
        %v717 = vshrl.u32 %v715, 16
        %v718 = vcvt.s32.f32 %v716
        %v719 = vcvt.s32.f32 %v717
        %720 = vadd.xlane.f32.xlu0 %v718
        %v721 = vpop.xlane.xlu0 %720
        %722 = vadd.xlane.f32.xlu0 %v719
        %v723 = vpop.xlane.xlu0 %722
        %v724 = vcvt.f32.s32 %v721
        %v725 = vcvt.f32.s32 %v723
        %v726 = vshll.u32 %v725, 16
        %v727 = vadd.s32 %v726, %v724
        %v728 = vsel %vm346, %v688, 0
        %v729 = vand.u32 %v728, 65535
        %v730 = vshrl.u32 %v728, 16
        %v731 = vcvt.s32.f32 %v729
        %v732 = vcvt.s32.f32 %v730
        %733 = vadd.xlane.f32.xlu0 %v731
        %v734 = vpop.xlane.xlu0 %733
        %735 = vadd.xlane.f32.xlu0 %v732
        %v736 = vpop.xlane.xlu0 %735
        %v737 = vcvt.f32.s32 %v734
        %v738 = vcvt.f32.s32 %v736
        %v739 = vshll.u32 %v738, 16
        %v740 = vadd.s32 %v739, %v737
        %v741 = vsel %vm346, %v689, 0
        %v742 = vand.u32 %v741, 65535
        %v743 = vshrl.u32 %v741, 16
        %v744 = vcvt.s32.f32 %v742
        %v745 = vcvt.s32.f32 %v743
        %746 = vadd.xlane.f32.xlu0 %v744
        %v747 = vpop.xlane.xlu0 %746
        %748 = vadd.xlane.f32.xlu0 %v745
        %v749 = vpop.xlane.xlu0 %748
        %v750 = vcvt.f32.s32 %v747
        %v751 = vcvt.f32.s32 %v749
        %v752 = vshll.u32 %v751, 16
        %v753 = vadd.s32 %v752, %v750
        %v754 = vsel %vm346, %v690, 0
        %v755 = vand.u32 %v754, 65535
        %v756 = vshrl.u32 %v754, 16
        %v757 = vcvt.s32.f32 %v755
        %v758 = vcvt.s32.f32 %v756
        %759 = vadd.xlane.f32.xlu0 %v757
        %v760 = vpop.xlane.xlu0 %759
        %761 = vadd.xlane.f32.xlu0 %v758
        %v762 = vpop.xlane.xlu0 %761
        %v763 = vcvt.f32.s32 %v760
        %v764 = vcvt.f32.s32 %v762
        %v765 = vshll.u32 %v764, 16
        %v766 = vadd.s32 %v765, %v763
        %v767 = vsel %vm346, %v691, 0
        %v768 = vand.u32 %v767, 65535
        %v769 = vshrl.u32 %v767, 16
        %v770 = vcvt.s32.f32 %v768
        %v771 = vcvt.s32.f32 %v769
        %772 = vadd.xlane.f32.xlu0 %v770
        %v773 = vpop.xlane.xlu0 %772
        %774 = vadd.xlane.f32.xlu0 %v771
        %v775 = vpop.xlane.xlu0 %774
        %v776 = vcvt.f32.s32 %v773
        %v777 = vcvt.f32.s32 %v775
        %v778 = vshll.u32 %v777, 16
        %v779 = vadd.s32 %v778, %v776
        %v780 = vsel %vm346, %v692, 0
        %v781 = vand.u32 %v780, 65535
        %v782 = vshrl.u32 %v780, 16
        %v783 = vcvt.s32.f32 %v781
        %v784 = vcvt.s32.f32 %v782
        %785 = vadd.xlane.f32.xlu0 %v783
        %v786 = vpop.xlane.xlu0 %785
        %787 = vadd.xlane.f32.xlu0 %v784
        %v788 = vpop.xlane.xlu0 %787
        %v789 = vcvt.f32.s32 %v786
        %v790 = vcvt.f32.s32 %v788
        %v791 = vshll.u32 %v790, 16
        %v792 = vadd.s32 %v791, %v789
        %v793 = vsel %vm346, %v693, 0
        %v794 = vand.u32 %v793, 65535
        %v795 = vshrl.u32 %v793, 16
        %v796 = vcvt.s32.f32 %v794
        %v797 = vcvt.s32.f32 %v795
        %798 = vadd.xlane.f32.xlu0 %v796
        %v799 = vpop.xlane.xlu0 %798
        %800 = vadd.xlane.f32.xlu0 %v797
        %v801 = vpop.xlane.xlu0 %800
        %v802 = vcvt.f32.s32 %v799
        %v803 = vcvt.f32.s32 %v801
        %v804 = vshll.u32 %v803, 16
        %v805 = vadd.s32 %v804, %v802
        %v806 = vsel %vm346, %v694, 0
        %v807 = vand.u32 %v806, 65535
        %v808 = vshrl.u32 %v806, 16
        %v809 = vcvt.s32.f32 %v807
        %v810 = vcvt.s32.f32 %v808
        %811 = vadd.xlane.f32.xlu0 %v809
        %v812 = vpop.xlane.xlu0 %811
        %813 = vadd.xlane.f32.xlu0 %v810
        %v814 = vpop.xlane.xlu0 %813
        %v815 = vcvt.f32.s32 %v812
        %v816 = vcvt.f32.s32 %v814
        %v817 = vshll.u32 %v816, 16
        %v818 = vadd.s32 %v817, %v815
        %v819 = vsel %vm346, %v695, 0
        %v820 = vand.u32 %v819, 65535
        %v821 = vshrl.u32 %v819, 16
        %v822 = vcvt.s32.f32 %v820
        %v823 = vcvt.s32.f32 %v821
        %824 = vadd.xlane.f32.xlu0 %v822
        %v825 = vpop.xlane.xlu0 %824
        %826 = vadd.xlane.f32.xlu0 %v823
        %v827 = vpop.xlane.xlu0 %826
        %v828 = vcvt.f32.s32 %v825
        %v829 = vcvt.f32.s32 %v827
        %v830 = vshll.u32 %v829, 16
        %v831 = vadd.s32 %v830, %v828
        %v832 = vsel %vm346, %v696, 0
        %v833 = vand.u32 %v832, 65535
        %v834 = vshrl.u32 %v832, 16
        %v835 = vcvt.s32.f32 %v833
        %v836 = vcvt.s32.f32 %v834
        %837 = vadd.xlane.f32.xlu0 %v835
        %v838 = vpop.xlane.xlu0 %837
        %839 = vadd.xlane.f32.xlu0 %v836
        %v840 = vpop.xlane.xlu0 %839
        %v841 = vcvt.f32.s32 %v838
        %v842 = vcvt.f32.s32 %v840
        %v843 = vshll.u32 %v842, 16
        %v844 = vadd.s32 %v843, %v841
        %v845 = vsel %vm346, %v697, 0
        %v846 = vand.u32 %v845, 65535
        %v847 = vshrl.u32 %v845, 16
        %v848 = vcvt.s32.f32 %v846
        %v849 = vcvt.s32.f32 %v847
        %850 = vadd.xlane.f32.xlu0 %v848
        %v851 = vpop.xlane.xlu0 %850
        %852 = vadd.xlane.f32.xlu0 %v849
        %v853 = vpop.xlane.xlu0 %852
        %v854 = vcvt.f32.s32 %v851
        %v855 = vcvt.f32.s32 %v853
        %v856 = vshll.u32 %v855, 16
        %v857 = vadd.s32 %v856, %v854
        %v858 = vsel %vm346, %v698, 0
        %v859 = vand.u32 %v858, 65535
        %v860 = vshrl.u32 %v858, 16
        %v861 = vcvt.s32.f32 %v859
        %v862 = vcvt.s32.f32 %v860
        %863 = vadd.xlane.f32.xlu0 %v861
        %v864 = vpop.xlane.xlu0 %863
        %865 = vadd.xlane.f32.xlu0 %v862
        %v866 = vpop.xlane.xlu0 %865
        %v867 = vcvt.f32.s32 %v864
        %v868 = vcvt.f32.s32 %v866
        %v869 = vshll.u32 %v868, 16
        %v870 = vadd.s32 %v869, %v867
        %v871 = vsel %vm346, %v699, 0
        %v872 = vand.u32 %v871, 65535
        %v873 = vshrl.u32 %v871, 16
        %v874 = vcvt.s32.f32 %v872
        %v875 = vcvt.s32.f32 %v873
        %876 = vadd.xlane.f32.xlu0 %v874
        %v877 = vpop.xlane.xlu0 %876
        %878 = vadd.xlane.f32.xlu0 %v875
        %v879 = vpop.xlane.xlu0 %878
        %v880 = vcvt.f32.s32 %v877
        %v881 = vcvt.f32.s32 %v879
        %v882 = vshll.u32 %v881, 16
        %v883 = vadd.s32 %v882, %v880
        %v884 = vsel %vm346, %v700, 0
        %v885 = vand.u32 %v884, 65535
        %v886 = vshrl.u32 %v884, 16
        %v887 = vcvt.s32.f32 %v885
        %v888 = vcvt.s32.f32 %v886
        %889 = vadd.xlane.f32.xlu0 %v887
        %v890 = vpop.xlane.xlu0 %889
        %891 = vadd.xlane.f32.xlu0 %v888
        %v892 = vpop.xlane.xlu0 %891
        %v893 = vcvt.f32.s32 %v890
        %v894 = vcvt.f32.s32 %v892
        %v895 = vshll.u32 %v894, 16
        %v896 = vadd.s32 %v895, %v893
        %v897 = vsel %vm346, %v701, 0
        %v898 = vand.u32 %v897, 65535
        %v899 = vshrl.u32 %v897, 16
        %v900 = vcvt.s32.f32 %v898
        %v901 = vcvt.s32.f32 %v899
        %902 = vadd.xlane.f32.xlu0 %v900
        %v903 = vpop.xlane.xlu0 %902
        %904 = vadd.xlane.f32.xlu0 %v901
        %v905 = vpop.xlane.xlu0 %904
        %v906 = vcvt.f32.s32 %v903
        %v907 = vcvt.f32.s32 %v905
        %v908 = vshll.u32 %v907, 16
        %v909 = vadd.s32 %v908, %v906
        %vm910 = vcmp.eq.s32.totalorder %v714, %v325
        %vm911 = vcmp.eq.s32.totalorder %v714, %v326
        %vm912 = vcmp.eq.s32.totalorder %v727, %v325
        %vm913 = vcmp.eq.s32.totalorder %v727, %v326
        %vm914 = vcmp.eq.s32.totalorder %v740, %v325
        %vm915 = vcmp.eq.s32.totalorder %v740, %v326
        %vm916 = vcmp.eq.s32.totalorder %v753, %v325
        %vm917 = vcmp.eq.s32.totalorder %v753, %v326
        %vm918 = vcmp.eq.s32.totalorder %v766, %v325
        %vm919 = vcmp.eq.s32.totalorder %v766, %v326
        %vm920 = vcmp.eq.s32.totalorder %v779, %v325
        %vm921 = vcmp.eq.s32.totalorder %v779, %v326
        %vm922 = vcmp.eq.s32.totalorder %v792, %v325
        %vm923 = vcmp.eq.s32.totalorder %v792, %v326
        %vm924 = vcmp.eq.s32.totalorder %v805, %v325
        %vm925 = vcmp.eq.s32.totalorder %v805, %v326
        %vm926 = vcmp.eq.s32.totalorder %v818, %v325
        %vm927 = vcmp.eq.s32.totalorder %v818, %v326
        %vm928 = vcmp.eq.s32.totalorder %v831, %v325
        %vm929 = vcmp.eq.s32.totalorder %v831, %v326
        %vm930 = vcmp.eq.s32.totalorder %v844, %v325
        %vm931 = vcmp.eq.s32.totalorder %v844, %v326
        %vm932 = vcmp.eq.s32.totalorder %v857, %v325
        %vm933 = vcmp.eq.s32.totalorder %v857, %v326
        %vm934 = vcmp.eq.s32.totalorder %v870, %v325
        %vm935 = vcmp.eq.s32.totalorder %v870, %v326
        %vm936 = vcmp.eq.s32.totalorder %v883, %v325
        %vm937 = vcmp.eq.s32.totalorder %v883, %v326
        %vm938 = vcmp.eq.s32.totalorder %v896, %v325
        %vm939 = vcmp.eq.s32.totalorder %v896, %v326
        %vm940 = vcmp.eq.s32.totalorder %v909, %v325
        %vm941 = vcmp.eq.s32.totalorder %v909, %v326
        %v942 = vsel %vm910, 1, 0
        %v943 = vsel %vm911, 1, 0
        %v944 = vsel %vm912, 1, 0
        %v945 = vsel %vm913, 1, 0
        %v946 = vsel %vm914, 1, 0
        %v947 = vsel %vm915, 1, 0
        %v948 = vsel %vm916, 1, 0
        %v949 = vsel %vm917, 1, 0
        %v950 = vsel %vm918, 1, 0
        %v951 = vsel %vm919, 1, 0
        %v952 = vsel %vm920, 1, 0
        %v953 = vsel %vm921, 1, 0
        %v954 = vsel %vm922, 1, 0
        %v955 = vsel %vm923, 1, 0
        %v956 = vsel %vm924, 1, 0
        %v957 = vsel %vm925, 1, 0
        %v958 = vsel %vm926, 1, 0
        %v959 = vsel %vm927, 1, 0
        %v960 = vsel %vm928, 1, 0
        %v961 = vsel %vm929, 1, 0
        %v962 = vsel %vm930, 1, 0
        %v963 = vsel %vm931, 1, 0
        %v964 = vsel %vm932, 1, 0
        %v965 = vsel %vm933, 1, 0
        %v966 = vsel %vm934, 1, 0
        %v967 = vsel %vm935, 1, 0
        %v968 = vsel %vm936, 1, 0
        %v969 = vsel %vm937, 1, 0
        %v970 = vsel %vm938, 1, 0
        %v971 = vsel %vm939, 1, 0
        %v972 = vsel %vm940, 1, 0
        %v973 = vsel %vm941, 1, 0
        %v974 = vcvt.s32.f32 %v942
        %v975 = vcvt.s32.f32 %v943
        %v976 = vcvt.s32.f32 %v944
        %v977 = vcvt.s32.f32 %v945
        %v978 = vcvt.s32.f32 %v946
        %v979 = vcvt.s32.f32 %v947
        %v980 = vcvt.s32.f32 %v948
        %v981 = vcvt.s32.f32 %v949
        %v982 = vcvt.s32.f32 %v950
        %v983 = vcvt.s32.f32 %v951
        %v984 = vcvt.s32.f32 %v952
        %v985 = vcvt.s32.f32 %v953
        %v986 = vcvt.s32.f32 %v954
        %v987 = vcvt.s32.f32 %v955
        %v988 = vcvt.s32.f32 %v956
        %v989 = vcvt.s32.f32 %v957
        %v990 = vcvt.s32.f32 %v958
        %v991 = vcvt.s32.f32 %v959
        %v992 = vcvt.s32.f32 %v960
        %v993 = vcvt.s32.f32 %v961
        %v994 = vcvt.s32.f32 %v962
        %v995 = vcvt.s32.f32 %v963
        %v996 = vcvt.s32.f32 %v964
        %v997 = vcvt.s32.f32 %v965
        %v998 = vcvt.s32.f32 %v966
        %v999 = vcvt.s32.f32 %v967
        %v1000 = vcvt.s32.f32 %v968
        %v1001 = vcvt.s32.f32 %v969
        %v1002 = vcvt.s32.f32 %v970
        %v1003 = vcvt.s32.f32 %v971
        %v1004 = vcvt.s32.f32 %v972
        %v1005 = vcvt.s32.f32 %v973
        %v1006 = vadd.f32 %v651, %v974
        %v1007 = vadd.f32 %v652, %v975
        %v1008 = vadd.f32 %v653, %v976
        %v1009 = vadd.f32 %v654, %v977
        %v1010 = vadd.f32 %v655, %v978
        %v1011 = vadd.f32 %v656, %v979
        %v1012 = vadd.f32 %v657, %v980
        %v1013 = vadd.f32 %v658, %v981
        %v1014 = vadd.f32 %v659, %v982
        %v1015 = vadd.f32 %v660, %v983
        %v1016 = vadd.f32 %v661, %v984
        %v1017 = vadd.f32 %v662, %v985
        %v1018 = vadd.f32 %v663, %v986
        %v1019 = vadd.f32 %v664, %v987
        %v1020 = vadd.f32 %v665, %v988
        %v1021 = vadd.f32 %v666, %v989
        %v1022 = vadd.f32 %v667, %v990
        %v1023 = vadd.f32 %v668, %v991
        %v1024 = vadd.f32 %v669, %v992
        %v1025 = vadd.f32 %v670, %v993
        %v1026 = vadd.f32 %v671, %v994
        %v1027 = vadd.f32 %v672, %v995
        %v1028 = vadd.f32 %v673, %v996
        %v1029 = vadd.f32 %v674, %v997
        %v1030 = vadd.f32 %v675, %v998
        %v1031 = vadd.f32 %v676, %v999
        %v1032 = vadd.f32 %v677, %v1000
        %v1033 = vadd.f32 %v678, %v1001
        %v1034 = vadd.f32 %v679, %v1002
        %v1035 = vadd.f32 %v680, %v1003
        %v1036 = vadd.f32 %v681, %v1004
        %v1037 = vadd.f32 %v682, %v1005
        %vm1038 = vcmp.eq.s32.totalorder %v325, 2
        %v1039 = vsel %vm1038, 1, 0
        %vm1040 = vcmp.eq.s32.totalorder %v1039, 1
        %v1041 = vsel %vm1040, %v308, 0
        %v1042 = vsel %vm1040, %v309, 0
        %v1043 = vsel %vm1040, %v310, 0
        %v1044 = vsel %vm1040, %v311, 0
        %v1045 = vsel %vm1040, %v312, 0
        %v1046 = vsel %vm1040, %v313, 0
        %v1047 = vsel %vm1040, %v314, 0
        %v1048 = vsel %vm1040, %v315, 0
        %v1049 = vsel %vm1040, %v316, 0
        %v1050 = vsel %vm1040, %v317, 0
        %v1051 = vsel %vm1040, %v318, 0
        %v1052 = vsel %vm1040, %v319, 0
        %v1053 = vsel %vm1040, %v320, 0
        %v1054 = vsel %vm1040, %v321, 0
        %v1055 = vsel %vm1040, %v322, 0
        %v1056 = vsel %vm1040, %v323, 0
        %v1057 = vsel %vm346, %v1041, 0
        %v1058 = vand.u32 %v1057, 65535
        %v1059 = vshrl.u32 %v1057, 16
        %v1060 = vcvt.s32.f32 %v1058
        %v1061 = vcvt.s32.f32 %v1059
        %1062 = vadd.xlane.f32.xlu0 %v1060
        %v1063 = vpop.xlane.xlu0 %1062
        %1064 = vadd.xlane.f32.xlu0 %v1061
        %v1065 = vpop.xlane.xlu0 %1064
        %v1066 = vcvt.f32.s32 %v1063
        %v1067 = vcvt.f32.s32 %v1065
        %v1068 = vshll.u32 %v1067, 16
        %v1069 = vadd.s32 %v1068, %v1066
        %v1070 = vsel %vm346, %v1042, 0
        %v1071 = vand.u32 %v1070, 65535
        %v1072 = vshrl.u32 %v1070, 16
        %v1073 = vcvt.s32.f32 %v1071
        %v1074 = vcvt.s32.f32 %v1072
        %1075 = vadd.xlane.f32.xlu0 %v1073
        %v1076 = vpop.xlane.xlu0 %1075
        %1077 = vadd.xlane.f32.xlu0 %v1074
        %v1078 = vpop.xlane.xlu0 %1077
        %v1079 = vcvt.f32.s32 %v1076
        %v1080 = vcvt.f32.s32 %v1078
        %v1081 = vshll.u32 %v1080, 16
        %v1082 = vadd.s32 %v1081, %v1079
        %v1083 = vsel %vm346, %v1043, 0
        %v1084 = vand.u32 %v1083, 65535
        %v1085 = vshrl.u32 %v1083, 16
        %v1086 = vcvt.s32.f32 %v1084
        %v1087 = vcvt.s32.f32 %v1085
        %1088 = vadd.xlane.f32.xlu0 %v1086
        %v1089 = vpop.xlane.xlu0 %1088
        %1090 = vadd.xlane.f32.xlu0 %v1087
        %v1091 = vpop.xlane.xlu0 %1090
        %v1092 = vcvt.f32.s32 %v1089
        %v1093 = vcvt.f32.s32 %v1091
        %v1094 = vshll.u32 %v1093, 16
        %v1095 = vadd.s32 %v1094, %v1092
        %v1096 = vsel %vm346, %v1044, 0
        %v1097 = vand.u32 %v1096, 65535
        %v1098 = vshrl.u32 %v1096, 16
        %v1099 = vcvt.s32.f32 %v1097
        %v1100 = vcvt.s32.f32 %v1098
        %1101 = vadd.xlane.f32.xlu0 %v1099
        %v1102 = vpop.xlane.xlu0 %1101
        %1103 = vadd.xlane.f32.xlu0 %v1100
        %v1104 = vpop.xlane.xlu0 %1103
        %v1105 = vcvt.f32.s32 %v1102
        %v1106 = vcvt.f32.s32 %v1104
        %v1107 = vshll.u32 %v1106, 16
        %v1108 = vadd.s32 %v1107, %v1105
        %v1109 = vsel %vm346, %v1045, 0
        %v1110 = vand.u32 %v1109, 65535
        %v1111 = vshrl.u32 %v1109, 16
        %v1112 = vcvt.s32.f32 %v1110
        %v1113 = vcvt.s32.f32 %v1111
        %1114 = vadd.xlane.f32.xlu0 %v1112
        %v1115 = vpop.xlane.xlu0 %1114
        %1116 = vadd.xlane.f32.xlu0 %v1113
        %v1117 = vpop.xlane.xlu0 %1116
        %v1118 = vcvt.f32.s32 %v1115
        %v1119 = vcvt.f32.s32 %v1117
        %v1120 = vshll.u32 %v1119, 16
        %v1121 = vadd.s32 %v1120, %v1118
        %v1122 = vsel %vm346, %v1046, 0
        %v1123 = vand.u32 %v1122, 65535
        %v1124 = vshrl.u32 %v1122, 16
        %v1125 = vcvt.s32.f32 %v1123
        %v1126 = vcvt.s32.f32 %v1124
        %1127 = vadd.xlane.f32.xlu0 %v1125
        %v1128 = vpop.xlane.xlu0 %1127
        %1129 = vadd.xlane.f32.xlu0 %v1126
        %v1130 = vpop.xlane.xlu0 %1129
        %v1131 = vcvt.f32.s32 %v1128
        %v1132 = vcvt.f32.s32 %v1130
        %v1133 = vshll.u32 %v1132, 16
        %v1134 = vadd.s32 %v1133, %v1131
        %v1135 = vsel %vm346, %v1047, 0
        %v1136 = vand.u32 %v1135, 65535
        %v1137 = vshrl.u32 %v1135, 16
        %v1138 = vcvt.s32.f32 %v1136
        %v1139 = vcvt.s32.f32 %v1137
        %1140 = vadd.xlane.f32.xlu0 %v1138
        %v1141 = vpop.xlane.xlu0 %1140
        %1142 = vadd.xlane.f32.xlu0 %v1139
        %v1143 = vpop.xlane.xlu0 %1142
        %v1144 = vcvt.f32.s32 %v1141
        %v1145 = vcvt.f32.s32 %v1143
        %v1146 = vshll.u32 %v1145, 16
        %v1147 = vadd.s32 %v1146, %v1144
        %v1148 = vsel %vm346, %v1048, 0
        %v1149 = vand.u32 %v1148, 65535
        %v1150 = vshrl.u32 %v1148, 16
        %v1151 = vcvt.s32.f32 %v1149
        %v1152 = vcvt.s32.f32 %v1150
        %1153 = vadd.xlane.f32.xlu0 %v1151
        %v1154 = vpop.xlane.xlu0 %1153
        %1155 = vadd.xlane.f32.xlu0 %v1152
        %v1156 = vpop.xlane.xlu0 %1155
        %v1157 = vcvt.f32.s32 %v1154
        %v1158 = vcvt.f32.s32 %v1156
        %v1159 = vshll.u32 %v1158, 16
        %v1160 = vadd.s32 %v1159, %v1157
        %v1161 = vsel %vm346, %v1049, 0
        %v1162 = vand.u32 %v1161, 65535
        %v1163 = vshrl.u32 %v1161, 16
        %v1164 = vcvt.s32.f32 %v1162
        %v1165 = vcvt.s32.f32 %v1163
        %1166 = vadd.xlane.f32.xlu0 %v1164
        %v1167 = vpop.xlane.xlu0 %1166
        %1168 = vadd.xlane.f32.xlu0 %v1165
        %v1169 = vpop.xlane.xlu0 %1168
        %v1170 = vcvt.f32.s32 %v1167
        %v1171 = vcvt.f32.s32 %v1169
        %v1172 = vshll.u32 %v1171, 16
        %v1173 = vadd.s32 %v1172, %v1170
        %v1174 = vsel %vm346, %v1050, 0
        %v1175 = vand.u32 %v1174, 65535
        %v1176 = vshrl.u32 %v1174, 16
        %v1177 = vcvt.s32.f32 %v1175
        %v1178 = vcvt.s32.f32 %v1176
        %1179 = vadd.xlane.f32.xlu0 %v1177
        %v1180 = vpop.xlane.xlu0 %1179
        %1181 = vadd.xlane.f32.xlu0 %v1178
        %v1182 = vpop.xlane.xlu0 %1181
        %v1183 = vcvt.f32.s32 %v1180
        %v1184 = vcvt.f32.s32 %v1182
        %v1185 = vshll.u32 %v1184, 16
        %v1186 = vadd.s32 %v1185, %v1183
        %v1187 = vsel %vm346, %v1051, 0
        %v1188 = vand.u32 %v1187, 65535
        %v1189 = vshrl.u32 %v1187, 16
        %v1190 = vcvt.s32.f32 %v1188
        %v1191 = vcvt.s32.f32 %v1189
        %1192 = vadd.xlane.f32.xlu0 %v1190
        %v1193 = vpop.xlane.xlu0 %1192
        %1194 = vadd.xlane.f32.xlu0 %v1191
        %v1195 = vpop.xlane.xlu0 %1194
        %v1196 = vcvt.f32.s32 %v1193
        %v1197 = vcvt.f32.s32 %v1195
        %v1198 = vshll.u32 %v1197, 16
        %v1199 = vadd.s32 %v1198, %v1196
        %v1200 = vsel %vm346, %v1052, 0
        %v1201 = vand.u32 %v1200, 65535
        %v1202 = vshrl.u32 %v1200, 16
        %v1203 = vcvt.s32.f32 %v1201
        %v1204 = vcvt.s32.f32 %v1202
        %1205 = vadd.xlane.f32.xlu0 %v1203
        %v1206 = vpop.xlane.xlu0 %1205
        %1207 = vadd.xlane.f32.xlu0 %v1204
        %v1208 = vpop.xlane.xlu0 %1207
        %v1209 = vcvt.f32.s32 %v1206
        %v1210 = vcvt.f32.s32 %v1208
        %v1211 = vshll.u32 %v1210, 16
        %v1212 = vadd.s32 %v1211, %v1209
        %v1213 = vsel %vm346, %v1053, 0
        %v1214 = vand.u32 %v1213, 65535
        %v1215 = vshrl.u32 %v1213, 16
        %v1216 = vcvt.s32.f32 %v1214
        %v1217 = vcvt.s32.f32 %v1215
        %1218 = vadd.xlane.f32.xlu0 %v1216
        %v1219 = vpop.xlane.xlu0 %1218
        %1220 = vadd.xlane.f32.xlu0 %v1217
        %v1221 = vpop.xlane.xlu0 %1220
        %v1222 = vcvt.f32.s32 %v1219
        %v1223 = vcvt.f32.s32 %v1221
        %v1224 = vshll.u32 %v1223, 16
        %v1225 = vadd.s32 %v1224, %v1222
        %v1226 = vsel %vm346, %v1054, 0
        %v1227 = vand.u32 %v1226, 65535
        %v1228 = vshrl.u32 %v1226, 16
        %v1229 = vcvt.s32.f32 %v1227
        %v1230 = vcvt.s32.f32 %v1228
        %1231 = vadd.xlane.f32.xlu0 %v1229
        %v1232 = vpop.xlane.xlu0 %1231
        %1233 = vadd.xlane.f32.xlu0 %v1230
        %v1234 = vpop.xlane.xlu0 %1233
        %v1235 = vcvt.f32.s32 %v1232
        %v1236 = vcvt.f32.s32 %v1234
        %v1237 = vshll.u32 %v1236, 16
        %v1238 = vadd.s32 %v1237, %v1235
        %v1239 = vsel %vm346, %v1055, 0
        %v1240 = vand.u32 %v1239, 65535
        %v1241 = vshrl.u32 %v1239, 16
        %v1242 = vcvt.s32.f32 %v1240
        %v1243 = vcvt.s32.f32 %v1241
        %1244 = vadd.xlane.f32.xlu0 %v1242
        %v1245 = vpop.xlane.xlu0 %1244
        %1246 = vadd.xlane.f32.xlu0 %v1243
        %v1247 = vpop.xlane.xlu0 %1246
        %v1248 = vcvt.f32.s32 %v1245
        %v1249 = vcvt.f32.s32 %v1247
        %v1250 = vshll.u32 %v1249, 16
        %v1251 = vadd.s32 %v1250, %v1248
        %v1252 = vsel %vm346, %v1056, 0
        %v1253 = vand.u32 %v1252, 65535
        %v1254 = vshrl.u32 %v1252, 16
        %v1255 = vcvt.s32.f32 %v1253
        %v1256 = vcvt.s32.f32 %v1254
        %1257 = vadd.xlane.f32.xlu0 %v1255
        %v1258 = vpop.xlane.xlu0 %1257
        %1259 = vadd.xlane.f32.xlu0 %v1256
        %v1260 = vpop.xlane.xlu0 %1259
        %v1261 = vcvt.f32.s32 %v1258
        %v1262 = vcvt.f32.s32 %v1260
        %v1263 = vshll.u32 %v1262, 16
        %v1264 = vadd.s32 %v1263, %v1261
        %vm1265 = vcmp.eq.s32.totalorder %v1069, %v325
        %vm1266 = vcmp.eq.s32.totalorder %v1069, %v326
        %vm1267 = vcmp.eq.s32.totalorder %v1082, %v325
        %vm1268 = vcmp.eq.s32.totalorder %v1082, %v326
        %vm1269 = vcmp.eq.s32.totalorder %v1095, %v325
        %vm1270 = vcmp.eq.s32.totalorder %v1095, %v326
        %vm1271 = vcmp.eq.s32.totalorder %v1108, %v325
        %vm1272 = vcmp.eq.s32.totalorder %v1108, %v326
        %vm1273 = vcmp.eq.s32.totalorder %v1121, %v325
        %vm1274 = vcmp.eq.s32.totalorder %v1121, %v326
        %vm1275 = vcmp.eq.s32.totalorder %v1134, %v325
        %vm1276 = vcmp.eq.s32.totalorder %v1134, %v326
        %vm1277 = vcmp.eq.s32.totalorder %v1147, %v325
        %vm1278 = vcmp.eq.s32.totalorder %v1147, %v326
        %vm1279 = vcmp.eq.s32.totalorder %v1160, %v325
        %vm1280 = vcmp.eq.s32.totalorder %v1160, %v326
        %vm1281 = vcmp.eq.s32.totalorder %v1173, %v325
        %vm1282 = vcmp.eq.s32.totalorder %v1173, %v326
        %vm1283 = vcmp.eq.s32.totalorder %v1186, %v325
        %vm1284 = vcmp.eq.s32.totalorder %v1186, %v326
        %vm1285 = vcmp.eq.s32.totalorder %v1199, %v325
        %vm1286 = vcmp.eq.s32.totalorder %v1199, %v326
        %vm1287 = vcmp.eq.s32.totalorder %v1212, %v325
        %vm1288 = vcmp.eq.s32.totalorder %v1212, %v326
        %vm1289 = vcmp.eq.s32.totalorder %v1225, %v325
        %vm1290 = vcmp.eq.s32.totalorder %v1225, %v326
        %vm1291 = vcmp.eq.s32.totalorder %v1238, %v325
        %vm1292 = vcmp.eq.s32.totalorder %v1238, %v326
        %vm1293 = vcmp.eq.s32.totalorder %v1251, %v325
        %vm1294 = vcmp.eq.s32.totalorder %v1251, %v326
        %vm1295 = vcmp.eq.s32.totalorder %v1264, %v325
        %vm1296 = vcmp.eq.s32.totalorder %v1264, %v326
        %v1297 = vsel %vm1265, 1, 0
        %v1298 = vsel %vm1266, 1, 0
        %v1299 = vsel %vm1267, 1, 0
        %v1300 = vsel %vm1268, 1, 0
        %v1301 = vsel %vm1269, 1, 0
        %v1302 = vsel %vm1270, 1, 0
        %v1303 = vsel %vm1271, 1, 0
        %v1304 = vsel %vm1272, 1, 0
        %v1305 = vsel %vm1273, 1, 0
        %v1306 = vsel %vm1274, 1, 0
        %v1307 = vsel %vm1275, 1, 0
        %v1308 = vsel %vm1276, 1, 0
        %v1309 = vsel %vm1277, 1, 0
        %v1310 = vsel %vm1278, 1, 0
        %v1311 = vsel %vm1279, 1, 0
        %v1312 = vsel %vm1280, 1, 0
        %v1313 = vsel %vm1281, 1, 0
        %v1314 = vsel %vm1282, 1, 0
        %v1315 = vsel %vm1283, 1, 0
        %v1316 = vsel %vm1284, 1, 0
        %v1317 = vsel %vm1285, 1, 0
        %v1318 = vsel %vm1286, 1, 0
        %v1319 = vsel %vm1287, 1, 0
        %v1320 = vsel %vm1288, 1, 0
        %v1321 = vsel %vm1289, 1, 0
        %v1322 = vsel %vm1290, 1, 0
        %v1323 = vsel %vm1291, 1, 0
        %v1324 = vsel %vm1292, 1, 0
        %v1325 = vsel %vm1293, 1, 0
        %v1326 = vsel %vm1294, 1, 0
        %v1327 = vsel %vm1295, 1, 0
        %v1328 = vsel %vm1296, 1, 0
        %v1329 = vcvt.s32.f32 %v1297
        %v1330 = vcvt.s32.f32 %v1298
        %v1331 = vcvt.s32.f32 %v1299
        %v1332 = vcvt.s32.f32 %v1300
        %v1333 = vcvt.s32.f32 %v1301
        %v1334 = vcvt.s32.f32 %v1302
        %v1335 = vcvt.s32.f32 %v1303
        %v1336 = vcvt.s32.f32 %v1304
        %v1337 = vcvt.s32.f32 %v1305
        %v1338 = vcvt.s32.f32 %v1306
        %v1339 = vcvt.s32.f32 %v1307
        %v1340 = vcvt.s32.f32 %v1308
        %v1341 = vcvt.s32.f32 %v1309
        %v1342 = vcvt.s32.f32 %v1310
        %v1343 = vcvt.s32.f32 %v1311
        %v1344 = vcvt.s32.f32 %v1312
        %v1345 = vcvt.s32.f32 %v1313
        %v1346 = vcvt.s32.f32 %v1314
        %v1347 = vcvt.s32.f32 %v1315
        %v1348 = vcvt.s32.f32 %v1316
        %v1349 = vcvt.s32.f32 %v1317
        %v1350 = vcvt.s32.f32 %v1318
        %v1351 = vcvt.s32.f32 %v1319
        %v1352 = vcvt.s32.f32 %v1320
        %v1353 = vcvt.s32.f32 %v1321
        %v1354 = vcvt.s32.f32 %v1322
        %v1355 = vcvt.s32.f32 %v1323
        %v1356 = vcvt.s32.f32 %v1324
        %v1357 = vcvt.s32.f32 %v1325
        %v1358 = vcvt.s32.f32 %v1326
        %v1359 = vcvt.s32.f32 %v1327
        %v1360 = vcvt.s32.f32 %v1328
        %v1361 = vadd.f32 %v1006, %v1329
        %v1362 = vadd.f32 %v1007, %v1330
        %v1363 = vadd.f32 %v1008, %v1331
        %v1364 = vadd.f32 %v1009, %v1332
        %v1365 = vadd.f32 %v1010, %v1333
        %v1366 = vadd.f32 %v1011, %v1334
        %v1367 = vadd.f32 %v1012, %v1335
        %v1368 = vadd.f32 %v1013, %v1336
        %v1369 = vadd.f32 %v1014, %v1337
        %v1370 = vadd.f32 %v1015, %v1338
        %v1371 = vadd.f32 %v1016, %v1339
        %v1372 = vadd.f32 %v1017, %v1340
        %v1373 = vadd.f32 %v1018, %v1341
        %v1374 = vadd.f32 %v1019, %v1342
        %v1375 = vadd.f32 %v1020, %v1343
        %v1376 = vadd.f32 %v1021, %v1344
        %v1377 = vadd.f32 %v1022, %v1345
        %v1378 = vadd.f32 %v1023, %v1346
        %v1379 = vadd.f32 %v1024, %v1347
        %v1380 = vadd.f32 %v1025, %v1348
        %v1381 = vadd.f32 %v1026, %v1349
        %v1382 = vadd.f32 %v1027, %v1350
        %v1383 = vadd.f32 %v1028, %v1351
        %v1384 = vadd.f32 %v1029, %v1352
        %v1385 = vadd.f32 %v1030, %v1353
        %v1386 = vadd.f32 %v1031, %v1354
        %v1387 = vadd.f32 %v1032, %v1355
        %v1388 = vadd.f32 %v1033, %v1356
        %v1389 = vadd.f32 %v1034, %v1357
        %v1390 = vadd.f32 %v1035, %v1358
        %v1391 = vadd.f32 %v1036, %v1359
        %v1392 = vadd.f32 %v1037, %v1360
        %vm1393 = vcmp.eq.s32.totalorder %v325, 3
        %v1394 = vsel %vm1393, 1, 0
        %vm1395 = vcmp.eq.s32.totalorder %v1394, 1
        %v1396 = vsel %vm1395, %v308, 0
        %v1397 = vsel %vm1395, %v309, 0
        %v1398 = vsel %vm1395, %v310, 0
        %v1399 = vsel %vm1395, %v311, 0
        %v1400 = vsel %vm1395, %v312, 0
        %v1401 = vsel %vm1395, %v313, 0
        %v1402 = vsel %vm1395, %v314, 0
        %v1403 = vsel %vm1395, %v315, 0
        %v1404 = vsel %vm1395, %v316, 0
        %v1405 = vsel %vm1395, %v317, 0
        %v1406 = vsel %vm1395, %v318, 0
        %v1407 = vsel %vm1395, %v319, 0
        %v1408 = vsel %vm1395, %v320, 0
        %v1409 = vsel %vm1395, %v321, 0
        %v1410 = vsel %vm1395, %v322, 0
        %v1411 = vsel %vm1395, %v323, 0
        %v1412 = vsel %vm346, %v1396, 0
        %v1413 = vand.u32 %v1412, 65535
        %v1414 = vshrl.u32 %v1412, 16
        %v1415 = vcvt.s32.f32 %v1413
        %v1416 = vcvt.s32.f32 %v1414
        %1417 = vadd.xlane.f32.xlu0 %v1415
        %v1418 = vpop.xlane.xlu0 %1417
        %1419 = vadd.xlane.f32.xlu0 %v1416
        %v1420 = vpop.xlane.xlu0 %1419
        %v1421 = vcvt.f32.s32 %v1418
        %v1422 = vcvt.f32.s32 %v1420
        %v1423 = vshll.u32 %v1422, 16
        %v1424 = vadd.s32 %v1423, %v1421
        %v1425 = vsel %vm346, %v1397, 0
        %v1426 = vand.u32 %v1425, 65535
        %v1427 = vshrl.u32 %v1425, 16
        %v1428 = vcvt.s32.f32 %v1426
        %v1429 = vcvt.s32.f32 %v1427
        %1430 = vadd.xlane.f32.xlu0 %v1428
        %v1431 = vpop.xlane.xlu0 %1430
        %1432 = vadd.xlane.f32.xlu0 %v1429
        %v1433 = vpop.xlane.xlu0 %1432
        %v1434 = vcvt.f32.s32 %v1431
        %v1435 = vcvt.f32.s32 %v1433
        %v1436 = vshll.u32 %v1435, 16
        %v1437 = vadd.s32 %v1436, %v1434
        %v1438 = vsel %vm346, %v1398, 0
        %v1439 = vand.u32 %v1438, 65535
        %v1440 = vshrl.u32 %v1438, 16
        %v1441 = vcvt.s32.f32 %v1439
        %v1442 = vcvt.s32.f32 %v1440
        %1443 = vadd.xlane.f32.xlu0 %v1441
        %v1444 = vpop.xlane.xlu0 %1443
        %1445 = vadd.xlane.f32.xlu0 %v1442
        %v1446 = vpop.xlane.xlu0 %1445
        %v1447 = vcvt.f32.s32 %v1444
        %v1448 = vcvt.f32.s32 %v1446
        %v1449 = vshll.u32 %v1448, 16
        %v1450 = vadd.s32 %v1449, %v1447
        %v1451 = vsel %vm346, %v1399, 0
        %v1452 = vand.u32 %v1451, 65535
        %v1453 = vshrl.u32 %v1451, 16
        %v1454 = vcvt.s32.f32 %v1452
        %v1455 = vcvt.s32.f32 %v1453
        %1456 = vadd.xlane.f32.xlu0 %v1454
        %v1457 = vpop.xlane.xlu0 %1456
        %1458 = vadd.xlane.f32.xlu0 %v1455
        %v1459 = vpop.xlane.xlu0 %1458
        %v1460 = vcvt.f32.s32 %v1457
        %v1461 = vcvt.f32.s32 %v1459
        %v1462 = vshll.u32 %v1461, 16
        %v1463 = vadd.s32 %v1462, %v1460
        %v1464 = vsel %vm346, %v1400, 0
        %v1465 = vand.u32 %v1464, 65535
        %v1466 = vshrl.u32 %v1464, 16
        %v1467 = vcvt.s32.f32 %v1465
        %v1468 = vcvt.s32.f32 %v1466
        %1469 = vadd.xlane.f32.xlu0 %v1467
        %v1470 = vpop.xlane.xlu0 %1469
        %1471 = vadd.xlane.f32.xlu0 %v1468
        %v1472 = vpop.xlane.xlu0 %1471
        %v1473 = vcvt.f32.s32 %v1470
        %v1474 = vcvt.f32.s32 %v1472
        %v1475 = vshll.u32 %v1474, 16
        %v1476 = vadd.s32 %v1475, %v1473
        %v1477 = vsel %vm346, %v1401, 0
        %v1478 = vand.u32 %v1477, 65535
        %v1479 = vshrl.u32 %v1477, 16
        %v1480 = vcvt.s32.f32 %v1478
        %v1481 = vcvt.s32.f32 %v1479
        %1482 = vadd.xlane.f32.xlu0 %v1480
        %v1483 = vpop.xlane.xlu0 %1482
        %1484 = vadd.xlane.f32.xlu0 %v1481
        %v1485 = vpop.xlane.xlu0 %1484
        %v1486 = vcvt.f32.s32 %v1483
        %v1487 = vcvt.f32.s32 %v1485
        %v1488 = vshll.u32 %v1487, 16
        %v1489 = vadd.s32 %v1488, %v1486
        %v1490 = vsel %vm346, %v1402, 0
        %v1491 = vand.u32 %v1490, 65535
        %v1492 = vshrl.u32 %v1490, 16
        %v1493 = vcvt.s32.f32 %v1491
        %v1494 = vcvt.s32.f32 %v1492
        %1495 = vadd.xlane.f32.xlu0 %v1493
        %v1496 = vpop.xlane.xlu0 %1495
        %1497 = vadd.xlane.f32.xlu0 %v1494
        %v1498 = vpop.xlane.xlu0 %1497
        %v1499 = vcvt.f32.s32 %v1496
        %v1500 = vcvt.f32.s32 %v1498
        %v1501 = vshll.u32 %v1500, 16
        %v1502 = vadd.s32 %v1501, %v1499
        %v1503 = vsel %vm346, %v1403, 0
        %v1504 = vand.u32 %v1503, 65535
        %v1505 = vshrl.u32 %v1503, 16
        %v1506 = vcvt.s32.f32 %v1504
        %v1507 = vcvt.s32.f32 %v1505
        %1508 = vadd.xlane.f32.xlu0 %v1506
        %v1509 = vpop.xlane.xlu0 %1508
        %1510 = vadd.xlane.f32.xlu0 %v1507
        %v1511 = vpop.xlane.xlu0 %1510
        %v1512 = vcvt.f32.s32 %v1509
        %v1513 = vcvt.f32.s32 %v1511
        %v1514 = vshll.u32 %v1513, 16
        %v1515 = vadd.s32 %v1514, %v1512
        %v1516 = vsel %vm346, %v1404, 0
        %v1517 = vand.u32 %v1516, 65535
        %v1518 = vshrl.u32 %v1516, 16
        %v1519 = vcvt.s32.f32 %v1517
        %v1520 = vcvt.s32.f32 %v1518
        %1521 = vadd.xlane.f32.xlu0 %v1519
        %v1522 = vpop.xlane.xlu0 %1521
        %1523 = vadd.xlane.f32.xlu0 %v1520
        %v1524 = vpop.xlane.xlu0 %1523
        %v1525 = vcvt.f32.s32 %v1522
        %v1526 = vcvt.f32.s32 %v1524
        %v1527 = vshll.u32 %v1526, 16
        %v1528 = vadd.s32 %v1527, %v1525
        %v1529 = vsel %vm346, %v1405, 0
        %v1530 = vand.u32 %v1529, 65535
        %v1531 = vshrl.u32 %v1529, 16
        %v1532 = vcvt.s32.f32 %v1530
        %v1533 = vcvt.s32.f32 %v1531
        %1534 = vadd.xlane.f32.xlu0 %v1532
        %v1535 = vpop.xlane.xlu0 %1534
        %1536 = vadd.xlane.f32.xlu0 %v1533
        %v1537 = vpop.xlane.xlu0 %1536
        %v1538 = vcvt.f32.s32 %v1535
        %v1539 = vcvt.f32.s32 %v1537
        %v1540 = vshll.u32 %v1539, 16
        %v1541 = vadd.s32 %v1540, %v1538
        %v1542 = vsel %vm346, %v1406, 0
        %v1543 = vand.u32 %v1542, 65535
        %v1544 = vshrl.u32 %v1542, 16
        %v1545 = vcvt.s32.f32 %v1543
        %v1546 = vcvt.s32.f32 %v1544
        %1547 = vadd.xlane.f32.xlu0 %v1545
        %v1548 = vpop.xlane.xlu0 %1547
        %1549 = vadd.xlane.f32.xlu0 %v1546
        %v1550 = vpop.xlane.xlu0 %1549
        %v1551 = vcvt.f32.s32 %v1548
        %v1552 = vcvt.f32.s32 %v1550
        %v1553 = vshll.u32 %v1552, 16
        %v1554 = vadd.s32 %v1553, %v1551
        %v1555 = vsel %vm346, %v1407, 0
        %v1556 = vand.u32 %v1555, 65535
        %v1557 = vshrl.u32 %v1555, 16
        %v1558 = vcvt.s32.f32 %v1556
        %v1559 = vcvt.s32.f32 %v1557
        %1560 = vadd.xlane.f32.xlu0 %v1558
        %v1561 = vpop.xlane.xlu0 %1560
        %1562 = vadd.xlane.f32.xlu0 %v1559
        %v1563 = vpop.xlane.xlu0 %1562
        %v1564 = vcvt.f32.s32 %v1561
        %v1565 = vcvt.f32.s32 %v1563
        %v1566 = vshll.u32 %v1565, 16
        %v1567 = vadd.s32 %v1566, %v1564
        %v1568 = vsel %vm346, %v1408, 0
        %v1569 = vand.u32 %v1568, 65535
        %v1570 = vshrl.u32 %v1568, 16
        %v1571 = vcvt.s32.f32 %v1569
        %v1572 = vcvt.s32.f32 %v1570
        %1573 = vadd.xlane.f32.xlu0 %v1571
        %v1574 = vpop.xlane.xlu0 %1573
        %1575 = vadd.xlane.f32.xlu0 %v1572
        %v1576 = vpop.xlane.xlu0 %1575
        %v1577 = vcvt.f32.s32 %v1574
        %v1578 = vcvt.f32.s32 %v1576
        %v1579 = vshll.u32 %v1578, 16
        %v1580 = vadd.s32 %v1579, %v1577
        %v1581 = vsel %vm346, %v1409, 0
        %v1582 = vand.u32 %v1581, 65535
        %v1583 = vshrl.u32 %v1581, 16
        %v1584 = vcvt.s32.f32 %v1582
        %v1585 = vcvt.s32.f32 %v1583
        %1586 = vadd.xlane.f32.xlu0 %v1584
        %v1587 = vpop.xlane.xlu0 %1586
        %1588 = vadd.xlane.f32.xlu0 %v1585
        %v1589 = vpop.xlane.xlu0 %1588
        %v1590 = vcvt.f32.s32 %v1587
        %v1591 = vcvt.f32.s32 %v1589
        %v1592 = vshll.u32 %v1591, 16
        %v1593 = vadd.s32 %v1592, %v1590
        %v1594 = vsel %vm346, %v1410, 0
        %v1595 = vand.u32 %v1594, 65535
        %v1596 = vshrl.u32 %v1594, 16
        %v1597 = vcvt.s32.f32 %v1595
        %v1598 = vcvt.s32.f32 %v1596
        %1599 = vadd.xlane.f32.xlu0 %v1597
        %v1600 = vpop.xlane.xlu0 %1599
        %1601 = vadd.xlane.f32.xlu0 %v1598
        %v1602 = vpop.xlane.xlu0 %1601
        %v1603 = vcvt.f32.s32 %v1600
        %v1604 = vcvt.f32.s32 %v1602
        %v1605 = vshll.u32 %v1604, 16
        %v1606 = vadd.s32 %v1605, %v1603
        %v1607 = vsel %vm346, %v1411, 0
        %v1608 = vand.u32 %v1607, 65535
        %v1609 = vshrl.u32 %v1607, 16
        %v1610 = vcvt.s32.f32 %v1608
        %v1611 = vcvt.s32.f32 %v1609
        %1612 = vadd.xlane.f32.xlu0 %v1610
        %v1613 = vpop.xlane.xlu0 %1612
        %1614 = vadd.xlane.f32.xlu0 %v1611
        %v1615 = vpop.xlane.xlu0 %1614
        %v1616 = vcvt.f32.s32 %v1613
        %v1617 = vcvt.f32.s32 %v1615
        %v1618 = vshll.u32 %v1617, 16
        %v1619 = vadd.s32 %v1618, %v1616
        %vm1620 = vcmp.eq.s32.totalorder %v1424, %v325
        %vm1621 = vcmp.eq.s32.totalorder %v1424, %v326
        %vm1622 = vcmp.eq.s32.totalorder %v1437, %v325
        %vm1623 = vcmp.eq.s32.totalorder %v1437, %v326
        %vm1624 = vcmp.eq.s32.totalorder %v1450, %v325
        %vm1625 = vcmp.eq.s32.totalorder %v1450, %v326
        %vm1626 = vcmp.eq.s32.totalorder %v1463, %v325
        %vm1627 = vcmp.eq.s32.totalorder %v1463, %v326
        %vm1628 = vcmp.eq.s32.totalorder %v1476, %v325
        %vm1629 = vcmp.eq.s32.totalorder %v1476, %v326
        %vm1630 = vcmp.eq.s32.totalorder %v1489, %v325
        %vm1631 = vcmp.eq.s32.totalorder %v1489, %v326
        %vm1632 = vcmp.eq.s32.totalorder %v1502, %v325
        %vm1633 = vcmp.eq.s32.totalorder %v1502, %v326
        %vm1634 = vcmp.eq.s32.totalorder %v1515, %v325
        %vm1635 = vcmp.eq.s32.totalorder %v1515, %v326
        %vm1636 = vcmp.eq.s32.totalorder %v1528, %v325
        %vm1637 = vcmp.eq.s32.totalorder %v1528, %v326
        %vm1638 = vcmp.eq.s32.totalorder %v1541, %v325
        %vm1639 = vcmp.eq.s32.totalorder %v1541, %v326
        %vm1640 = vcmp.eq.s32.totalorder %v1554, %v325
        %vm1641 = vcmp.eq.s32.totalorder %v1554, %v326
        %vm1642 = vcmp.eq.s32.totalorder %v1567, %v325
        %vm1643 = vcmp.eq.s32.totalorder %v1567, %v326
        %vm1644 = vcmp.eq.s32.totalorder %v1580, %v325
        %vm1645 = vcmp.eq.s32.totalorder %v1580, %v326
        %vm1646 = vcmp.eq.s32.totalorder %v1593, %v325
        %vm1647 = vcmp.eq.s32.totalorder %v1593, %v326
        %vm1648 = vcmp.eq.s32.totalorder %v1606, %v325
        %vm1649 = vcmp.eq.s32.totalorder %v1606, %v326
        %vm1650 = vcmp.eq.s32.totalorder %v1619, %v325
        %vm1651 = vcmp.eq.s32.totalorder %v1619, %v326
        %v1652 = vsel %vm1620, 1, 0
        %v1653 = vsel %vm1621, 1, 0
        %v1654 = vsel %vm1622, 1, 0
        %v1655 = vsel %vm1623, 1, 0
        %v1656 = vsel %vm1624, 1, 0
        %v1657 = vsel %vm1625, 1, 0
        %v1658 = vsel %vm1626, 1, 0
        %v1659 = vsel %vm1627, 1, 0
        %v1660 = vsel %vm1628, 1, 0
        %v1661 = vsel %vm1629, 1, 0
        %v1662 = vsel %vm1630, 1, 0
        %v1663 = vsel %vm1631, 1, 0
        %v1664 = vsel %vm1632, 1, 0
        %v1665 = vsel %vm1633, 1, 0
        %v1666 = vsel %vm1634, 1, 0
        %v1667 = vsel %vm1635, 1, 0
        %v1668 = vsel %vm1636, 1, 0
        %v1669 = vsel %vm1637, 1, 0
        %v1670 = vsel %vm1638, 1, 0
        %v1671 = vsel %vm1639, 1, 0
        %v1672 = vsel %vm1640, 1, 0
        %v1673 = vsel %vm1641, 1, 0
        %v1674 = vsel %vm1642, 1, 0
        %v1675 = vsel %vm1643, 1, 0
        %v1676 = vsel %vm1644, 1, 0
        %v1677 = vsel %vm1645, 1, 0
        %v1678 = vsel %vm1646, 1, 0
        %v1679 = vsel %vm1647, 1, 0
        %v1680 = vsel %vm1648, 1, 0
        %v1681 = vsel %vm1649, 1, 0
        %v1682 = vsel %vm1650, 1, 0
        %v1683 = vsel %vm1651, 1, 0
        %v1684 = vcvt.s32.f32 %v1652
        %v1685 = vcvt.s32.f32 %v1653
        %v1686 = vcvt.s32.f32 %v1654
        %v1687 = vcvt.s32.f32 %v1655
        %v1688 = vcvt.s32.f32 %v1656
        %v1689 = vcvt.s32.f32 %v1657
        %v1690 = vcvt.s32.f32 %v1658
        %v1691 = vcvt.s32.f32 %v1659
        %v1692 = vcvt.s32.f32 %v1660
        %v1693 = vcvt.s32.f32 %v1661
        %v1694 = vcvt.s32.f32 %v1662
        %v1695 = vcvt.s32.f32 %v1663
        %v1696 = vcvt.s32.f32 %v1664
        %v1697 = vcvt.s32.f32 %v1665
        %v1698 = vcvt.s32.f32 %v1666
        %v1699 = vcvt.s32.f32 %v1667
        %v1700 = vcvt.s32.f32 %v1668
        %v1701 = vcvt.s32.f32 %v1669
        %v1702 = vcvt.s32.f32 %v1670
        %v1703 = vcvt.s32.f32 %v1671
        %v1704 = vcvt.s32.f32 %v1672
        %v1705 = vcvt.s32.f32 %v1673
        %v1706 = vcvt.s32.f32 %v1674
        %v1707 = vcvt.s32.f32 %v1675
        %v1708 = vcvt.s32.f32 %v1676
        %v1709 = vcvt.s32.f32 %v1677
        %v1710 = vcvt.s32.f32 %v1678
        %v1711 = vcvt.s32.f32 %v1679
        %v1712 = vcvt.s32.f32 %v1680
        %v1713 = vcvt.s32.f32 %v1681
        %v1714 = vcvt.s32.f32 %v1682
        %v1715 = vcvt.s32.f32 %v1683
        %v1716 = vadd.f32 %v1361, %v1684
        %v1717 = vadd.f32 %v1362, %v1685
        %v1718 = vadd.f32 %v1363, %v1686
        %v1719 = vadd.f32 %v1364, %v1687
        %v1720 = vadd.f32 %v1365, %v1688
        %v1721 = vadd.f32 %v1366, %v1689
        %v1722 = vadd.f32 %v1367, %v1690
        %v1723 = vadd.f32 %v1368, %v1691
        %v1724 = vadd.f32 %v1369, %v1692
        %v1725 = vadd.f32 %v1370, %v1693
        %v1726 = vadd.f32 %v1371, %v1694
        %v1727 = vadd.f32 %v1372, %v1695
        %v1728 = vadd.f32 %v1373, %v1696
        %v1729 = vadd.f32 %v1374, %v1697
        %v1730 = vadd.f32 %v1375, %v1698
        %v1731 = vadd.f32 %v1376, %v1699
        %v1732 = vadd.f32 %v1377, %v1700
        %v1733 = vadd.f32 %v1378, %v1701
        %v1734 = vadd.f32 %v1379, %v1702
        %v1735 = vadd.f32 %v1380, %v1703
        %v1736 = vadd.f32 %v1381, %v1704
        %v1737 = vadd.f32 %v1382, %v1705
        %v1738 = vadd.f32 %v1383, %v1706
        %v1739 = vadd.f32 %v1384, %v1707
        %v1740 = vadd.f32 %v1385, %v1708
        %v1741 = vadd.f32 %v1386, %v1709
        %v1742 = vadd.f32 %v1387, %v1710
        %v1743 = vadd.f32 %v1388, %v1711
        %v1744 = vadd.f32 %v1389, %v1712
        %v1745 = vadd.f32 %v1390, %v1713
        %v1746 = vadd.f32 %v1391, %v1714
        %v1747 = vadd.f32 %v1392, %v1715
        %vm1748 = vcmp.eq.s32.totalorder %v325, 4
        %v1749 = vsel %vm1748, 1, 0
        %vm1750 = vcmp.eq.s32.totalorder %v1749, 1
        %v1751 = vsel %vm1750, %v308, 0
        %v1752 = vsel %vm1750, %v309, 0
        %v1753 = vsel %vm1750, %v310, 0
        %v1754 = vsel %vm1750, %v311, 0
        %v1755 = vsel %vm1750, %v312, 0
        %v1756 = vsel %vm1750, %v313, 0
        %v1757 = vsel %vm1750, %v314, 0
        %v1758 = vsel %vm1750, %v315, 0
        %v1759 = vsel %vm1750, %v316, 0
        %v1760 = vsel %vm1750, %v317, 0
        %v1761 = vsel %vm1750, %v318, 0
        %v1762 = vsel %vm1750, %v319, 0
        %v1763 = vsel %vm1750, %v320, 0
        %v1764 = vsel %vm1750, %v321, 0
        %v1765 = vsel %vm1750, %v322, 0
        %v1766 = vsel %vm1750, %v323, 0
        %v1767 = vsel %vm346, %v1751, 0
        %v1768 = vand.u32 %v1767, 65535
        %v1769 = vshrl.u32 %v1767, 16
        %v1770 = vcvt.s32.f32 %v1768
        %v1771 = vcvt.s32.f32 %v1769
        %1772 = vadd.xlane.f32.xlu0 %v1770
        %v1773 = vpop.xlane.xlu0 %1772
        %1774 = vadd.xlane.f32.xlu0 %v1771
        %v1775 = vpop.xlane.xlu0 %1774
        %v1776 = vcvt.f32.s32 %v1773
        %v1777 = vcvt.f32.s32 %v1775
        %v1778 = vshll.u32 %v1777, 16
        %v1779 = vadd.s32 %v1778, %v1776
        %v1780 = vsel %vm346, %v1752, 0
        %v1781 = vand.u32 %v1780, 65535
        %v1782 = vshrl.u32 %v1780, 16
        %v1783 = vcvt.s32.f32 %v1781
        %v1784 = vcvt.s32.f32 %v1782
        %1785 = vadd.xlane.f32.xlu0 %v1783
        %v1786 = vpop.xlane.xlu0 %1785
        %1787 = vadd.xlane.f32.xlu0 %v1784
        %v1788 = vpop.xlane.xlu0 %1787
        %v1789 = vcvt.f32.s32 %v1786
        %v1790 = vcvt.f32.s32 %v1788
        %v1791 = vshll.u32 %v1790, 16
        %v1792 = vadd.s32 %v1791, %v1789
        %v1793 = vsel %vm346, %v1753, 0
        %v1794 = vand.u32 %v1793, 65535
        %v1795 = vshrl.u32 %v1793, 16
        %v1796 = vcvt.s32.f32 %v1794
        %v1797 = vcvt.s32.f32 %v1795
        %1798 = vadd.xlane.f32.xlu0 %v1796
        %v1799 = vpop.xlane.xlu0 %1798
        %1800 = vadd.xlane.f32.xlu0 %v1797
        %v1801 = vpop.xlane.xlu0 %1800
        %v1802 = vcvt.f32.s32 %v1799
        %v1803 = vcvt.f32.s32 %v1801
        %v1804 = vshll.u32 %v1803, 16
        %v1805 = vadd.s32 %v1804, %v1802
        %v1806 = vsel %vm346, %v1754, 0
        %v1807 = vand.u32 %v1806, 65535
        %v1808 = vshrl.u32 %v1806, 16
        %v1809 = vcvt.s32.f32 %v1807
        %v1810 = vcvt.s32.f32 %v1808
        %1811 = vadd.xlane.f32.xlu0 %v1809
        %v1812 = vpop.xlane.xlu0 %1811
        %1813 = vadd.xlane.f32.xlu0 %v1810
        %v1814 = vpop.xlane.xlu0 %1813
        %v1815 = vcvt.f32.s32 %v1812
        %v1816 = vcvt.f32.s32 %v1814
        %v1817 = vshll.u32 %v1816, 16
        %v1818 = vadd.s32 %v1817, %v1815
        %v1819 = vsel %vm346, %v1755, 0
        %v1820 = vand.u32 %v1819, 65535
        %v1821 = vshrl.u32 %v1819, 16
        %v1822 = vcvt.s32.f32 %v1820
        %v1823 = vcvt.s32.f32 %v1821
        %1824 = vadd.xlane.f32.xlu0 %v1822
        %v1825 = vpop.xlane.xlu0 %1824
        %1826 = vadd.xlane.f32.xlu0 %v1823
        %v1827 = vpop.xlane.xlu0 %1826
        %v1828 = vcvt.f32.s32 %v1825
        %v1829 = vcvt.f32.s32 %v1827
        %v1830 = vshll.u32 %v1829, 16
        %v1831 = vadd.s32 %v1830, %v1828
        %v1832 = vsel %vm346, %v1756, 0
        %v1833 = vand.u32 %v1832, 65535
        %v1834 = vshrl.u32 %v1832, 16
        %v1835 = vcvt.s32.f32 %v1833
        %v1836 = vcvt.s32.f32 %v1834
        %1837 = vadd.xlane.f32.xlu0 %v1835
        %v1838 = vpop.xlane.xlu0 %1837
        %1839 = vadd.xlane.f32.xlu0 %v1836
        %v1840 = vpop.xlane.xlu0 %1839
        %v1841 = vcvt.f32.s32 %v1838
        %v1842 = vcvt.f32.s32 %v1840
        %v1843 = vshll.u32 %v1842, 16
        %v1844 = vadd.s32 %v1843, %v1841
        %v1845 = vsel %vm346, %v1757, 0
        %v1846 = vand.u32 %v1845, 65535
        %v1847 = vshrl.u32 %v1845, 16
        %v1848 = vcvt.s32.f32 %v1846
        %v1849 = vcvt.s32.f32 %v1847
        %1850 = vadd.xlane.f32.xlu0 %v1848
        %v1851 = vpop.xlane.xlu0 %1850
        %1852 = vadd.xlane.f32.xlu0 %v1849
        %v1853 = vpop.xlane.xlu0 %1852
        %v1854 = vcvt.f32.s32 %v1851
        %v1855 = vcvt.f32.s32 %v1853
        %v1856 = vshll.u32 %v1855, 16
        %v1857 = vadd.s32 %v1856, %v1854
        %v1858 = vsel %vm346, %v1758, 0
        %v1859 = vand.u32 %v1858, 65535
        %v1860 = vshrl.u32 %v1858, 16
        %v1861 = vcvt.s32.f32 %v1859
        %v1862 = vcvt.s32.f32 %v1860
        %1863 = vadd.xlane.f32.xlu0 %v1861
        %v1864 = vpop.xlane.xlu0 %1863
        %1865 = vadd.xlane.f32.xlu0 %v1862
        %v1866 = vpop.xlane.xlu0 %1865
        %v1867 = vcvt.f32.s32 %v1864
        %v1868 = vcvt.f32.s32 %v1866
        %v1869 = vshll.u32 %v1868, 16
        %v1870 = vadd.s32 %v1869, %v1867
        %v1871 = vsel %vm346, %v1759, 0
        %v1872 = vand.u32 %v1871, 65535
        %v1873 = vshrl.u32 %v1871, 16
        %v1874 = vcvt.s32.f32 %v1872
        %v1875 = vcvt.s32.f32 %v1873
        %1876 = vadd.xlane.f32.xlu0 %v1874
        %v1877 = vpop.xlane.xlu0 %1876
        %1878 = vadd.xlane.f32.xlu0 %v1875
        %v1879 = vpop.xlane.xlu0 %1878
        %v1880 = vcvt.f32.s32 %v1877
        %v1881 = vcvt.f32.s32 %v1879
        %v1882 = vshll.u32 %v1881, 16
        %v1883 = vadd.s32 %v1882, %v1880
        %v1884 = vsel %vm346, %v1760, 0
        %v1885 = vand.u32 %v1884, 65535
        %v1886 = vshrl.u32 %v1884, 16
        %v1887 = vcvt.s32.f32 %v1885
        %v1888 = vcvt.s32.f32 %v1886
        %1889 = vadd.xlane.f32.xlu0 %v1887
        %v1890 = vpop.xlane.xlu0 %1889
        %1891 = vadd.xlane.f32.xlu0 %v1888
        %v1892 = vpop.xlane.xlu0 %1891
        %v1893 = vcvt.f32.s32 %v1890
        %v1894 = vcvt.f32.s32 %v1892
        %v1895 = vshll.u32 %v1894, 16
        %v1896 = vadd.s32 %v1895, %v1893
        %v1897 = vsel %vm346, %v1761, 0
        %v1898 = vand.u32 %v1897, 65535
        %v1899 = vshrl.u32 %v1897, 16
        %v1900 = vcvt.s32.f32 %v1898
        %v1901 = vcvt.s32.f32 %v1899
        %1902 = vadd.xlane.f32.xlu0 %v1900
        %v1903 = vpop.xlane.xlu0 %1902
        %1904 = vadd.xlane.f32.xlu0 %v1901
        %v1905 = vpop.xlane.xlu0 %1904
        %v1906 = vcvt.f32.s32 %v1903
        %v1907 = vcvt.f32.s32 %v1905
        %v1908 = vshll.u32 %v1907, 16
        %v1909 = vadd.s32 %v1908, %v1906
        %v1910 = vsel %vm346, %v1762, 0
        %v1911 = vand.u32 %v1910, 65535
        %v1912 = vshrl.u32 %v1910, 16
        %v1913 = vcvt.s32.f32 %v1911
        %v1914 = vcvt.s32.f32 %v1912
        %1915 = vadd.xlane.f32.xlu0 %v1913
        %v1916 = vpop.xlane.xlu0 %1915
        %1917 = vadd.xlane.f32.xlu0 %v1914
        %v1918 = vpop.xlane.xlu0 %1917
        %v1919 = vcvt.f32.s32 %v1916
        %v1920 = vcvt.f32.s32 %v1918
        %v1921 = vshll.u32 %v1920, 16
        %v1922 = vadd.s32 %v1921, %v1919
        %v1923 = vsel %vm346, %v1763, 0
        %v1924 = vand.u32 %v1923, 65535
        %v1925 = vshrl.u32 %v1923, 16
        %v1926 = vcvt.s32.f32 %v1924
        %v1927 = vcvt.s32.f32 %v1925
        %1928 = vadd.xlane.f32.xlu0 %v1926
        %v1929 = vpop.xlane.xlu0 %1928
        %1930 = vadd.xlane.f32.xlu0 %v1927
        %v1931 = vpop.xlane.xlu0 %1930
        %v1932 = vcvt.f32.s32 %v1929
        %v1933 = vcvt.f32.s32 %v1931
        %v1934 = vshll.u32 %v1933, 16
        %v1935 = vadd.s32 %v1934, %v1932
        %v1936 = vsel %vm346, %v1764, 0
        %v1937 = vand.u32 %v1936, 65535
        %v1938 = vshrl.u32 %v1936, 16
        %v1939 = vcvt.s32.f32 %v1937
        %v1940 = vcvt.s32.f32 %v1938
        %1941 = vadd.xlane.f32.xlu0 %v1939
        %v1942 = vpop.xlane.xlu0 %1941
        %1943 = vadd.xlane.f32.xlu0 %v1940
        %v1944 = vpop.xlane.xlu0 %1943
        %v1945 = vcvt.f32.s32 %v1942
        %v1946 = vcvt.f32.s32 %v1944
        %v1947 = vshll.u32 %v1946, 16
        %v1948 = vadd.s32 %v1947, %v1945
        %v1949 = vsel %vm346, %v1765, 0
        %v1950 = vand.u32 %v1949, 65535
        %v1951 = vshrl.u32 %v1949, 16
        %v1952 = vcvt.s32.f32 %v1950
        %v1953 = vcvt.s32.f32 %v1951
        %1954 = vadd.xlane.f32.xlu0 %v1952
        %v1955 = vpop.xlane.xlu0 %1954
        %1956 = vadd.xlane.f32.xlu0 %v1953
        %v1957 = vpop.xlane.xlu0 %1956
        %v1958 = vcvt.f32.s32 %v1955
        %v1959 = vcvt.f32.s32 %v1957
        %v1960 = vshll.u32 %v1959, 16
        %v1961 = vadd.s32 %v1960, %v1958
        %v1962 = vsel %vm346, %v1766, 0
        %v1963 = vand.u32 %v1962, 65535
        %v1964 = vshrl.u32 %v1962, 16
        %v1965 = vcvt.s32.f32 %v1963
        %v1966 = vcvt.s32.f32 %v1964
        %1967 = vadd.xlane.f32.xlu0 %v1965
        %v1968 = vpop.xlane.xlu0 %1967
        %1969 = vadd.xlane.f32.xlu0 %v1966
        %v1970 = vpop.xlane.xlu0 %1969
        %v1971 = vcvt.f32.s32 %v1968
        %v1972 = vcvt.f32.s32 %v1970
        %v1973 = vshll.u32 %v1972, 16
        %v1974 = vadd.s32 %v1973, %v1971
        %vm1975 = vcmp.eq.s32.totalorder %v1779, %v325
        %vm1976 = vcmp.eq.s32.totalorder %v1779, %v326
        %vm1977 = vcmp.eq.s32.totalorder %v1792, %v325
        %vm1978 = vcmp.eq.s32.totalorder %v1792, %v326
        %vm1979 = vcmp.eq.s32.totalorder %v1805, %v325
        %vm1980 = vcmp.eq.s32.totalorder %v1805, %v326
        %vm1981 = vcmp.eq.s32.totalorder %v1818, %v325
        %vm1982 = vcmp.eq.s32.totalorder %v1818, %v326
        %vm1983 = vcmp.eq.s32.totalorder %v1831, %v325
        %vm1984 = vcmp.eq.s32.totalorder %v1831, %v326
        %vm1985 = vcmp.eq.s32.totalorder %v1844, %v325
        %vm1986 = vcmp.eq.s32.totalorder %v1844, %v326
        %vm1987 = vcmp.eq.s32.totalorder %v1857, %v325
        %vm1988 = vcmp.eq.s32.totalorder %v1857, %v326
        %vm1989 = vcmp.eq.s32.totalorder %v1870, %v325
        %vm1990 = vcmp.eq.s32.totalorder %v1870, %v326
        %vm1991 = vcmp.eq.s32.totalorder %v1883, %v325
        %vm1992 = vcmp.eq.s32.totalorder %v1883, %v326
        %vm1993 = vcmp.eq.s32.totalorder %v1896, %v325
        %vm1994 = vcmp.eq.s32.totalorder %v1896, %v326
        %vm1995 = vcmp.eq.s32.totalorder %v1909, %v325
        %vm1996 = vcmp.eq.s32.totalorder %v1909, %v326
        %vm1997 = vcmp.eq.s32.totalorder %v1922, %v325
        %vm1998 = vcmp.eq.s32.totalorder %v1922, %v326
        %vm1999 = vcmp.eq.s32.totalorder %v1935, %v325
        %vm2000 = vcmp.eq.s32.totalorder %v1935, %v326
        %vm2001 = vcmp.eq.s32.totalorder %v1948, %v325
        %vm2002 = vcmp.eq.s32.totalorder %v1948, %v326
        %vm2003 = vcmp.eq.s32.totalorder %v1961, %v325
        %vm2004 = vcmp.eq.s32.totalorder %v1961, %v326
        %vm2005 = vcmp.eq.s32.totalorder %v1974, %v325
        %vm2006 = vcmp.eq.s32.totalorder %v1974, %v326
        %v2007 = vsel %vm1975, 1, 0
        %v2008 = vsel %vm1976, 1, 0
        %v2009 = vsel %vm1977, 1, 0
        %v2010 = vsel %vm1978, 1, 0
        %v2011 = vsel %vm1979, 1, 0
        %v2012 = vsel %vm1980, 1, 0
        %v2013 = vsel %vm1981, 1, 0
        %v2014 = vsel %vm1982, 1, 0
        %v2015 = vsel %vm1983, 1, 0
        %v2016 = vsel %vm1984, 1, 0
        %v2017 = vsel %vm1985, 1, 0
        %v2018 = vsel %vm1986, 1, 0
        %v2019 = vsel %vm1987, 1, 0
        %v2020 = vsel %vm1988, 1, 0
        %v2021 = vsel %vm1989, 1, 0
        %v2022 = vsel %vm1990, 1, 0
        %v2023 = vsel %vm1991, 1, 0
        %v2024 = vsel %vm1992, 1, 0
        %v2025 = vsel %vm1993, 1, 0
        %v2026 = vsel %vm1994, 1, 0
        %v2027 = vsel %vm1995, 1, 0
        %v2028 = vsel %vm1996, 1, 0
        %v2029 = vsel %vm1997, 1, 0
        %v2030 = vsel %vm1998, 1, 0
        %v2031 = vsel %vm1999, 1, 0
        %v2032 = vsel %vm2000, 1, 0
        %v2033 = vsel %vm2001, 1, 0
        %v2034 = vsel %vm2002, 1, 0
        %v2035 = vsel %vm2003, 1, 0
        %v2036 = vsel %vm2004, 1, 0
        %v2037 = vsel %vm2005, 1, 0
        %v2038 = vsel %vm2006, 1, 0
        %v2039 = vcvt.s32.f32 %v2007
        %v2040 = vcvt.s32.f32 %v2008
        %v2041 = vcvt.s32.f32 %v2009
        %v2042 = vcvt.s32.f32 %v2010
        %v2043 = vcvt.s32.f32 %v2011
        %v2044 = vcvt.s32.f32 %v2012
        %v2045 = vcvt.s32.f32 %v2013
        %v2046 = vcvt.s32.f32 %v2014
        %v2047 = vcvt.s32.f32 %v2015
        %v2048 = vcvt.s32.f32 %v2016
        %v2049 = vcvt.s32.f32 %v2017
        %v2050 = vcvt.s32.f32 %v2018
        %v2051 = vcvt.s32.f32 %v2019
        %v2052 = vcvt.s32.f32 %v2020
        %v2053 = vcvt.s32.f32 %v2021
        %v2054 = vcvt.s32.f32 %v2022
        %v2055 = vcvt.s32.f32 %v2023
        %v2056 = vcvt.s32.f32 %v2024
        %v2057 = vcvt.s32.f32 %v2025
        %v2058 = vcvt.s32.f32 %v2026
        %v2059 = vcvt.s32.f32 %v2027
        %v2060 = vcvt.s32.f32 %v2028
        %v2061 = vcvt.s32.f32 %v2029
        %v2062 = vcvt.s32.f32 %v2030
        %v2063 = vcvt.s32.f32 %v2031
        %v2064 = vcvt.s32.f32 %v2032
        %v2065 = vcvt.s32.f32 %v2033
        %v2066 = vcvt.s32.f32 %v2034
        %v2067 = vcvt.s32.f32 %v2035
        %v2068 = vcvt.s32.f32 %v2036
        %v2069 = vcvt.s32.f32 %v2037
        %v2070 = vcvt.s32.f32 %v2038
        %v2071 = vadd.f32 %v1716, %v2039
        %v2072 = vadd.f32 %v1717, %v2040
        %v2073 = vadd.f32 %v1718, %v2041
        %v2074 = vadd.f32 %v1719, %v2042
        %v2075 = vadd.f32 %v1720, %v2043
        %v2076 = vadd.f32 %v1721, %v2044
        %v2077 = vadd.f32 %v1722, %v2045
        %v2078 = vadd.f32 %v1723, %v2046
        %v2079 = vadd.f32 %v1724, %v2047
        %v2080 = vadd.f32 %v1725, %v2048
        %v2081 = vadd.f32 %v1726, %v2049
        %v2082 = vadd.f32 %v1727, %v2050
        %v2083 = vadd.f32 %v1728, %v2051
        %v2084 = vadd.f32 %v1729, %v2052
        %v2085 = vadd.f32 %v1730, %v2053
        %v2086 = vadd.f32 %v1731, %v2054
        %v2087 = vadd.f32 %v1732, %v2055
        %v2088 = vadd.f32 %v1733, %v2056
        %v2089 = vadd.f32 %v1734, %v2057
        %v2090 = vadd.f32 %v1735, %v2058
        %v2091 = vadd.f32 %v1736, %v2059
        %v2092 = vadd.f32 %v1737, %v2060
        %v2093 = vadd.f32 %v1738, %v2061
        %v2094 = vadd.f32 %v1739, %v2062
        %v2095 = vadd.f32 %v1740, %v2063
        %v2096 = vadd.f32 %v1741, %v2064
        %v2097 = vadd.f32 %v1742, %v2065
        %v2098 = vadd.f32 %v1743, %v2066
        %v2099 = vadd.f32 %v1744, %v2067
        %v2100 = vadd.f32 %v1745, %v2068
        %v2101 = vadd.f32 %v1746, %v2069
        %v2102 = vadd.f32 %v1747, %v2070
        %vm2103 = vcmp.eq.s32.totalorder %v325, 5
        %v2104 = vsel %vm2103, 1, 0
        %vm2105 = vcmp.eq.s32.totalorder %v2104, 1
        %v2106 = vsel %vm2105, %v308, 0
        %v2107 = vsel %vm2105, %v309, 0
        %v2108 = vsel %vm2105, %v310, 0
        %v2109 = vsel %vm2105, %v311, 0
        %v2110 = vsel %vm2105, %v312, 0
        %v2111 = vsel %vm2105, %v313, 0
        %v2112 = vsel %vm2105, %v314, 0
        %v2113 = vsel %vm2105, %v315, 0
        %v2114 = vsel %vm2105, %v316, 0
        %v2115 = vsel %vm2105, %v317, 0
        %v2116 = vsel %vm2105, %v318, 0
        %v2117 = vsel %vm2105, %v319, 0
        %v2118 = vsel %vm2105, %v320, 0
        %v2119 = vsel %vm2105, %v321, 0
        %v2120 = vsel %vm2105, %v322, 0
        %v2121 = vsel %vm2105, %v323, 0
        %v2122 = vsel %vm346, %v2106, 0
        %v2123 = vand.u32 %v2122, 65535
        %v2124 = vshrl.u32 %v2122, 16
        %v2125 = vcvt.s32.f32 %v2123
        %v2126 = vcvt.s32.f32 %v2124
        %2127 = vadd.xlane.f32.xlu0 %v2125
        %v2128 = vpop.xlane.xlu0 %2127
        %2129 = vadd.xlane.f32.xlu0 %v2126
        %v2130 = vpop.xlane.xlu0 %2129
        %v2131 = vcvt.f32.s32 %v2128
        %v2132 = vcvt.f32.s32 %v2130
        %v2133 = vshll.u32 %v2132, 16
        %v2134 = vadd.s32 %v2133, %v2131
        %v2135 = vsel %vm346, %v2107, 0
        %v2136 = vand.u32 %v2135, 65535
        %v2137 = vshrl.u32 %v2135, 16
        %v2138 = vcvt.s32.f32 %v2136
        %v2139 = vcvt.s32.f32 %v2137
        %2140 = vadd.xlane.f32.xlu0 %v2138
        %v2141 = vpop.xlane.xlu0 %2140
        %2142 = vadd.xlane.f32.xlu0 %v2139
        %v2143 = vpop.xlane.xlu0 %2142
        %v2144 = vcvt.f32.s32 %v2141
        %v2145 = vcvt.f32.s32 %v2143
        %v2146 = vshll.u32 %v2145, 16
        %v2147 = vadd.s32 %v2146, %v2144
        %v2148 = vsel %vm346, %v2108, 0
        %v2149 = vand.u32 %v2148, 65535
        %v2150 = vshrl.u32 %v2148, 16
        %v2151 = vcvt.s32.f32 %v2149
        %v2152 = vcvt.s32.f32 %v2150
        %2153 = vadd.xlane.f32.xlu0 %v2151
        %v2154 = vpop.xlane.xlu0 %2153
        %2155 = vadd.xlane.f32.xlu0 %v2152
        %v2156 = vpop.xlane.xlu0 %2155
        %v2157 = vcvt.f32.s32 %v2154
        %v2158 = vcvt.f32.s32 %v2156
        %v2159 = vshll.u32 %v2158, 16
        %v2160 = vadd.s32 %v2159, %v2157
        %v2161 = vsel %vm346, %v2109, 0
        %v2162 = vand.u32 %v2161, 65535
        %v2163 = vshrl.u32 %v2161, 16
        %v2164 = vcvt.s32.f32 %v2162
        %v2165 = vcvt.s32.f32 %v2163
        %2166 = vadd.xlane.f32.xlu0 %v2164
        %v2167 = vpop.xlane.xlu0 %2166
        %2168 = vadd.xlane.f32.xlu0 %v2165
        %v2169 = vpop.xlane.xlu0 %2168
        %v2170 = vcvt.f32.s32 %v2167
        %v2171 = vcvt.f32.s32 %v2169
        %v2172 = vshll.u32 %v2171, 16
        %v2173 = vadd.s32 %v2172, %v2170
        %v2174 = vsel %vm346, %v2110, 0
        %v2175 = vand.u32 %v2174, 65535
        %v2176 = vshrl.u32 %v2174, 16
        %v2177 = vcvt.s32.f32 %v2175
        %v2178 = vcvt.s32.f32 %v2176
        %2179 = vadd.xlane.f32.xlu0 %v2177
        %v2180 = vpop.xlane.xlu0 %2179
        %2181 = vadd.xlane.f32.xlu0 %v2178
        %v2182 = vpop.xlane.xlu0 %2181
        %v2183 = vcvt.f32.s32 %v2180
        %v2184 = vcvt.f32.s32 %v2182
        %v2185 = vshll.u32 %v2184, 16
        %v2186 = vadd.s32 %v2185, %v2183
        %v2187 = vsel %vm346, %v2111, 0
        %v2188 = vand.u32 %v2187, 65535
        %v2189 = vshrl.u32 %v2187, 16
        %v2190 = vcvt.s32.f32 %v2188
        %v2191 = vcvt.s32.f32 %v2189
        %2192 = vadd.xlane.f32.xlu0 %v2190
        %v2193 = vpop.xlane.xlu0 %2192
        %2194 = vadd.xlane.f32.xlu0 %v2191
        %v2195 = vpop.xlane.xlu0 %2194
        %v2196 = vcvt.f32.s32 %v2193
        %v2197 = vcvt.f32.s32 %v2195
        %v2198 = vshll.u32 %v2197, 16
        %v2199 = vadd.s32 %v2198, %v2196
        %v2200 = vsel %vm346, %v2112, 0
        %v2201 = vand.u32 %v2200, 65535
        %v2202 = vshrl.u32 %v2200, 16
        %v2203 = vcvt.s32.f32 %v2201
        %v2204 = vcvt.s32.f32 %v2202
        %2205 = vadd.xlane.f32.xlu0 %v2203
        %v2206 = vpop.xlane.xlu0 %2205
        %2207 = vadd.xlane.f32.xlu0 %v2204
        %v2208 = vpop.xlane.xlu0 %2207
        %v2209 = vcvt.f32.s32 %v2206
        %v2210 = vcvt.f32.s32 %v2208
        %v2211 = vshll.u32 %v2210, 16
        %v2212 = vadd.s32 %v2211, %v2209
        %v2213 = vsel %vm346, %v2113, 0
        %v2214 = vand.u32 %v2213, 65535
        %v2215 = vshrl.u32 %v2213, 16
        %v2216 = vcvt.s32.f32 %v2214
        %v2217 = vcvt.s32.f32 %v2215
        %2218 = vadd.xlane.f32.xlu0 %v2216
        %v2219 = vpop.xlane.xlu0 %2218
        %2220 = vadd.xlane.f32.xlu0 %v2217
        %v2221 = vpop.xlane.xlu0 %2220
        %v2222 = vcvt.f32.s32 %v2219
        %v2223 = vcvt.f32.s32 %v2221
        %v2224 = vshll.u32 %v2223, 16
        %v2225 = vadd.s32 %v2224, %v2222
        %v2226 = vsel %vm346, %v2114, 0
        %v2227 = vand.u32 %v2226, 65535
        %v2228 = vshrl.u32 %v2226, 16
        %v2229 = vcvt.s32.f32 %v2227
        %v2230 = vcvt.s32.f32 %v2228
        %2231 = vadd.xlane.f32.xlu0 %v2229
        %v2232 = vpop.xlane.xlu0 %2231
        %2233 = vadd.xlane.f32.xlu0 %v2230
        %v2234 = vpop.xlane.xlu0 %2233
        %v2235 = vcvt.f32.s32 %v2232
        %v2236 = vcvt.f32.s32 %v2234
        %v2237 = vshll.u32 %v2236, 16
        %v2238 = vadd.s32 %v2237, %v2235
        %v2239 = vsel %vm346, %v2115, 0
        %v2240 = vand.u32 %v2239, 65535
        %v2241 = vshrl.u32 %v2239, 16
        %v2242 = vcvt.s32.f32 %v2240
        %v2243 = vcvt.s32.f32 %v2241
        %2244 = vadd.xlane.f32.xlu0 %v2242
        %v2245 = vpop.xlane.xlu0 %2244
        %2246 = vadd.xlane.f32.xlu0 %v2243
        %v2247 = vpop.xlane.xlu0 %2246
        %v2248 = vcvt.f32.s32 %v2245
        %v2249 = vcvt.f32.s32 %v2247
        %v2250 = vshll.u32 %v2249, 16
        %v2251 = vadd.s32 %v2250, %v2248
        %v2252 = vsel %vm346, %v2116, 0
        %v2253 = vand.u32 %v2252, 65535
        %v2254 = vshrl.u32 %v2252, 16
        %v2255 = vcvt.s32.f32 %v2253
        %v2256 = vcvt.s32.f32 %v2254
        %2257 = vadd.xlane.f32.xlu0 %v2255
        %v2258 = vpop.xlane.xlu0 %2257
        %2259 = vadd.xlane.f32.xlu0 %v2256
        %v2260 = vpop.xlane.xlu0 %2259
        %v2261 = vcvt.f32.s32 %v2258
        %v2262 = vcvt.f32.s32 %v2260
        %v2263 = vshll.u32 %v2262, 16
        %v2264 = vadd.s32 %v2263, %v2261
        %v2265 = vsel %vm346, %v2117, 0
        %v2266 = vand.u32 %v2265, 65535
        %v2267 = vshrl.u32 %v2265, 16
        %v2268 = vcvt.s32.f32 %v2266
        %v2269 = vcvt.s32.f32 %v2267
        %2270 = vadd.xlane.f32.xlu0 %v2268
        %v2271 = vpop.xlane.xlu0 %2270
        %2272 = vadd.xlane.f32.xlu0 %v2269
        %v2273 = vpop.xlane.xlu0 %2272
        %v2274 = vcvt.f32.s32 %v2271
        %v2275 = vcvt.f32.s32 %v2273
        %v2276 = vshll.u32 %v2275, 16
        %v2277 = vadd.s32 %v2276, %v2274
        %v2278 = vsel %vm346, %v2118, 0
        %v2279 = vand.u32 %v2278, 65535
        %v2280 = vshrl.u32 %v2278, 16
        %v2281 = vcvt.s32.f32 %v2279
        %v2282 = vcvt.s32.f32 %v2280
        %2283 = vadd.xlane.f32.xlu0 %v2281
        %v2284 = vpop.xlane.xlu0 %2283
        %2285 = vadd.xlane.f32.xlu0 %v2282
        %v2286 = vpop.xlane.xlu0 %2285
        %v2287 = vcvt.f32.s32 %v2284
        %v2288 = vcvt.f32.s32 %v2286
        %v2289 = vshll.u32 %v2288, 16
        %v2290 = vadd.s32 %v2289, %v2287
        %v2291 = vsel %vm346, %v2119, 0
        %v2292 = vand.u32 %v2291, 65535
        %v2293 = vshrl.u32 %v2291, 16
        %v2294 = vcvt.s32.f32 %v2292
        %v2295 = vcvt.s32.f32 %v2293
        %2296 = vadd.xlane.f32.xlu0 %v2294
        %v2297 = vpop.xlane.xlu0 %2296
        %2298 = vadd.xlane.f32.xlu0 %v2295
        %v2299 = vpop.xlane.xlu0 %2298
        %v2300 = vcvt.f32.s32 %v2297
        %v2301 = vcvt.f32.s32 %v2299
        %v2302 = vshll.u32 %v2301, 16
        %v2303 = vadd.s32 %v2302, %v2300
        %v2304 = vsel %vm346, %v2120, 0
        %v2305 = vand.u32 %v2304, 65535
        %v2306 = vshrl.u32 %v2304, 16
        %v2307 = vcvt.s32.f32 %v2305
        %v2308 = vcvt.s32.f32 %v2306
        %2309 = vadd.xlane.f32.xlu0 %v2307
        %v2310 = vpop.xlane.xlu0 %2309
        %2311 = vadd.xlane.f32.xlu0 %v2308
        %v2312 = vpop.xlane.xlu0 %2311
        %v2313 = vcvt.f32.s32 %v2310
        %v2314 = vcvt.f32.s32 %v2312
        %v2315 = vshll.u32 %v2314, 16
        %v2316 = vadd.s32 %v2315, %v2313
        %v2317 = vsel %vm346, %v2121, 0
        %v2318 = vand.u32 %v2317, 65535
        %v2319 = vshrl.u32 %v2317, 16
        %v2320 = vcvt.s32.f32 %v2318
        %v2321 = vcvt.s32.f32 %v2319
        %2322 = vadd.xlane.f32.xlu0 %v2320
        %v2323 = vpop.xlane.xlu0 %2322
        %2324 = vadd.xlane.f32.xlu0 %v2321
        %v2325 = vpop.xlane.xlu0 %2324
        %v2326 = vcvt.f32.s32 %v2323
        %v2327 = vcvt.f32.s32 %v2325
        %v2328 = vshll.u32 %v2327, 16
        %v2329 = vadd.s32 %v2328, %v2326
        %vm2330 = vcmp.eq.s32.totalorder %v2134, %v325
        %vm2331 = vcmp.eq.s32.totalorder %v2134, %v326
        %vm2332 = vcmp.eq.s32.totalorder %v2147, %v325
        %vm2333 = vcmp.eq.s32.totalorder %v2147, %v326
        %vm2334 = vcmp.eq.s32.totalorder %v2160, %v325
        %vm2335 = vcmp.eq.s32.totalorder %v2160, %v326
        %vm2336 = vcmp.eq.s32.totalorder %v2173, %v325
        %vm2337 = vcmp.eq.s32.totalorder %v2173, %v326
        %vm2338 = vcmp.eq.s32.totalorder %v2186, %v325
        %vm2339 = vcmp.eq.s32.totalorder %v2186, %v326
        %vm2340 = vcmp.eq.s32.totalorder %v2199, %v325
        %vm2341 = vcmp.eq.s32.totalorder %v2199, %v326
        %vm2342 = vcmp.eq.s32.totalorder %v2212, %v325
        %vm2343 = vcmp.eq.s32.totalorder %v2212, %v326
        %vm2344 = vcmp.eq.s32.totalorder %v2225, %v325
        %vm2345 = vcmp.eq.s32.totalorder %v2225, %v326
        %vm2346 = vcmp.eq.s32.totalorder %v2238, %v325
        %vm2347 = vcmp.eq.s32.totalorder %v2238, %v326
        %vm2348 = vcmp.eq.s32.totalorder %v2251, %v325
        %vm2349 = vcmp.eq.s32.totalorder %v2251, %v326
        %vm2350 = vcmp.eq.s32.totalorder %v2264, %v325
        %vm2351 = vcmp.eq.s32.totalorder %v2264, %v326
        %vm2352 = vcmp.eq.s32.totalorder %v2277, %v325
        %vm2353 = vcmp.eq.s32.totalorder %v2277, %v326
        %vm2354 = vcmp.eq.s32.totalorder %v2290, %v325
        %vm2355 = vcmp.eq.s32.totalorder %v2290, %v326
        %vm2356 = vcmp.eq.s32.totalorder %v2303, %v325
        %vm2357 = vcmp.eq.s32.totalorder %v2303, %v326
        %vm2358 = vcmp.eq.s32.totalorder %v2316, %v325
        %vm2359 = vcmp.eq.s32.totalorder %v2316, %v326
        %vm2360 = vcmp.eq.s32.totalorder %v2329, %v325
        %vm2361 = vcmp.eq.s32.totalorder %v2329, %v326
        %v2362 = vsel %vm2330, 1, 0
        %v2363 = vsel %vm2331, 1, 0
        %v2364 = vsel %vm2332, 1, 0
        %v2365 = vsel %vm2333, 1, 0
        %v2366 = vsel %vm2334, 1, 0
        %v2367 = vsel %vm2335, 1, 0
        %v2368 = vsel %vm2336, 1, 0
        %v2369 = vsel %vm2337, 1, 0
        %v2370 = vsel %vm2338, 1, 0
        %v2371 = vsel %vm2339, 1, 0
        %v2372 = vsel %vm2340, 1, 0
        %v2373 = vsel %vm2341, 1, 0
        %v2374 = vsel %vm2342, 1, 0
        %v2375 = vsel %vm2343, 1, 0
        %v2376 = vsel %vm2344, 1, 0
        %v2377 = vsel %vm2345, 1, 0
        %v2378 = vsel %vm2346, 1, 0
        %v2379 = vsel %vm2347, 1, 0
        %v2380 = vsel %vm2348, 1, 0
        %v2381 = vsel %vm2349, 1, 0
        %v2382 = vsel %vm2350, 1, 0
        %v2383 = vsel %vm2351, 1, 0
        %v2384 = vsel %vm2352, 1, 0
        %v2385 = vsel %vm2353, 1, 0
        %v2386 = vsel %vm2354, 1, 0
        %v2387 = vsel %vm2355, 1, 0
        %v2388 = vsel %vm2356, 1, 0
        %v2389 = vsel %vm2357, 1, 0
        %v2390 = vsel %vm2358, 1, 0
        %v2391 = vsel %vm2359, 1, 0
        %v2392 = vsel %vm2360, 1, 0
        %v2393 = vsel %vm2361, 1, 0
        %v2394 = vcvt.s32.f32 %v2362
        %v2395 = vcvt.s32.f32 %v2363
        %v2396 = vcvt.s32.f32 %v2364
        %v2397 = vcvt.s32.f32 %v2365
        %v2398 = vcvt.s32.f32 %v2366
        %v2399 = vcvt.s32.f32 %v2367
        %v2400 = vcvt.s32.f32 %v2368
        %v2401 = vcvt.s32.f32 %v2369
        %v2402 = vcvt.s32.f32 %v2370
        %v2403 = vcvt.s32.f32 %v2371
        %v2404 = vcvt.s32.f32 %v2372
        %v2405 = vcvt.s32.f32 %v2373
        %v2406 = vcvt.s32.f32 %v2374
        %v2407 = vcvt.s32.f32 %v2375
        %v2408 = vcvt.s32.f32 %v2376
        %v2409 = vcvt.s32.f32 %v2377
        %v2410 = vcvt.s32.f32 %v2378
        %v2411 = vcvt.s32.f32 %v2379
        %v2412 = vcvt.s32.f32 %v2380
        %v2413 = vcvt.s32.f32 %v2381
        %v2414 = vcvt.s32.f32 %v2382
        %v2415 = vcvt.s32.f32 %v2383
        %v2416 = vcvt.s32.f32 %v2384
        %v2417 = vcvt.s32.f32 %v2385
        %v2418 = vcvt.s32.f32 %v2386
        %v2419 = vcvt.s32.f32 %v2387
        %v2420 = vcvt.s32.f32 %v2388
        %v2421 = vcvt.s32.f32 %v2389
        %v2422 = vcvt.s32.f32 %v2390
        %v2423 = vcvt.s32.f32 %v2391
        %v2424 = vcvt.s32.f32 %v2392
        %v2425 = vcvt.s32.f32 %v2393
        %v2426 = vadd.f32 %v2071, %v2394
        %v2427 = vadd.f32 %v2072, %v2395
        %v2428 = vadd.f32 %v2073, %v2396
        %v2429 = vadd.f32 %v2074, %v2397
        %v2430 = vadd.f32 %v2075, %v2398
        %v2431 = vadd.f32 %v2076, %v2399
        %v2432 = vadd.f32 %v2077, %v2400
        %v2433 = vadd.f32 %v2078, %v2401
        %v2434 = vadd.f32 %v2079, %v2402
        %v2435 = vadd.f32 %v2080, %v2403
        %v2436 = vadd.f32 %v2081, %v2404
        %v2437 = vadd.f32 %v2082, %v2405
        %v2438 = vadd.f32 %v2083, %v2406
        %v2439 = vadd.f32 %v2084, %v2407
        %v2440 = vadd.f32 %v2085, %v2408
        %v2441 = vadd.f32 %v2086, %v2409
        %v2442 = vadd.f32 %v2087, %v2410
        %v2443 = vadd.f32 %v2088, %v2411
        %v2444 = vadd.f32 %v2089, %v2412
        %v2445 = vadd.f32 %v2090, %v2413
        %v2446 = vadd.f32 %v2091, %v2414
        %v2447 = vadd.f32 %v2092, %v2415
        %v2448 = vadd.f32 %v2093, %v2416
        %v2449 = vadd.f32 %v2094, %v2417
        %v2450 = vadd.f32 %v2095, %v2418
        %v2451 = vadd.f32 %v2096, %v2419
        %v2452 = vadd.f32 %v2097, %v2420
        %v2453 = vadd.f32 %v2098, %v2421
        %v2454 = vadd.f32 %v2099, %v2422
        %v2455 = vadd.f32 %v2100, %v2423
        %v2456 = vadd.f32 %v2101, %v2424
        %v2457 = vadd.f32 %v2102, %v2425
        %vm2458 = vcmp.eq.s32.totalorder %v325, 6
        %v2459 = vsel %vm2458, 1, 0
        %vm2460 = vcmp.eq.s32.totalorder %v2459, 1
        %v2461 = vsel %vm2460, %v308, 0
        %v2462 = vsel %vm2460, %v309, 0
        %v2463 = vsel %vm2460, %v310, 0
        %v2464 = vsel %vm2460, %v311, 0
        %v2465 = vsel %vm2460, %v312, 0
        %v2466 = vsel %vm2460, %v313, 0
        %v2467 = vsel %vm2460, %v314, 0
        %v2468 = vsel %vm2460, %v315, 0
        %v2469 = vsel %vm2460, %v316, 0
        %v2470 = vsel %vm2460, %v317, 0
        %v2471 = vsel %vm2460, %v318, 0
        %v2472 = vsel %vm2460, %v319, 0
        %v2473 = vsel %vm2460, %v320, 0
        %v2474 = vsel %vm2460, %v321, 0
        %v2475 = vsel %vm2460, %v322, 0
        %v2476 = vsel %vm2460, %v323, 0
        %v2477 = vsel %vm346, %v2461, 0
        %v2478 = vand.u32 %v2477, 65535
        %v2479 = vshrl.u32 %v2477, 16
        %v2480 = vcvt.s32.f32 %v2478
        %v2481 = vcvt.s32.f32 %v2479
        %2482 = vadd.xlane.f32.xlu0 %v2480
        %v2483 = vpop.xlane.xlu0 %2482
        %2484 = vadd.xlane.f32.xlu0 %v2481
        %v2485 = vpop.xlane.xlu0 %2484
        %v2486 = vcvt.f32.s32 %v2483
        %v2487 = vcvt.f32.s32 %v2485
        %v2488 = vshll.u32 %v2487, 16
        %v2489 = vadd.s32 %v2488, %v2486
        %v2490 = vsel %vm346, %v2462, 0
        %v2491 = vand.u32 %v2490, 65535
        %v2492 = vshrl.u32 %v2490, 16
        %v2493 = vcvt.s32.f32 %v2491
        %v2494 = vcvt.s32.f32 %v2492
        %2495 = vadd.xlane.f32.xlu0 %v2493
        %v2496 = vpop.xlane.xlu0 %2495
        %2497 = vadd.xlane.f32.xlu0 %v2494
        %v2498 = vpop.xlane.xlu0 %2497
        %v2499 = vcvt.f32.s32 %v2496
        %v2500 = vcvt.f32.s32 %v2498
        %v2501 = vshll.u32 %v2500, 16
        %v2502 = vadd.s32 %v2501, %v2499
        %v2503 = vsel %vm346, %v2463, 0
        %v2504 = vand.u32 %v2503, 65535
        %v2505 = vshrl.u32 %v2503, 16
        %v2506 = vcvt.s32.f32 %v2504
        %v2507 = vcvt.s32.f32 %v2505
        %2508 = vadd.xlane.f32.xlu0 %v2506
        %v2509 = vpop.xlane.xlu0 %2508
        %2510 = vadd.xlane.f32.xlu0 %v2507
        %v2511 = vpop.xlane.xlu0 %2510
        %v2512 = vcvt.f32.s32 %v2509
        %v2513 = vcvt.f32.s32 %v2511
        %v2514 = vshll.u32 %v2513, 16
        %v2515 = vadd.s32 %v2514, %v2512
        %v2516 = vsel %vm346, %v2464, 0
        %v2517 = vand.u32 %v2516, 65535
        %v2518 = vshrl.u32 %v2516, 16
        %v2519 = vcvt.s32.f32 %v2517
        %v2520 = vcvt.s32.f32 %v2518
        %2521 = vadd.xlane.f32.xlu0 %v2519
        %v2522 = vpop.xlane.xlu0 %2521
        %2523 = vadd.xlane.f32.xlu0 %v2520
        %v2524 = vpop.xlane.xlu0 %2523
        %v2525 = vcvt.f32.s32 %v2522
        %v2526 = vcvt.f32.s32 %v2524
        %v2527 = vshll.u32 %v2526, 16
        %v2528 = vadd.s32 %v2527, %v2525
        %v2529 = vsel %vm346, %v2465, 0
        %v2530 = vand.u32 %v2529, 65535
        %v2531 = vshrl.u32 %v2529, 16
        %v2532 = vcvt.s32.f32 %v2530
        %v2533 = vcvt.s32.f32 %v2531
        %2534 = vadd.xlane.f32.xlu0 %v2532
        %v2535 = vpop.xlane.xlu0 %2534
        %2536 = vadd.xlane.f32.xlu0 %v2533
        %v2537 = vpop.xlane.xlu0 %2536
        %v2538 = vcvt.f32.s32 %v2535
        %v2539 = vcvt.f32.s32 %v2537
        %v2540 = vshll.u32 %v2539, 16
        %v2541 = vadd.s32 %v2540, %v2538
        %v2542 = vsel %vm346, %v2466, 0
        %v2543 = vand.u32 %v2542, 65535
        %v2544 = vshrl.u32 %v2542, 16
        %v2545 = vcvt.s32.f32 %v2543
        %v2546 = vcvt.s32.f32 %v2544
        %2547 = vadd.xlane.f32.xlu0 %v2545
        %v2548 = vpop.xlane.xlu0 %2547
        %2549 = vadd.xlane.f32.xlu0 %v2546
        %v2550 = vpop.xlane.xlu0 %2549
        %v2551 = vcvt.f32.s32 %v2548
        %v2552 = vcvt.f32.s32 %v2550
        %v2553 = vshll.u32 %v2552, 16
        %v2554 = vadd.s32 %v2553, %v2551
        %v2555 = vsel %vm346, %v2467, 0
        %v2556 = vand.u32 %v2555, 65535
        %v2557 = vshrl.u32 %v2555, 16
        %v2558 = vcvt.s32.f32 %v2556
        %v2559 = vcvt.s32.f32 %v2557
        %2560 = vadd.xlane.f32.xlu0 %v2558
        %v2561 = vpop.xlane.xlu0 %2560
        %2562 = vadd.xlane.f32.xlu0 %v2559
        %v2563 = vpop.xlane.xlu0 %2562
        %v2564 = vcvt.f32.s32 %v2561
        %v2565 = vcvt.f32.s32 %v2563
        %v2566 = vshll.u32 %v2565, 16
        %v2567 = vadd.s32 %v2566, %v2564
        %v2568 = vsel %vm346, %v2468, 0
        %v2569 = vand.u32 %v2568, 65535
        %v2570 = vshrl.u32 %v2568, 16
        %v2571 = vcvt.s32.f32 %v2569
        %v2572 = vcvt.s32.f32 %v2570
        %2573 = vadd.xlane.f32.xlu0 %v2571
        %v2574 = vpop.xlane.xlu0 %2573
        %2575 = vadd.xlane.f32.xlu0 %v2572
        %v2576 = vpop.xlane.xlu0 %2575
        %v2577 = vcvt.f32.s32 %v2574
        %v2578 = vcvt.f32.s32 %v2576
        %v2579 = vshll.u32 %v2578, 16
        %v2580 = vadd.s32 %v2579, %v2577
        %v2581 = vsel %vm346, %v2469, 0
        %v2582 = vand.u32 %v2581, 65535
        %v2583 = vshrl.u32 %v2581, 16
        %v2584 = vcvt.s32.f32 %v2582
        %v2585 = vcvt.s32.f32 %v2583
        %2586 = vadd.xlane.f32.xlu0 %v2584
        %v2587 = vpop.xlane.xlu0 %2586
        %2588 = vadd.xlane.f32.xlu0 %v2585
        %v2589 = vpop.xlane.xlu0 %2588
        %v2590 = vcvt.f32.s32 %v2587
        %v2591 = vcvt.f32.s32 %v2589
        %v2592 = vshll.u32 %v2591, 16
        %v2593 = vadd.s32 %v2592, %v2590
        %v2594 = vsel %vm346, %v2470, 0
        %v2595 = vand.u32 %v2594, 65535
        %v2596 = vshrl.u32 %v2594, 16
        %v2597 = vcvt.s32.f32 %v2595
        %v2598 = vcvt.s32.f32 %v2596
        %2599 = vadd.xlane.f32.xlu0 %v2597
        %v2600 = vpop.xlane.xlu0 %2599
        %2601 = vadd.xlane.f32.xlu0 %v2598
        %v2602 = vpop.xlane.xlu0 %2601
        %v2603 = vcvt.f32.s32 %v2600
        %v2604 = vcvt.f32.s32 %v2602
        %v2605 = vshll.u32 %v2604, 16
        %v2606 = vadd.s32 %v2605, %v2603
        %v2607 = vsel %vm346, %v2471, 0
        %v2608 = vand.u32 %v2607, 65535
        %v2609 = vshrl.u32 %v2607, 16
        %v2610 = vcvt.s32.f32 %v2608
        %v2611 = vcvt.s32.f32 %v2609
        %2612 = vadd.xlane.f32.xlu0 %v2610
        %v2613 = vpop.xlane.xlu0 %2612
        %2614 = vadd.xlane.f32.xlu0 %v2611
        %v2615 = vpop.xlane.xlu0 %2614
        %v2616 = vcvt.f32.s32 %v2613
        %v2617 = vcvt.f32.s32 %v2615
        %v2618 = vshll.u32 %v2617, 16
        %v2619 = vadd.s32 %v2618, %v2616
        %v2620 = vsel %vm346, %v2472, 0
        %v2621 = vand.u32 %v2620, 65535
        %v2622 = vshrl.u32 %v2620, 16
        %v2623 = vcvt.s32.f32 %v2621
        %v2624 = vcvt.s32.f32 %v2622
        %2625 = vadd.xlane.f32.xlu0 %v2623
        %v2626 = vpop.xlane.xlu0 %2625
        %2627 = vadd.xlane.f32.xlu0 %v2624
        %v2628 = vpop.xlane.xlu0 %2627
        %v2629 = vcvt.f32.s32 %v2626
        %v2630 = vcvt.f32.s32 %v2628
        %v2631 = vshll.u32 %v2630, 16
        %v2632 = vadd.s32 %v2631, %v2629
        %v2633 = vsel %vm346, %v2473, 0
        %v2634 = vand.u32 %v2633, 65535
        %v2635 = vshrl.u32 %v2633, 16
        %v2636 = vcvt.s32.f32 %v2634
        %v2637 = vcvt.s32.f32 %v2635
        %2638 = vadd.xlane.f32.xlu0 %v2636
        %v2639 = vpop.xlane.xlu0 %2638
        %2640 = vadd.xlane.f32.xlu0 %v2637
        %v2641 = vpop.xlane.xlu0 %2640
        %v2642 = vcvt.f32.s32 %v2639
        %v2643 = vcvt.f32.s32 %v2641
        %v2644 = vshll.u32 %v2643, 16
        %v2645 = vadd.s32 %v2644, %v2642
        %v2646 = vsel %vm346, %v2474, 0
        %v2647 = vand.u32 %v2646, 65535
        %v2648 = vshrl.u32 %v2646, 16
        %v2649 = vcvt.s32.f32 %v2647
        %v2650 = vcvt.s32.f32 %v2648
        %2651 = vadd.xlane.f32.xlu0 %v2649
        %v2652 = vpop.xlane.xlu0 %2651
        %2653 = vadd.xlane.f32.xlu0 %v2650
        %v2654 = vpop.xlane.xlu0 %2653
        %v2655 = vcvt.f32.s32 %v2652
        %v2656 = vcvt.f32.s32 %v2654
        %v2657 = vshll.u32 %v2656, 16
        %v2658 = vadd.s32 %v2657, %v2655
        %v2659 = vsel %vm346, %v2475, 0
        %v2660 = vand.u32 %v2659, 65535
        %v2661 = vshrl.u32 %v2659, 16
        %v2662 = vcvt.s32.f32 %v2660
        %v2663 = vcvt.s32.f32 %v2661
        %2664 = vadd.xlane.f32.xlu0 %v2662
        %v2665 = vpop.xlane.xlu0 %2664
        %2666 = vadd.xlane.f32.xlu0 %v2663
        %v2667 = vpop.xlane.xlu0 %2666
        %v2668 = vcvt.f32.s32 %v2665
        %v2669 = vcvt.f32.s32 %v2667
        %v2670 = vshll.u32 %v2669, 16
        %v2671 = vadd.s32 %v2670, %v2668
        %v2672 = vsel %vm346, %v2476, 0
        %v2673 = vand.u32 %v2672, 65535
        %v2674 = vshrl.u32 %v2672, 16
        %v2675 = vcvt.s32.f32 %v2673
        %v2676 = vcvt.s32.f32 %v2674
        %2677 = vadd.xlane.f32.xlu0 %v2675
        %v2678 = vpop.xlane.xlu0 %2677
        %2679 = vadd.xlane.f32.xlu0 %v2676
        %v2680 = vpop.xlane.xlu0 %2679
        %v2681 = vcvt.f32.s32 %v2678
        %v2682 = vcvt.f32.s32 %v2680
        %v2683 = vshll.u32 %v2682, 16
        %v2684 = vadd.s32 %v2683, %v2681
        %vm2685 = vcmp.eq.s32.totalorder %v2489, %v325
        %vm2686 = vcmp.eq.s32.totalorder %v2489, %v326
        %vm2687 = vcmp.eq.s32.totalorder %v2502, %v325
        %vm2688 = vcmp.eq.s32.totalorder %v2502, %v326
        %vm2689 = vcmp.eq.s32.totalorder %v2515, %v325
        %vm2690 = vcmp.eq.s32.totalorder %v2515, %v326
        %vm2691 = vcmp.eq.s32.totalorder %v2528, %v325
        %vm2692 = vcmp.eq.s32.totalorder %v2528, %v326
        %vm2693 = vcmp.eq.s32.totalorder %v2541, %v325
        %vm2694 = vcmp.eq.s32.totalorder %v2541, %v326
        %vm2695 = vcmp.eq.s32.totalorder %v2554, %v325
        %vm2696 = vcmp.eq.s32.totalorder %v2554, %v326
        %vm2697 = vcmp.eq.s32.totalorder %v2567, %v325
        %vm2698 = vcmp.eq.s32.totalorder %v2567, %v326
        %vm2699 = vcmp.eq.s32.totalorder %v2580, %v325
        %vm2700 = vcmp.eq.s32.totalorder %v2580, %v326
        %vm2701 = vcmp.eq.s32.totalorder %v2593, %v325
        %vm2702 = vcmp.eq.s32.totalorder %v2593, %v326
        %vm2703 = vcmp.eq.s32.totalorder %v2606, %v325
        %vm2704 = vcmp.eq.s32.totalorder %v2606, %v326
        %vm2705 = vcmp.eq.s32.totalorder %v2619, %v325
        %vm2706 = vcmp.eq.s32.totalorder %v2619, %v326
        %vm2707 = vcmp.eq.s32.totalorder %v2632, %v325
        %vm2708 = vcmp.eq.s32.totalorder %v2632, %v326
        %vm2709 = vcmp.eq.s32.totalorder %v2645, %v325
        %vm2710 = vcmp.eq.s32.totalorder %v2645, %v326
        %vm2711 = vcmp.eq.s32.totalorder %v2658, %v325
        %vm2712 = vcmp.eq.s32.totalorder %v2658, %v326
        %vm2713 = vcmp.eq.s32.totalorder %v2671, %v325
        %vm2714 = vcmp.eq.s32.totalorder %v2671, %v326
        %vm2715 = vcmp.eq.s32.totalorder %v2684, %v325
        %vm2716 = vcmp.eq.s32.totalorder %v2684, %v326
        %v2717 = vsel %vm2685, 1, 0
        %v2718 = vsel %vm2686, 1, 0
        %v2719 = vsel %vm2687, 1, 0
        %v2720 = vsel %vm2688, 1, 0
        %v2721 = vsel %vm2689, 1, 0
        %v2722 = vsel %vm2690, 1, 0
        %v2723 = vsel %vm2691, 1, 0
        %v2724 = vsel %vm2692, 1, 0
        %v2725 = vsel %vm2693, 1, 0
        %v2726 = vsel %vm2694, 1, 0
        %v2727 = vsel %vm2695, 1, 0
        %v2728 = vsel %vm2696, 1, 0
        %v2729 = vsel %vm2697, 1, 0
        %v2730 = vsel %vm2698, 1, 0
        %v2731 = vsel %vm2699, 1, 0
        %v2732 = vsel %vm2700, 1, 0
        %v2733 = vsel %vm2701, 1, 0
        %v2734 = vsel %vm2702, 1, 0
        %v2735 = vsel %vm2703, 1, 0
        %v2736 = vsel %vm2704, 1, 0
        %v2737 = vsel %vm2705, 1, 0
        %v2738 = vsel %vm2706, 1, 0
        %v2739 = vsel %vm2707, 1, 0
        %v2740 = vsel %vm2708, 1, 0
        %v2741 = vsel %vm2709, 1, 0
        %v2742 = vsel %vm2710, 1, 0
        %v2743 = vsel %vm2711, 1, 0
        %v2744 = vsel %vm2712, 1, 0
        %v2745 = vsel %vm2713, 1, 0
        %v2746 = vsel %vm2714, 1, 0
        %v2747 = vsel %vm2715, 1, 0
        %v2748 = vsel %vm2716, 1, 0
        %v2749 = vcvt.s32.f32 %v2717
        %v2750 = vcvt.s32.f32 %v2718
        %v2751 = vcvt.s32.f32 %v2719
        %v2752 = vcvt.s32.f32 %v2720
        %v2753 = vcvt.s32.f32 %v2721
        %v2754 = vcvt.s32.f32 %v2722
        %v2755 = vcvt.s32.f32 %v2723
        %v2756 = vcvt.s32.f32 %v2724
        %v2757 = vcvt.s32.f32 %v2725
        %v2758 = vcvt.s32.f32 %v2726
        %v2759 = vcvt.s32.f32 %v2727
        %v2760 = vcvt.s32.f32 %v2728
        %v2761 = vcvt.s32.f32 %v2729
        %v2762 = vcvt.s32.f32 %v2730
        %v2763 = vcvt.s32.f32 %v2731
        %v2764 = vcvt.s32.f32 %v2732
        %v2765 = vcvt.s32.f32 %v2733
        %v2766 = vcvt.s32.f32 %v2734
        %v2767 = vcvt.s32.f32 %v2735
        %v2768 = vcvt.s32.f32 %v2736
        %v2769 = vcvt.s32.f32 %v2737
        %v2770 = vcvt.s32.f32 %v2738
        %v2771 = vcvt.s32.f32 %v2739
        %v2772 = vcvt.s32.f32 %v2740
        %v2773 = vcvt.s32.f32 %v2741
        %v2774 = vcvt.s32.f32 %v2742
        %v2775 = vcvt.s32.f32 %v2743
        %v2776 = vcvt.s32.f32 %v2744
        %v2777 = vcvt.s32.f32 %v2745
        %v2778 = vcvt.s32.f32 %v2746
        %v2779 = vcvt.s32.f32 %v2747
        %v2780 = vcvt.s32.f32 %v2748
        %v2781 = vadd.f32 %v2426, %v2749
        %v2782 = vadd.f32 %v2427, %v2750
        %v2783 = vadd.f32 %v2428, %v2751
        %v2784 = vadd.f32 %v2429, %v2752
        %v2785 = vadd.f32 %v2430, %v2753
        %v2786 = vadd.f32 %v2431, %v2754
        %v2787 = vadd.f32 %v2432, %v2755
        %v2788 = vadd.f32 %v2433, %v2756
        %v2789 = vadd.f32 %v2434, %v2757
        %v2790 = vadd.f32 %v2435, %v2758
        %v2791 = vadd.f32 %v2436, %v2759
        %v2792 = vadd.f32 %v2437, %v2760
        %v2793 = vadd.f32 %v2438, %v2761
        %v2794 = vadd.f32 %v2439, %v2762
        %v2795 = vadd.f32 %v2440, %v2763
        %v2796 = vadd.f32 %v2441, %v2764
        %v2797 = vadd.f32 %v2442, %v2765
        %v2798 = vadd.f32 %v2443, %v2766
        %v2799 = vadd.f32 %v2444, %v2767
        %v2800 = vadd.f32 %v2445, %v2768
        %v2801 = vadd.f32 %v2446, %v2769
        %v2802 = vadd.f32 %v2447, %v2770
        %v2803 = vadd.f32 %v2448, %v2771
        %v2804 = vadd.f32 %v2449, %v2772
        %v2805 = vadd.f32 %v2450, %v2773
        %v2806 = vadd.f32 %v2451, %v2774
        %v2807 = vadd.f32 %v2452, %v2775
        %v2808 = vadd.f32 %v2453, %v2776
        %v2809 = vadd.f32 %v2454, %v2777
        %v2810 = vadd.f32 %v2455, %v2778
        %v2811 = vadd.f32 %v2456, %v2779
        %v2812 = vadd.f32 %v2457, %v2780
        %vm2813 = vcmp.eq.s32.totalorder %v325, 7
        %v2814 = vsel %vm2813, 1, 0
        %vm2815 = vcmp.eq.s32.totalorder %v2814, 1
        %v2816 = vsel %vm2815, %v308, 0
        %v2817 = vsel %vm2815, %v309, 0
        %v2818 = vsel %vm2815, %v310, 0
        %v2819 = vsel %vm2815, %v311, 0
        %v2820 = vsel %vm2815, %v312, 0
        %v2821 = vsel %vm2815, %v313, 0
        %v2822 = vsel %vm2815, %v314, 0
        %v2823 = vsel %vm2815, %v315, 0
        %v2824 = vsel %vm2815, %v316, 0
        %v2825 = vsel %vm2815, %v317, 0
        %v2826 = vsel %vm2815, %v318, 0
        %v2827 = vsel %vm2815, %v319, 0
        %v2828 = vsel %vm2815, %v320, 0
        %v2829 = vsel %vm2815, %v321, 0
        %v2830 = vsel %vm2815, %v322, 0
        %v2831 = vsel %vm2815, %v323, 0
        %v2832 = vsel %vm346, %v2816, 0
        %v2833 = vand.u32 %v2832, 65535
        %v2834 = vshrl.u32 %v2832, 16
        %v2835 = vcvt.s32.f32 %v2833
        %v2836 = vcvt.s32.f32 %v2834
        %2837 = vadd.xlane.f32.xlu0 %v2835
        %v2838 = vpop.xlane.xlu0 %2837
        %2839 = vadd.xlane.f32.xlu0 %v2836
        %v2840 = vpop.xlane.xlu0 %2839
        %v2841 = vcvt.f32.s32 %v2838
        %v2842 = vcvt.f32.s32 %v2840
        %v2843 = vshll.u32 %v2842, 16
        %v2844 = vadd.s32 %v2843, %v2841
        %v2845 = vsel %vm346, %v2817, 0
        %v2846 = vand.u32 %v2845, 65535
        %v2847 = vshrl.u32 %v2845, 16
        %v2848 = vcvt.s32.f32 %v2846
        %v2849 = vcvt.s32.f32 %v2847
        %2850 = vadd.xlane.f32.xlu0 %v2848
        %v2851 = vpop.xlane.xlu0 %2850
        %2852 = vadd.xlane.f32.xlu0 %v2849
        %v2853 = vpop.xlane.xlu0 %2852
        %v2854 = vcvt.f32.s32 %v2851
        %v2855 = vcvt.f32.s32 %v2853
        %v2856 = vshll.u32 %v2855, 16
        %v2857 = vadd.s32 %v2856, %v2854
        %v2858 = vsel %vm346, %v2818, 0
        %v2859 = vand.u32 %v2858, 65535
        %v2860 = vshrl.u32 %v2858, 16
        %v2861 = vcvt.s32.f32 %v2859
        %v2862 = vcvt.s32.f32 %v2860
        %2863 = vadd.xlane.f32.xlu0 %v2861
        %v2864 = vpop.xlane.xlu0 %2863
        %2865 = vadd.xlane.f32.xlu0 %v2862
        %v2866 = vpop.xlane.xlu0 %2865
        %v2867 = vcvt.f32.s32 %v2864
        %v2868 = vcvt.f32.s32 %v2866
        %v2869 = vshll.u32 %v2868, 16
        %v2870 = vadd.s32 %v2869, %v2867
        %v2871 = vsel %vm346, %v2819, 0
        %v2872 = vand.u32 %v2871, 65535
        %v2873 = vshrl.u32 %v2871, 16
        %v2874 = vcvt.s32.f32 %v2872
        %v2875 = vcvt.s32.f32 %v2873
        %2876 = vadd.xlane.f32.xlu0 %v2874
        %v2877 = vpop.xlane.xlu0 %2876
        %2878 = vadd.xlane.f32.xlu0 %v2875
        %v2879 = vpop.xlane.xlu0 %2878
        %v2880 = vcvt.f32.s32 %v2877
        %v2881 = vcvt.f32.s32 %v2879
        %v2882 = vshll.u32 %v2881, 16
        %v2883 = vadd.s32 %v2882, %v2880
        %v2884 = vsel %vm346, %v2820, 0
        %v2885 = vand.u32 %v2884, 65535
        %v2886 = vshrl.u32 %v2884, 16
        %v2887 = vcvt.s32.f32 %v2885
        %v2888 = vcvt.s32.f32 %v2886
        %2889 = vadd.xlane.f32.xlu0 %v2887
        %v2890 = vpop.xlane.xlu0 %2889
        %2891 = vadd.xlane.f32.xlu0 %v2888
        %v2892 = vpop.xlane.xlu0 %2891
        %v2893 = vcvt.f32.s32 %v2890
        %v2894 = vcvt.f32.s32 %v2892
        %v2895 = vshll.u32 %v2894, 16
        %v2896 = vadd.s32 %v2895, %v2893
        %v2897 = vsel %vm346, %v2821, 0
        %v2898 = vand.u32 %v2897, 65535
        %v2899 = vshrl.u32 %v2897, 16
        %v2900 = vcvt.s32.f32 %v2898
        %v2901 = vcvt.s32.f32 %v2899
        %2902 = vadd.xlane.f32.xlu0 %v2900
        %v2903 = vpop.xlane.xlu0 %2902
        %2904 = vadd.xlane.f32.xlu0 %v2901
        %v2905 = vpop.xlane.xlu0 %2904
        %v2906 = vcvt.f32.s32 %v2903
        %v2907 = vcvt.f32.s32 %v2905
        %v2908 = vshll.u32 %v2907, 16
        %v2909 = vadd.s32 %v2908, %v2906
        %v2910 = vsel %vm346, %v2822, 0
        %v2911 = vand.u32 %v2910, 65535
        %v2912 = vshrl.u32 %v2910, 16
        %v2913 = vcvt.s32.f32 %v2911
        %v2914 = vcvt.s32.f32 %v2912
        %2915 = vadd.xlane.f32.xlu0 %v2913
        %v2916 = vpop.xlane.xlu0 %2915
        %2917 = vadd.xlane.f32.xlu0 %v2914
        %v2918 = vpop.xlane.xlu0 %2917
        %v2919 = vcvt.f32.s32 %v2916
        %v2920 = vcvt.f32.s32 %v2918
        %v2921 = vshll.u32 %v2920, 16
        %v2922 = vadd.s32 %v2921, %v2919
        %v2923 = vsel %vm346, %v2823, 0
        %v2924 = vand.u32 %v2923, 65535
        %v2925 = vshrl.u32 %v2923, 16
        %v2926 = vcvt.s32.f32 %v2924
        %v2927 = vcvt.s32.f32 %v2925
        %2928 = vadd.xlane.f32.xlu0 %v2926
        %v2929 = vpop.xlane.xlu0 %2928
        %2930 = vadd.xlane.f32.xlu0 %v2927
        %v2931 = vpop.xlane.xlu0 %2930
        %v2932 = vcvt.f32.s32 %v2929
        %v2933 = vcvt.f32.s32 %v2931
        %v2934 = vshll.u32 %v2933, 16
        %v2935 = vadd.s32 %v2934, %v2932
        %v2936 = vsel %vm346, %v2824, 0
        %v2937 = vand.u32 %v2936, 65535
        %v2938 = vshrl.u32 %v2936, 16
        %v2939 = vcvt.s32.f32 %v2937
        %v2940 = vcvt.s32.f32 %v2938
        %2941 = vadd.xlane.f32.xlu0 %v2939
        %v2942 = vpop.xlane.xlu0 %2941
        %2943 = vadd.xlane.f32.xlu0 %v2940
        %v2944 = vpop.xlane.xlu0 %2943
        %v2945 = vcvt.f32.s32 %v2942
        %v2946 = vcvt.f32.s32 %v2944
        %v2947 = vshll.u32 %v2946, 16
        %v2948 = vadd.s32 %v2947, %v2945
        %v2949 = vsel %vm346, %v2825, 0
        %v2950 = vand.u32 %v2949, 65535
        %v2951 = vshrl.u32 %v2949, 16
        %v2952 = vcvt.s32.f32 %v2950
        %v2953 = vcvt.s32.f32 %v2951
        %2954 = vadd.xlane.f32.xlu0 %v2952
        %v2955 = vpop.xlane.xlu0 %2954
        %2956 = vadd.xlane.f32.xlu0 %v2953
        %v2957 = vpop.xlane.xlu0 %2956
        %v2958 = vcvt.f32.s32 %v2955
        %v2959 = vcvt.f32.s32 %v2957
        %v2960 = vshll.u32 %v2959, 16
        %v2961 = vadd.s32 %v2960, %v2958
        %v2962 = vsel %vm346, %v2826, 0
        %v2963 = vand.u32 %v2962, 65535
        %v2964 = vshrl.u32 %v2962, 16
        %v2965 = vcvt.s32.f32 %v2963
        %v2966 = vcvt.s32.f32 %v2964
        %2967 = vadd.xlane.f32.xlu0 %v2965
        %v2968 = vpop.xlane.xlu0 %2967
        %2969 = vadd.xlane.f32.xlu0 %v2966
        %v2970 = vpop.xlane.xlu0 %2969
        %v2971 = vcvt.f32.s32 %v2968
        %v2972 = vcvt.f32.s32 %v2970
        %v2973 = vshll.u32 %v2972, 16
        %v2974 = vadd.s32 %v2973, %v2971
        %v2975 = vsel %vm346, %v2827, 0
        %v2976 = vand.u32 %v2975, 65535
        %v2977 = vshrl.u32 %v2975, 16
        %v2978 = vcvt.s32.f32 %v2976
        %v2979 = vcvt.s32.f32 %v2977
        %2980 = vadd.xlane.f32.xlu0 %v2978
        %v2981 = vpop.xlane.xlu0 %2980
        %2982 = vadd.xlane.f32.xlu0 %v2979
        %v2983 = vpop.xlane.xlu0 %2982
        %v2984 = vcvt.f32.s32 %v2981
        %v2985 = vcvt.f32.s32 %v2983
        %v2986 = vshll.u32 %v2985, 16
        %v2987 = vadd.s32 %v2986, %v2984
        %v2988 = vsel %vm346, %v2828, 0
        %v2989 = vand.u32 %v2988, 65535
        %v2990 = vshrl.u32 %v2988, 16
        %v2991 = vcvt.s32.f32 %v2989
        %v2992 = vcvt.s32.f32 %v2990
        %2993 = vadd.xlane.f32.xlu0 %v2991
        %v2994 = vpop.xlane.xlu0 %2993
        %2995 = vadd.xlane.f32.xlu0 %v2992
        %v2996 = vpop.xlane.xlu0 %2995
        %v2997 = vcvt.f32.s32 %v2994
        %v2998 = vcvt.f32.s32 %v2996
        %v2999 = vshll.u32 %v2998, 16
        %v3000 = vadd.s32 %v2999, %v2997
        %v3001 = vsel %vm346, %v2829, 0
        %v3002 = vand.u32 %v3001, 65535
        %v3003 = vshrl.u32 %v3001, 16
        %v3004 = vcvt.s32.f32 %v3002
        %v3005 = vcvt.s32.f32 %v3003
        %3006 = vadd.xlane.f32.xlu0 %v3004
        %v3007 = vpop.xlane.xlu0 %3006
        %3008 = vadd.xlane.f32.xlu0 %v3005
        %v3009 = vpop.xlane.xlu0 %3008
        %v3010 = vcvt.f32.s32 %v3007
        %v3011 = vcvt.f32.s32 %v3009
        %v3012 = vshll.u32 %v3011, 16
        %v3013 = vadd.s32 %v3012, %v3010
        %v3014 = vsel %vm346, %v2830, 0
        %v3015 = vand.u32 %v3014, 65535
        %v3016 = vshrl.u32 %v3014, 16
        %v3017 = vcvt.s32.f32 %v3015
        %v3018 = vcvt.s32.f32 %v3016
        %3019 = vadd.xlane.f32.xlu0 %v3017
        %v3020 = vpop.xlane.xlu0 %3019
        %3021 = vadd.xlane.f32.xlu0 %v3018
        %v3022 = vpop.xlane.xlu0 %3021
        %v3023 = vcvt.f32.s32 %v3020
        %v3024 = vcvt.f32.s32 %v3022
        %v3025 = vshll.u32 %v3024, 16
        %v3026 = vadd.s32 %v3025, %v3023
        %v3027 = vsel %vm346, %v2831, 0
        %v3028 = vand.u32 %v3027, 65535
        %v3029 = vshrl.u32 %v3027, 16
        %v3030 = vcvt.s32.f32 %v3028
        %v3031 = vcvt.s32.f32 %v3029
        %3032 = vadd.xlane.f32.xlu0 %v3030
        %v3033 = vpop.xlane.xlu0 %3032
        %3034 = vadd.xlane.f32.xlu0 %v3031
        %v3035 = vpop.xlane.xlu0 %3034
        %v3036 = vcvt.f32.s32 %v3033
        %v3037 = vcvt.f32.s32 %v3035
        %v3038 = vshll.u32 %v3037, 16
        %v3039 = vadd.s32 %v3038, %v3036
        %vm3040 = vcmp.eq.s32.totalorder %v2844, %v325
        %vm3041 = vcmp.eq.s32.totalorder %v2844, %v326
        %vm3042 = vcmp.eq.s32.totalorder %v2857, %v325
        %vm3043 = vcmp.eq.s32.totalorder %v2857, %v326
        %vm3044 = vcmp.eq.s32.totalorder %v2870, %v325
        %vm3045 = vcmp.eq.s32.totalorder %v2870, %v326
        %vm3046 = vcmp.eq.s32.totalorder %v2883, %v325
        %vm3047 = vcmp.eq.s32.totalorder %v2883, %v326
        %vm3048 = vcmp.eq.s32.totalorder %v2896, %v325
        %vm3049 = vcmp.eq.s32.totalorder %v2896, %v326
        %vm3050 = vcmp.eq.s32.totalorder %v2909, %v325
        %vm3051 = vcmp.eq.s32.totalorder %v2909, %v326
        %vm3052 = vcmp.eq.s32.totalorder %v2922, %v325
        %vm3053 = vcmp.eq.s32.totalorder %v2922, %v326
        %vm3054 = vcmp.eq.s32.totalorder %v2935, %v325
        %vm3055 = vcmp.eq.s32.totalorder %v2935, %v326
        %vm3056 = vcmp.eq.s32.totalorder %v2948, %v325
        %vm3057 = vcmp.eq.s32.totalorder %v2948, %v326
        %vm3058 = vcmp.eq.s32.totalorder %v2961, %v325
        %vm3059 = vcmp.eq.s32.totalorder %v2961, %v326
        %vm3060 = vcmp.eq.s32.totalorder %v2974, %v325
        %vm3061 = vcmp.eq.s32.totalorder %v2974, %v326
        %vm3062 = vcmp.eq.s32.totalorder %v2987, %v325
        %vm3063 = vcmp.eq.s32.totalorder %v2987, %v326
        %vm3064 = vcmp.eq.s32.totalorder %v3000, %v325
        %vm3065 = vcmp.eq.s32.totalorder %v3000, %v326
        %vm3066 = vcmp.eq.s32.totalorder %v3013, %v325
        %vm3067 = vcmp.eq.s32.totalorder %v3013, %v326
        %vm3068 = vcmp.eq.s32.totalorder %v3026, %v325
        %vm3069 = vcmp.eq.s32.totalorder %v3026, %v326
        %vm3070 = vcmp.eq.s32.totalorder %v3039, %v325
        %vm3071 = vcmp.eq.s32.totalorder %v3039, %v326
        %v3072 = vsel %vm3040, 1, 0
        %v3073 = vsel %vm3041, 1, 0
        %v3074 = vsel %vm3042, 1, 0
        %v3075 = vsel %vm3043, 1, 0
        %v3076 = vsel %vm3044, 1, 0
        %v3077 = vsel %vm3045, 1, 0
        %v3078 = vsel %vm3046, 1, 0
        %v3079 = vsel %vm3047, 1, 0
        %v3080 = vsel %vm3048, 1, 0
        %v3081 = vsel %vm3049, 1, 0
        %v3082 = vsel %vm3050, 1, 0
        %v3083 = vsel %vm3051, 1, 0
        %v3084 = vsel %vm3052, 1, 0
        %v3085 = vsel %vm3053, 1, 0
        %v3086 = vsel %vm3054, 1, 0
        %v3087 = vsel %vm3055, 1, 0
        %v3088 = vsel %vm3056, 1, 0
        %v3089 = vsel %vm3057, 1, 0
        %v3090 = vsel %vm3058, 1, 0
        %v3091 = vsel %vm3059, 1, 0
        %v3092 = vsel %vm3060, 1, 0
        %v3093 = vsel %vm3061, 1, 0
        %v3094 = vsel %vm3062, 1, 0
        %v3095 = vsel %vm3063, 1, 0
        %v3096 = vsel %vm3064, 1, 0
        %v3097 = vsel %vm3065, 1, 0
        %v3098 = vsel %vm3066, 1, 0
        %v3099 = vsel %vm3067, 1, 0
        %v3100 = vsel %vm3068, 1, 0
        %v3101 = vsel %vm3069, 1, 0
        %v3102 = vsel %vm3070, 1, 0
        %v3103 = vsel %vm3071, 1, 0
        %v3104 = vcvt.s32.f32 %v3072
        %v3105 = vcvt.s32.f32 %v3073
        %v3106 = vcvt.s32.f32 %v3074
        %v3107 = vcvt.s32.f32 %v3075
        %v3108 = vcvt.s32.f32 %v3076
        %v3109 = vcvt.s32.f32 %v3077
        %v3110 = vcvt.s32.f32 %v3078
        %v3111 = vcvt.s32.f32 %v3079
        %v3112 = vcvt.s32.f32 %v3080
        %v3113 = vcvt.s32.f32 %v3081
        %v3114 = vcvt.s32.f32 %v3082
        %v3115 = vcvt.s32.f32 %v3083
        %v3116 = vcvt.s32.f32 %v3084
        %v3117 = vcvt.s32.f32 %v3085
        %v3118 = vcvt.s32.f32 %v3086
        %v3119 = vcvt.s32.f32 %v3087
        %v3120 = vcvt.s32.f32 %v3088
        %v3121 = vcvt.s32.f32 %v3089
        %v3122 = vcvt.s32.f32 %v3090
        %v3123 = vcvt.s32.f32 %v3091
        %v3124 = vcvt.s32.f32 %v3092
        %v3125 = vcvt.s32.f32 %v3093
        %v3126 = vcvt.s32.f32 %v3094
        %v3127 = vcvt.s32.f32 %v3095
        %v3128 = vcvt.s32.f32 %v3096
        %v3129 = vcvt.s32.f32 %v3097
        %v3130 = vcvt.s32.f32 %v3098
        %v3131 = vcvt.s32.f32 %v3099
        %v3132 = vcvt.s32.f32 %v3100
        %v3133 = vcvt.s32.f32 %v3101
        %v3134 = vcvt.s32.f32 %v3102
        %v3135 = vcvt.s32.f32 %v3103
        %v3136 = vadd.f32 %v2781, %v3104
        %v3137 = vadd.f32 %v2782, %v3105
        %v3138 = vadd.f32 %v2783, %v3106
        %v3139 = vadd.f32 %v2784, %v3107
        %v3140 = vadd.f32 %v2785, %v3108
        %v3141 = vadd.f32 %v2786, %v3109
        %v3142 = vadd.f32 %v2787, %v3110
        %v3143 = vadd.f32 %v2788, %v3111
        %v3144 = vadd.f32 %v2789, %v3112
        %v3145 = vadd.f32 %v2790, %v3113
        %v3146 = vadd.f32 %v2791, %v3114
        %v3147 = vadd.f32 %v2792, %v3115
        %v3148 = vadd.f32 %v2793, %v3116
        %v3149 = vadd.f32 %v2794, %v3117
        %v3150 = vadd.f32 %v2795, %v3118
        %v3151 = vadd.f32 %v2796, %v3119
        %v3152 = vadd.f32 %v2797, %v3120
        %v3153 = vadd.f32 %v2798, %v3121
        %v3154 = vadd.f32 %v2799, %v3122
        %v3155 = vadd.f32 %v2800, %v3123
        %v3156 = vadd.f32 %v2801, %v3124
        %v3157 = vadd.f32 %v2802, %v3125
        %v3158 = vadd.f32 %v2803, %v3126
        %v3159 = vadd.f32 %v2804, %v3127
        %v3160 = vadd.f32 %v2805, %v3128
        %v3161 = vadd.f32 %v2806, %v3129
        %v3162 = vadd.f32 %v2807, %v3130
        %v3163 = vadd.f32 %v2808, %v3131
        %v3164 = vadd.f32 %v2809, %v3132
        %v3165 = vadd.f32 %v2810, %v3133
        %v3166 = vadd.f32 %v2811, %v3134
        %v3167 = vadd.f32 %v2812, %v3135
        %s3168 = smul.u32 %s25, 128
        %v3169 = vlaneseq
        %v3170 = vshrl.u32 %v3169, 7
        %v3171 = vadd.s32 %v3170, 8
        %v3172 = vadd.s32 %v3170, 16
        %v3173 = vadd.s32 %v3170, 24
        %v3174 = vadd.s32 %v3170, 32
        %v3175 = vadd.s32 %v3170, 40
        %v3176 = vadd.s32 %v3170, 48
        %v3177 = vadd.s32 %v3170, 56
        %v3178 = vadd.s32 %v3170, 64
        %v3179 = vadd.s32 %v3170, 72
        %v3180 = vadd.s32 %v3170, 80
        %v3181 = vadd.s32 %v3170, 88
        %v3182 = vadd.s32 %v3170, 96
        %v3183 = vadd.s32 %v3170, 104
        %v3184 = vadd.s32 %v3170, 112
        %v3185 = vadd.s32 %v3170, 120
        %v3186 = vstv %s3168
        %v3187 = vadd.s32 %v3186, %v3170
        %v3188 = vadd.s32 %v3186, %v3171
        %v3189 = vadd.s32 %v3186, %v3172
        %v3190 = vadd.s32 %v3186, %v3173
        %v3191 = vadd.s32 %v3186, %v3174
        %v3192 = vadd.s32 %v3186, %v3175
        %v3193 = vadd.s32 %v3186, %v3176
        %v3194 = vadd.s32 %v3186, %v3177
        %v3195 = vadd.s32 %v3186, %v3178
        %v3196 = vadd.s32 %v3186, %v3179
        %v3197 = vadd.s32 %v3186, %v3180
        %v3198 = vadd.s32 %v3186, %v3181
        %v3199 = vadd.s32 %v3186, %v3182
        %v3200 = vadd.s32 %v3186, %v3183
        %v3201 = vadd.s32 %v3186, %v3184
        %v3202 = vadd.s32 %v3186, %v3185
        %s3203 = sld [smem:[#allocation2]]
        %s3204 = sadd.f32 %s3203, 1.0
        %vm3205 = vcmp.eq.s32.totalorder %v3187, %v325
        %vm3206 = vcmp.eq.s32.totalorder %v3187, %v326
        %vm3207 = vcmp.eq.s32.totalorder %v3188, %v325
        %vm3208 = vcmp.eq.s32.totalorder %v3188, %v326
        %vm3209 = vcmp.eq.s32.totalorder %v3189, %v325
        %vm3210 = vcmp.eq.s32.totalorder %v3189, %v326
        %vm3211 = vcmp.eq.s32.totalorder %v3190, %v325
        %vm3212 = vcmp.eq.s32.totalorder %v3190, %v326
        %vm3213 = vcmp.eq.s32.totalorder %v3191, %v325
        %vm3214 = vcmp.eq.s32.totalorder %v3191, %v326
        %vm3215 = vcmp.eq.s32.totalorder %v3192, %v325
        %vm3216 = vcmp.eq.s32.totalorder %v3192, %v326
        %vm3217 = vcmp.eq.s32.totalorder %v3193, %v325
        %vm3218 = vcmp.eq.s32.totalorder %v3193, %v326
        %vm3219 = vcmp.eq.s32.totalorder %v3194, %v325
        %vm3220 = vcmp.eq.s32.totalorder %v3194, %v326
        %vm3221 = vcmp.eq.s32.totalorder %v3195, %v325
        %vm3222 = vcmp.eq.s32.totalorder %v3195, %v326
        %vm3223 = vcmp.eq.s32.totalorder %v3196, %v325
        %vm3224 = vcmp.eq.s32.totalorder %v3196, %v326
        %vm3225 = vcmp.eq.s32.totalorder %v3197, %v325
        %vm3226 = vcmp.eq.s32.totalorder %v3197, %v326
        %vm3227 = vcmp.eq.s32.totalorder %v3198, %v325
        %vm3228 = vcmp.eq.s32.totalorder %v3198, %v326
        %vm3229 = vcmp.eq.s32.totalorder %v3199, %v325
        %vm3230 = vcmp.eq.s32.totalorder %v3199, %v326
        %vm3231 = vcmp.eq.s32.totalorder %v3200, %v325
        %vm3232 = vcmp.eq.s32.totalorder %v3200, %v326
        %vm3233 = vcmp.eq.s32.totalorder %v3201, %v325
        %vm3234 = vcmp.eq.s32.totalorder %v3201, %v326
        %vm3235 = vcmp.eq.s32.totalorder %v3202, %v325
        %vm3236 = vcmp.eq.s32.totalorder %v3202, %v326
        %v3237 = vsel %vm3205, 1, 0
        %v3238 = vsel %vm3206, 1, 0
        %v3239 = vsel %vm3207, 1, 0
        %v3240 = vsel %vm3208, 1, 0
        %v3241 = vsel %vm3209, 1, 0
        %v3242 = vsel %vm3210, 1, 0
        %v3243 = vsel %vm3211, 1, 0
        %v3244 = vsel %vm3212, 1, 0
        %v3245 = vsel %vm3213, 1, 0
        %v3246 = vsel %vm3214, 1, 0
        %v3247 = vsel %vm3215, 1, 0
        %v3248 = vsel %vm3216, 1, 0
        %v3249 = vsel %vm3217, 1, 0
        %v3250 = vsel %vm3218, 1, 0
        %v3251 = vsel %vm3219, 1, 0
        %v3252 = vsel %vm3220, 1, 0
        %v3253 = vsel %vm3221, 1, 0
        %v3254 = vsel %vm3222, 1, 0
        %v3255 = vsel %vm3223, 1, 0
        %v3256 = vsel %vm3224, 1, 0
        %v3257 = vsel %vm3225, 1, 0
        %v3258 = vsel %vm3226, 1, 0
        %v3259 = vsel %vm3227, 1, 0
        %v3260 = vsel %vm3228, 1, 0
        %v3261 = vsel %vm3229, 1, 0
        %v3262 = vsel %vm3230, 1, 0
        %v3263 = vsel %vm3231, 1, 0
        %v3264 = vsel %vm3232, 1, 0
        %v3265 = vsel %vm3233, 1, 0
        %v3266 = vsel %vm3234, 1, 0
        %v3267 = vsel %vm3235, 1, 0
        %v3268 = vsel %vm3236, 1, 0
        %v3269 = vcvt.s32.f32 %v3237
        %v3270 = vcvt.s32.f32 %v3238
        %v3271 = vcvt.s32.f32 %v3239
        %v3272 = vcvt.s32.f32 %v3240
        %v3273 = vcvt.s32.f32 %v3241
        %v3274 = vcvt.s32.f32 %v3242
        %v3275 = vcvt.s32.f32 %v3243
        %v3276 = vcvt.s32.f32 %v3244
        %v3277 = vcvt.s32.f32 %v3245
        %v3278 = vcvt.s32.f32 %v3246
        %v3279 = vcvt.s32.f32 %v3247
        %v3280 = vcvt.s32.f32 %v3248
        %v3281 = vcvt.s32.f32 %v3249
        %v3282 = vcvt.s32.f32 %v3250
        %v3283 = vcvt.s32.f32 %v3251
        %v3284 = vcvt.s32.f32 %v3252
        %v3285 = vcvt.s32.f32 %v3253
        %v3286 = vcvt.s32.f32 %v3254
        %v3287 = vcvt.s32.f32 %v3255
        %v3288 = vcvt.s32.f32 %v3256
        %v3289 = vcvt.s32.f32 %v3257
        %v3290 = vcvt.s32.f32 %v3258
        %v3291 = vcvt.s32.f32 %v3259
        %v3292 = vcvt.s32.f32 %v3260
        %v3293 = vcvt.s32.f32 %v3261
        %v3294 = vcvt.s32.f32 %v3262
        %v3295 = vcvt.s32.f32 %v3263
        %v3296 = vcvt.s32.f32 %v3264
        %v3297 = vcvt.s32.f32 %v3265
        %v3298 = vcvt.s32.f32 %v3266
        %v3299 = vcvt.s32.f32 %v3267
        %v3300 = vcvt.s32.f32 %v3268
        %v3301 = vstv %s3204
        %v3302 = vmul.f32 %v3301, %v3269
        %v3303 = vmul.f32 %v3301, %v3270
        %v3304 = vmul.f32 %v3301, %v3271
        %v3305 = vmul.f32 %v3301, %v3272
        %v3306 = vmul.f32 %v3301, %v3273
        %v3307 = vmul.f32 %v3301, %v3274
        %v3308 = vmul.f32 %v3301, %v3275
        %v3309 = vmul.f32 %v3301, %v3276
        %v3310 = vmul.f32 %v3301, %v3277
        %v3311 = vmul.f32 %v3301, %v3278
        %v3312 = vmul.f32 %v3301, %v3279
        %v3313 = vmul.f32 %v3301, %v3280
        %v3314 = vmul.f32 %v3301, %v3281
        %v3315 = vmul.f32 %v3301, %v3282
        %v3316 = vmul.f32 %v3301, %v3283
        %v3317 = vmul.f32 %v3301, %v3284
        %v3318 = vmul.f32 %v3301, %v3285
        %v3319 = vmul.f32 %v3301, %v3286
        %v3320 = vmul.f32 %v3301, %v3287
        %v3321 = vmul.f32 %v3301, %v3288
        %v3322 = vmul.f32 %v3301, %v3289
        %v3323 = vmul.f32 %v3301, %v3290
        %v3324 = vmul.f32 %v3301, %v3291
        %v3325 = vmul.f32 %v3301, %v3292
        %v3326 = vmul.f32 %v3301, %v3293
        %v3327 = vmul.f32 %v3301, %v3294
        %v3328 = vmul.f32 %v3301, %v3295
        %v3329 = vmul.f32 %v3301, %v3296
        %v3330 = vmul.f32 %v3301, %v3297
        %v3331 = vmul.f32 %v3301, %v3298
        %v3332 = vmul.f32 %v3301, %v3299
        %v3333 = vmul.f32 %v3301, %v3300
        %v3334 = vadd.f32 %v3136, %v3302
        %v3335 = vadd.f32 %v3137, %v3303
        %v3336 = vadd.f32 %v3138, %v3304
        %v3337 = vadd.f32 %v3139, %v3305
        %v3338 = vadd.f32 %v3140, %v3306
        %v3339 = vadd.f32 %v3141, %v3307
        %v3340 = vadd.f32 %v3142, %v3308
        %v3341 = vadd.f32 %v3143, %v3309
        %v3342 = vadd.f32 %v3144, %v3310
        %v3343 = vadd.f32 %v3145, %v3311
        %v3344 = vadd.f32 %v3146, %v3312
        %v3345 = vadd.f32 %v3147, %v3313
        %v3346 = vadd.f32 %v3148, %v3314
        %v3347 = vadd.f32 %v3149, %v3315
        %v3348 = vadd.f32 %v3150, %v3316
        %v3349 = vadd.f32 %v3151, %v3317
        %v3350 = vadd.f32 %v3152, %v3318
        %v3351 = vadd.f32 %v3153, %v3319
        %v3352 = vadd.f32 %v3154, %v3320
        %v3353 = vadd.f32 %v3155, %v3321
        %v3354 = vadd.f32 %v3156, %v3322
        %v3355 = vadd.f32 %v3157, %v3323
        %v3356 = vadd.f32 %v3158, %v3324
        %v3357 = vadd.f32 %v3159, %v3325
        %v3358 = vadd.f32 %v3160, %v3326
        %v3359 = vadd.f32 %v3161, %v3327
        %v3360 = vadd.f32 %v3162, %v3328
        %v3361 = vadd.f32 %v3163, %v3329
        %v3362 = vadd.f32 %v3164, %v3330
        %v3363 = vadd.f32 %v3165, %v3331
        %v3364 = vadd.f32 %v3166, %v3332
        %v3365 = vadd.f32 %v3167, %v3333
        %v3366 = vpack.c.bf16 %v3336, %v3334
        %v3367 = vpack.c.bf16 %v3337, %v3335
        %v3368 = vpack.c.bf16 %v3340, %v3338
        %v3369 = vpack.c.bf16 %v3341, %v3339
        %v3370 = vpack.c.bf16 %v3344, %v3342
        %v3371 = vpack.c.bf16 %v3345, %v3343
        %v3372 = vpack.c.bf16 %v3348, %v3346
        %v3373 = vpack.c.bf16 %v3349, %v3347
        %v3374 = vpack.c.bf16 %v3352, %v3350
        %v3375 = vpack.c.bf16 %v3353, %v3351
        %v3376 = vpack.c.bf16 %v3356, %v3354
        %v3377 = vpack.c.bf16 %v3357, %v3355
        %v3378 = vpack.c.bf16 %v3360, %v3358
        %v3379 = vpack.c.bf16 %v3361, %v3359
        %v3380 = vpack.c.bf16 %v3364, %v3362
        %v3381 = vpack.c.bf16 %v3365, %v3363
        %v3414 = vunpack.c.l.b16 %v276
        %v3415 = vunpack.c.l.b16 %v277
        %v3416 = vunpack.c.l.b16 %v278
        %v3417 = vunpack.c.l.b16 %v279
        %v3418 = vunpack.c.l.b16 %v280
        %v3419 = vunpack.c.l.b16 %v281
        %v3420 = vunpack.c.l.b16 %v282
        %v3421 = vunpack.c.l.b16 %v283
        %v3422 = vunpack.c.l.b16 %v284
        %v3423 = vunpack.c.l.b16 %v285
        %v3424 = vunpack.c.l.b16 %v286
        %v3425 = vunpack.c.l.b16 %v287
        %v3426 = vunpack.c.l.b16 %v288
        %v3427 = vunpack.c.l.b16 %v289
        %v3428 = vunpack.c.l.b16 %v290
        %v3429 = vunpack.c.l.b16 %v291
        %v3430 = vunpack.c.l.b16 %v292
        %v3431 = vunpack.c.l.b16 %v293
        %v3432 = vunpack.c.l.b16 %v294
        %v3433 = vunpack.c.l.b16 %v295
        %v3434 = vunpack.c.l.b16 %v296
        %v3435 = vunpack.c.l.b16 %v297
        %v3436 = vunpack.c.l.b16 %v298
        %v3437 = vunpack.c.l.b16 %v299
        %v3438 = vunpack.c.l.b16 %v300
        %v3439 = vunpack.c.l.b16 %v301
        %v3440 = vunpack.c.l.b16 %v302
        %v3441 = vunpack.c.l.b16 %v303
        %v3442 = vunpack.c.l.b16 %v304
        %v3443 = vunpack.c.l.b16 %v305
        %v3444 = vunpack.c.l.b16 %v306
        %v3445 = vunpack.c.l.b16 %v307
        %v3446 = vpack.c.b16 %v3415, %v3414
        %v3447 = vpack.c.b16 %v3417, %v3416
        %v3448 = vpack.c.b16 %v3419, %v3418
        %v3449 = vpack.c.b16 %v3421, %v3420
        %v3450 = vpack.c.b16 %v3423, %v3422
        %v3451 = vpack.c.b16 %v3425, %v3424
        %v3452 = vpack.c.b16 %v3427, %v3426
        %v3453 = vpack.c.b16 %v3429, %v3428
        %v3454 = vpack.c.b16 %v3431, %v3430
        %v3455 = vpack.c.b16 %v3433, %v3432
        %v3456 = vpack.c.b16 %v3435, %v3434
        %v3457 = vpack.c.b16 %v3437, %v3436
        %v3458 = vpack.c.b16 %v3439, %v3438
        %v3459 = vpack.c.b16 %v3441, %v3440
        %v3460 = vpack.c.b16 %v3443, %v3442
        %v3461 = vpack.c.b16 %v3445, %v3444
        %3478 = vmatprep.subr.bf16.mxu0 0
        %3479 = vmatpush1.bf16.msra.mxu0 %v3446
        %3480 = vmatprep.subr.bf16.mxu0 0
        %3481 = vmatpush1.bf16.msra.mxu0 %v3447
        %3482 = vmatprep.subr.bf16.mxu0 0
        %3483 = vmatpush1.bf16.msra.mxu0 %v3448
        %3484 = vmatprep.subr.bf16.mxu0 0
        %3485 = vmatpush1.bf16.msra.mxu0 %v3449
        %3486 = vmatprep.subr.bf16.mxu0 0
        %3487 = vmatpush1.bf16.msra.mxu0 %v3450
        %3488 = vmatprep.subr.bf16.mxu0 0
        %3489 = vmatpush1.bf16.msra.mxu0 %v3451
        %3490 = vmatprep.subr.bf16.mxu0 0
        %3491 = vmatpush1.bf16.msra.mxu0 %v3452
        %3492 = vmatprep.subr.bf16.mxu0 0
        %3493 = vmatpush1.bf16.msra.mxu0 %v3453
        %3494 = vmatprep.subr.bf16.mxu0 0
        %3495 = vmatpush1.bf16.msra.mxu0 %v3454
        %3496 = vmatprep.subr.bf16.mxu0 0
        %3497 = vmatpush1.bf16.msra.mxu0 %v3455
        %3498 = vmatprep.subr.bf16.mxu0 0
        %3499 = vmatpush1.bf16.msra.mxu0 %v3456
        %3500 = vmatprep.subr.bf16.mxu0 0
        %3501 = vmatpush1.bf16.msra.mxu0 %v3457
        %3502 = vmatprep.subr.bf16.mxu0 0
        %3503 = vmatpush1.bf16.msra.mxu0 %v3458
        %3504 = vmatprep.subr.bf16.mxu0 0
        %3505 = vmatpush1.bf16.msra.mxu0 %v3459
        %3506 = vmatprep.subr.bf16.mxu0 0
        %3507 = vmatpush1.bf16.msra.mxu0 %v3460
        %3508 = vmatprep.subr.bf16.mxu0 0
        %3509 = vmatpush1.bf16.msra.mxu0 %v3461
        %3510 = vmatprep.mubr.bf16.mxu0 %v3367
        %3511 = vmatmul.mubr.bf16.gmra.mrb[0].mxu0 %v3366
        %v3512 = vpop.f32.mrb[0].mxu0
        %v3513 = vadd.f32 0.0, %v3512
        %v3514 = vpop.f32.mrb[0].mxu0
        %v3515 = vpop.f32.mrb[0].mxu0
        %v3516 = vadd.f32 0.0, %v3515
        %v3517 = vpop.f32.mrb[0].mxu0
        %3518 = vmatprep.mubr.bf16.mxu0 %v3369
        %3519 = vmatmul.mubr.bf16.gmra.mrb[0].mxu0 %v3368
        %v3520 = vpop.f32.mrb[0].mxu0
        %v3521 = vadd.f32 0.0, %v3520
        %v3522 = vpop.f32.mrb[0].mxu0
        %v3523 = vpop.f32.mrb[0].mxu0
        %v3524 = vadd.f32 0.0, %v3523
        %v3525 = vpop.f32.mrb[0].mxu0
        %3526 = vmatprep.mubr.bf16.mxu0 %v3371
        %3527 = vmatmul.mubr.bf16.gmra.mrb[0].mxu0 %v3370
        %v3528 = vpop.f32.mrb[0].mxu0
        %v3529 = vadd.f32 0.0, %v3528
        %v3530 = vpop.f32.mrb[0].mxu0
        %v3531 = vpop.f32.mrb[0].mxu0
        %v3532 = vadd.f32 0.0, %v3531
        %v3533 = vpop.f32.mrb[0].mxu0
        %3534 = vmatprep.mubr.bf16.mxu0 %v3373
        %3535 = vmatmul.mubr.bf16.gmra.mrb[0].mxu0 %v3372
        %v3536 = vpop.f32.mrb[0].mxu0
        %v3537 = vadd.f32 0.0, %v3536
        %v3538 = vpop.f32.mrb[0].mxu0
        %v3539 = vpop.f32.mrb[0].mxu0
        %v3540 = vadd.f32 0.0, %v3539
        %v3541 = vpop.f32.mrb[0].mxu0
        %3542 = vmatprep.mubr.bf16.mxu0 %v3375
        %3543 = vmatmul.mubr.bf16.gmra.mrb[0].mxu0 %v3374
        %v3544 = vpop.f32.mrb[0].mxu0
        %v3545 = vadd.f32 0.0, %v3544
        %v3546 = vpop.f32.mrb[0].mxu0
        %v3547 = vpop.f32.mrb[0].mxu0
        %v3548 = vadd.f32 0.0, %v3547
        %v3549 = vpop.f32.mrb[0].mxu0
        %3550 = vmatprep.mubr.bf16.mxu0 %v3377
        %3551 = vmatmul.mubr.bf16.gmra.mrb[0].mxu0 %v3376
        %v3552 = vpop.f32.mrb[0].mxu0
        %v3553 = vadd.f32 0.0, %v3552
        %v3554 = vpop.f32.mrb[0].mxu0
        %v3555 = vpop.f32.mrb[0].mxu0
        %v3556 = vadd.f32 0.0, %v3555
        %v3557 = vpop.f32.mrb[0].mxu0
        %3558 = vmatprep.mubr.bf16.mxu0 %v3379
        %3559 = vmatmul.mubr.bf16.gmra.mrb[0].mxu0 %v3378
        %v3560 = vpop.f32.mrb[0].mxu0
        %v3561 = vadd.f32 0.0, %v3560
        %v3562 = vpop.f32.mrb[0].mxu0
        %v3563 = vpop.f32.mrb[0].mxu0
        %v3564 = vadd.f32 0.0, %v3563
        %v3565 = vpop.f32.mrb[0].mxu0
        %3566 = vmatprep.mubr.bf16.mxu0 %v3381
        %3567 = vmatmul.mubr.bf16.gmra.mrb[0].mxu0 %v3380
        %v3568 = vpop.f32.mrb[0].mxu0
        %v3569 = vadd.f32 0.0, %v3568
        %v3570 = vpop.f32.mrb[0].mxu0
        %v3571 = vpop.f32.mrb[0].mxu0
        %v3572 = vadd.f32 0.0, %v3571
        %v3573 = vpop.f32.mrb[0].mxu0
        %3574 = vdwg.mxu0
        %v3575 = vpack.c.bf16 %v3516, %v3513
        %v3576 = vpack.c.bf16 %v3524, %v3521
        %v3577 = vpack.c.bf16 %v3532, %v3529
        %v3578 = vpack.c.bf16 %v3540, %v3537
        %v3579 = vpack.c.bf16 %v3548, %v3545
        %v3580 = vpack.c.bf16 %v3556, %v3553
        %v3581 = vpack.c.bf16 %v3564, %v3561
        %v3582 = vpack.c.bf16 %v3572, %v3569
        %v3583 = vld [vmem:[%s3] sm:$0xf]
        %v3584 = vld [vmem:[%s3 + $0x4] sm:$0xf]
        %v3585 = vld [vmem:[%s3 + $0x8] sm:$0xf]
        %v3586 = vld [vmem:[%s3 + $0xc] sm:$0xf]
        %v3587 = vld [vmem:[%s3 + $0x10] sm:$0xf]
        %v3588 = vld [vmem:[%s3 + $0x14] sm:$0xf]
        %v3589 = vld [vmem:[%s3 + $0x18] sm:$0xf]
        %v3590 = vld [vmem:[%s3 + $0x1c] sm:$0xf]
        %v3591 = vld [vmem:[%s3 + $0x20] sm:$0xf]
        %v3592 = vld [vmem:[%s3 + $0x24] sm:$0xf]
        %v3593 = vld [vmem:[%s3 + $0x28] sm:$0xf]
        %v3594 = vld [vmem:[%s3 + $0x2c] sm:$0xf]
        %v3595 = vld [vmem:[%s3 + $0x30] sm:$0xf]
        %v3596 = vld [vmem:[%s3 + $0x34] sm:$0xf]
        %v3597 = vld [vmem:[%s3 + $0x38] sm:$0xf]
        %v3598 = vld [vmem:[%s3 + $0x3c] sm:$0xf]
        %v3599 = vld [vmem:[%s4] sm:$0x1]
        %v3601 = vlaneseq
        %v3602 = vshrl.u32 %v3601, 7
        %v3603 = vsub.s32 0, %v3602
        %v3604 = vrot.slane %v3599, %v3603
        %v3622 = vunpack.c.l.b16 %v3583
        %v3623 = vunpack.c.l.b16 %v3584
        %v3624 = vunpack.c.l.b16 %v3585
        %v3625 = vunpack.c.l.b16 %v3586
        %v3626 = vunpack.c.l.b16 %v3587
        %v3627 = vunpack.c.l.b16 %v3588
        %v3628 = vunpack.c.l.b16 %v3589
        %v3629 = vunpack.c.l.b16 %v3590
        %v3630 = vunpack.c.l.b16 %v3591
        %v3631 = vunpack.c.l.b16 %v3592
        %v3632 = vunpack.c.l.b16 %v3593
        %v3633 = vunpack.c.l.b16 %v3594
        %v3634 = vunpack.c.l.b16 %v3595
        %v3635 = vunpack.c.l.b16 %v3596
        %v3636 = vunpack.c.l.b16 %v3597
        %v3637 = vunpack.c.l.b16 %v3598
        %v3638 = vpack.c.b16 %v3623, %v3622
        %v3639 = vpack.c.b16 %v3625, %v3624
        %v3640 = vpack.c.b16 %v3627, %v3626
        %v3641 = vpack.c.b16 %v3629, %v3628
        %v3642 = vpack.c.b16 %v3631, %v3630
        %v3643 = vpack.c.b16 %v3633, %v3632
        %v3644 = vpack.c.b16 %v3635, %v3634
        %v3645 = vpack.c.b16 %v3637, %v3636
        %3654 = vmatprep.subr.bf16.mxu0 0
        %3655 = vmatpush1.bf16.msra.mxu0 %v3638
        %3656 = vmatprep.subr.bf16.mxu0 0
        %3657 = vmatpush1.bf16.msra.mxu0 %v3639
        %3658 = vmatprep.subr.bf16.mxu0 0
        %3659 = vmatpush1.bf16.msra.mxu0 %v3640
        %3660 = vmatprep.subr.bf16.mxu0 0
        %3661 = vmatpush1.bf16.msra.mxu0 %v3641
        %3662 = vmatprep.subr.bf16.mxu0 0
        %3663 = vmatpush1.bf16.msra.mxu0 %v3642
        %3664 = vmatprep.subr.bf16.mxu0 0
        %3665 = vmatpush1.bf16.msra.mxu0 %v3643
        %3666 = vmatprep.subr.bf16.mxu0 0
        %3667 = vmatpush1.bf16.msra.mxu0 %v3644
        %3668 = vmatprep.subr.bf16.mxu0 0
        %3669 = vmatpush1.bf16.msra.mxu0 %v3645
        %3670 = vmatprep.subr.bf16.mxu0 0
        %3671 = vmatpush1.bf16.msra.mxu0 0
        %3672 = vmatprep.subr.bf16.mxu0 0
        %3673 = vmatpush1.bf16.msra.mxu0 0
        %3674 = vmatprep.subr.bf16.mxu0 0
        %3675 = vmatpush1.bf16.msra.mxu0 0
        %3676 = vmatprep.subr.bf16.mxu0 0
        %3677 = vmatpush1.bf16.msra.mxu0 0
        %3678 = vmatprep.subr.bf16.mxu0 0
        %3679 = vmatpush1.bf16.msra.mxu0 0
        %3680 = vmatprep.subr.bf16.mxu0 0
        %3681 = vmatpush1.bf16.msra.mxu0 0
        %3682 = vmatprep.subr.bf16.mxu0 0
        %3683 = vmatpush1.bf16.msra.mxu0 0
        %3684 = vmatprep.subr.bf16.mxu0 0
        %3685 = vmatpush1.bf16.msra.mxu0 0
        %3686 = vmatprep.mubr.bf16.mxu0 0
        %3687 = vmatmul.mubr.bf16.gmra.mrb[0].mxu0 %v3575
        %v3688 = vpop.f32.mrb[0].mxu0
        %v3689 = vadd.f32 %v3604, %v3688
        %v3690 = vpop.f32.mrb[0].mxu0
        %v3691 = vpop.f32.mrb[0].mxu0
        %v3692 = vadd.f32 %v3604, %v3691
        %v3693 = vpop.f32.mrb[0].mxu0
        %3694 = vmatprep.mubr.bf16.mxu0 0
        %3695 = vmatmul.mubr.bf16.gmra.mrb[0].mxu0 %v3576
        %v3696 = vpop.f32.mrb[0].mxu0
        %v3697 = vadd.f32 %v3604, %v3696
        %v3698 = vpop.f32.mrb[0].mxu0
        %v3699 = vpop.f32.mrb[0].mxu0
        %v3700 = vadd.f32 %v3604, %v3699
        %v3701 = vpop.f32.mrb[0].mxu0
        %3702 = vmatprep.mubr.bf16.mxu0 0
        %3703 = vmatmul.mubr.bf16.gmra.mrb[0].mxu0 %v3577
        %v3704 = vpop.f32.mrb[0].mxu0
        %v3705 = vadd.f32 %v3604, %v3704
        %v3706 = vpop.f32.mrb[0].mxu0
        %v3707 = vpop.f32.mrb[0].mxu0
        %v3708 = vadd.f32 %v3604, %v3707
        %v3709 = vpop.f32.mrb[0].mxu0
        %3710 = vmatprep.mubr.bf16.mxu0 0
        %3711 = vmatmul.mubr.bf16.gmra.mrb[0].mxu0 %v3578
        %v3712 = vpop.f32.mrb[0].mxu0
        %v3713 = vadd.f32 %v3604, %v3712
        %v3714 = vpop.f32.mrb[0].mxu0
        %v3715 = vpop.f32.mrb[0].mxu0
        %v3716 = vadd.f32 %v3604, %v3715
        %v3717 = vpop.f32.mrb[0].mxu0
        %3718 = vmatprep.mubr.bf16.mxu0 0
        %3719 = vmatmul.mubr.bf16.gmra.mrb[0].mxu0 %v3579
        %v3720 = vpop.f32.mrb[0].mxu0
        %v3721 = vadd.f32 %v3604, %v3720
        %v3722 = vpop.f32.mrb[0].mxu0
        %v3723 = vpop.f32.mrb[0].mxu0
        %v3724 = vadd.f32 %v3604, %v3723
        %v3725 = vpop.f32.mrb[0].mxu0
        %3726 = vmatprep.mubr.bf16.mxu0 0
        %3727 = vmatmul.mubr.bf16.gmra.mrb[0].mxu0 %v3580
        %v3728 = vpop.f32.mrb[0].mxu0
        %v3729 = vadd.f32 %v3604, %v3728
        %v3730 = vpop.f32.mrb[0].mxu0
        %v3731 = vpop.f32.mrb[0].mxu0
        %v3732 = vadd.f32 %v3604, %v3731
        %v3733 = vpop.f32.mrb[0].mxu0
        %3734 = vmatprep.mubr.bf16.mxu0 0
        %3735 = vmatmul.mubr.bf16.gmra.mrb[0].mxu0 %v3581
        %v3736 = vpop.f32.mrb[0].mxu0
        %v3737 = vadd.f32 %v3604, %v3736
        %v3738 = vpop.f32.mrb[0].mxu0
        %v3739 = vpop.f32.mrb[0].mxu0
        %v3740 = vadd.f32 %v3604, %v3739
        %v3741 = vpop.f32.mrb[0].mxu0
        %3742 = vmatprep.mubr.bf16.mxu0 0
        %3743 = vmatmul.mubr.bf16.gmra.mrb[0].mxu0 %v3582
        %v3744 = vpop.f32.mrb[0].mxu0
        %v3745 = vadd.f32 %v3604, %v3744
        %v3746 = vpop.f32.mrb[0].mxu0
        %v3747 = vpop.f32.mrb[0].mxu0
        %v3748 = vadd.f32 %v3604, %v3747
        %v3749 = vpop.f32.mrb[0].mxu0
        %3750 = vdwg.mxu0
        %v3751 = vmax.f32 %v3689, 0.0
        %v3752 = vmax.f32 %v3692, 0.0
        %v3753 = vmax.f32 %v3697, 0.0
        %v3754 = vmax.f32 %v3700, 0.0
        %v3755 = vmax.f32 %v3705, 0.0
        %v3756 = vmax.f32 %v3708, 0.0
        %v3757 = vmax.f32 %v3713, 0.0
        %v3758 = vmax.f32 %v3716, 0.0
        %v3759 = vmax.f32 %v3721, 0.0
        %v3760 = vmax.f32 %v3724, 0.0
        %v3761 = vmax.f32 %v3729, 0.0
        %v3762 = vmax.f32 %v3732, 0.0
        %v3763 = vmax.f32 %v3737, 0.0
        %v3764 = vmax.f32 %v3740, 0.0
        %v3765 = vmax.f32 %v3745, 0.0
        %v3766 = vmax.f32 %v3748, 0.0
        %3767 = vst [vmem:[%s258] sm:$0xff] %v3751
        %3768 = vst [vmem:[%s258 + $0x8] sm:$0xff] %v3752
        %3769 = vst [vmem:[%s258 + $0x10] sm:$0xff] %v3753
        %3770 = vst [vmem:[%s258 + $0x18] sm:$0xff] %v3754
        %3771 = vst [vmem:[%s258 + $0x20] sm:$0xff] %v3755
        %3772 = vst [vmem:[%s258 + $0x28] sm:$0xff] %v3756
        %3773 = vst [vmem:[%s258 + $0x30] sm:$0xff] %v3757
        %3774 = vst [vmem:[%s258 + $0x38] sm:$0xff] %v3758
        %3775 = vst [vmem:[%s258 + $0x40] sm:$0xff] %v3759
        %3776 = vst [vmem:[%s258 + $0x48] sm:$0xff] %v3760
        %3777 = vst [vmem:[%s258 + $0x50] sm:$0xff] %v3761
        %3778 = vst [vmem:[%s258 + $0x58] sm:$0xff] %v3762
        %3779 = vst [vmem:[%s258 + $0x60] sm:$0xff] %v3763
        %3780 = vst [vmem:[%s258 + $0x68] sm:$0xff] %v3764
        %3781 = vst [vmem:[%s258 + $0x70] sm:$0xff] %v3765
        %3782 = vst [vmem:[%s258 + $0x78] sm:$0xff] %v3766
        %s3783 = sand.u32 %s159, 1
        %s3784 = scalar_lea.sflag [#allocation4], %s3783
        %s3785 = sand.u32 %s159, 1
        %s3786 = smul.addr %s3785, 128
        %s3787 = scalar_lea.vmem [#allocation3], %s3786
        // Predicated region
        $region41: #{tpu_custom_call.1} parent=39 // pred_check
          %p3788 = pneg %p169
        $region42: #{tpu_custom_call.1} parent=39 // pred_check_branch
          %3790 = sbr.rel (%p3788) target = $region44
        $region43: #{tpu_custom_call.1} parent=39 // pred_region
          %s3791 = smul.u32 16, %s25
          %s3793 = ssub.s32 2048, 2048
          %3794 = vsyncadd %s3784, %s3793
          %s3795 = smul.addr %s24, 32
          %s3796 = sadd.s32 %s3791, %s3795
          %s3797 = smul.addr %s3796, 128
          %s3798 = scalar_lea.hbm %s5, %s3797
          %s3799 = sshll.u32 %s3787, 4
          %s3800 = int_to_ptr.vmem [resolvable:$true] %s3799
          %3805 = dma.vmem_to_hbm [thread:$0]  %s3800, 2048, %s3798, %s3784, 128, 128, 8
        $region44: #{tpu_custom_call.1} parent=39 // pred_fallthru
          _
      $region40: #{tpu_custom_call.1} parent=5 // pred_fallthru
        _
      %p3806 = scmp.le.s32.totalorder 2, %s15
      // Predicated region
      $region45: #{tpu_custom_call.1} parent=5 // pred_check
        %p3807 = pneg %p3806
      $region46: #{tpu_custom_call.1} parent=5 // pred_check_branch
        %3809 = sbr.rel (%p3807) target = $region48
      $region47: #{tpu_custom_call.1} parent=5 // pred_region
        %s3810 = ssub.s32 %s15, 2
        // Predicated region
        $region49: #{tpu_custom_call.1} parent=47 // pred_check
          %p3811 = pneg %p175
        $region50: #{tpu_custom_call.1} parent=47 // pred_check_branch
          %3813 = sbr.rel (%p3811) target = $region52
        $region51: #{tpu_custom_call.1} parent=47 // pred_region
          %s3814 = sand.u32 %s160, 1
          %s3815 = scalar_lea.sflag [#allocation4], %s3814
          %s3816 = sand.u32 %s160, 1
          %s3817 = smul.addr %s3816, 128
          %s3818 = scalar_lea.vmem [#allocation3], %s3817
          %3819 = dma.done %s3815, 2048
        $region52: #{tpu_custom_call.1} parent=47 // pred_fallthru
          _
      $region48: #{tpu_custom_call.1} parent=5 // pred_fallthru
        _
    $region6: #{tpu_custom_call.1} parent=1 // loop_footer
      %s19 = sadd.s32 1, %s15
    $region7: #{tpu_custom_call.1} parent=1 // loop_footer_branch
      %14 = sbr.rel target = $region3
    $region8: #{tpu_custom_call.1} parent=1 // loop_exit
      _
    %3820 = vsyncpa [#allocation4], 1
    %s3821 = scalar_lea.sflag [#allocation4], 1
    %3822 = vsyncpa %s3821, 1

</llo_original>
